<compile_context>
chip_gen: v7x
topology: tpu7x:2x2x1
jax: 0.10.0
libtpu: 0.0.40
codegen_flags: <defaults>
</compile_context>

<pallas_src>
import functools

import jax
import jax.numpy as jnp
from jax.experimental import pallas as pl
from jax.experimental.pallas import tpu as pltpu


def _sigmoid(z):
    return 1.0 / (1.0 + jnp.exp(-z))


def _conv3x3_cm(x, w_ref, tap_masks, W):
    """3x3 same-padding conv in channels-major flat layout.

    x         : (C, H*W) f32 value (spatial plane on the lane axis)
    w_ref     : (9, Cout, Cin) ref, tap index t = ky*3 + kx
    tap_masks : list of 9 (1, H*W) 0/1 boundary-validity masks
    Returns (C, H*W) f32.
    """
    C, HW = x.shape
    acc = jnp.zeros((C, HW), jnp.float32)
    for t in range(9):
        ky, kx = divmod(t, 3)
        shift = (-((ky - 1) * W + (kx - 1))) % HW
        rolled = x if shift == 0 else pltpu.roll(x, shift, axis=1)
        # Center tap (t == 4) has an all-ones mask -> skip the multiply.
        shifted = rolled if t == 4 else rolled * tap_masks[t]
        w_t = w_ref[t]                            # (Cout, Cin)
        for ci in range(C):
            # acc[co, p] += w[co, ci] * shifted[ci, p]   (VPU broadcast FMA)
            acc = acc + w_t[:, ci:ci + 1] * shifted[ci:ci + 1, :]
    return acc


def _gn_tanh(v, gamma_col, beta_col, n_inv, eps=1e-5):
    """GroupNorm(C, C) + tanh with one-pass stats. v: (C, H*W); affine: (C,1)."""
    s1 = jnp.sum(v, axis=1, keepdims=True) * n_inv          # E[x]
    s2 = jnp.sum(v * v, axis=1, keepdims=True) * n_inv      # E[x^2]
    var = s2 - s1 * s1
    inv = jax.lax.rsqrt(var + eps)
    return jnp.tanh((v - s1) * (gamma_col * inv) + beta_col)


def _pdu_kernel(x_ref, mask_ref, w1_ref, w2_ref, w3_ref, b3_ref,
                g1_ref, be1_ref, g2_ref, be2_ref,
                l1wt_ref, l1b_ref, l2w_ref, l2b_ref,
                out_ref, *, W):
    HW = x_ref.shape[2]
    x = x_ref[0].astype(jnp.float32)                         # (C, HW)
    n_inv = 1.0 / float(HW)

    # Load the 9 boundary masks once; reused across all three convolutions.
    tap_masks = [mask_ref[t] for t in range(9)]              # each (1, HW)

    # ---- gate branch: global avg pool -> linear -> relu -> linear -> sigmoid
    xm_col = jnp.sum(x, axis=1, keepdims=True) * n_inv                   # (C,1)
    h1_row = jnp.maximum(
        jnp.sum(l1wt_ref[...] * xm_col, axis=0, keepdims=True)
        + l1b_ref[...], 0.0)                                             # (1,C)
    gate_col = _sigmoid(
        jnp.sum(l2w_ref[...] * h1_row, axis=1, keepdims=True)
        + l2b_ref[...])                                                  # (C,1)

    # ---- conv branch: Conv+GN+tanh -> Conv+GN+tanh -> conv3(+bias) -> sigmoid
    t = _gn_tanh(_conv3x3_cm(x, w1_ref, tap_masks, W),
                 g1_ref[...], be1_ref[...], n_inv)
    t = _gn_tanh(_conv3x3_cm(t, w2_ref, tap_masks, W),
                 g2_ref[...], be2_ref[...], n_inv)
    s3 = _sigmoid(_conv3x3_cm(t, w3_ref, tap_masks, W) + b3_ref[...])    # (C,HW)

    # ---- combine: gate * (1 - s3) + x * s3
    out_ref[0] = (gate_col * (1.0 - s3) + x * s3).astype(out_ref.dtype)


def pdu_forward(x, p):
    """x: (B, C, H, W) NCHW; params in PyTorch layouts. Returns (B, C, H, W)."""
    B, C, H, W = x.shape
    HW = H * W
    x_flat = x.reshape(B, C, HW)            # lane-dense: spatial on the lane axis

    # ---- layout-only parameter repacking (no arithmetic hoisted out of kernel)
    def conv_taps(w):                       # (Co, Ci, 3, 3) -> (9, Co, Ci)
        return jnp.transpose(w, (2, 3, 0, 1)).reshape(9, C, C)

    w1 = conv_taps(p["w1"]); w2 = conv_taps(p["w2"]); w3 = conv_taps(p["w3"])
    b3 = p["b3"].reshape(C, 1)
    g1 = p["g1"].reshape(C, 1); be1 = p["be1"].reshape(C, 1)
    g2 = p["g2"].reshape(C, 1); be2 = p["be2"].reshape(C, 1)
    l1wt = p["l1w"].T                        # (in, out)
    l1b = p["l1b"].reshape(1, C)
    l2w = p["l2w"]                           # (out, in)
    l2b = p["l2b"].reshape(C, 1)

    # 0/1 boundary masks per tap (zero-padding geometry; a static lookup table)
    hh = jnp.arange(HW, dtype=jnp.int32) // W
    ww = jnp.arange(HW, dtype=jnp.int32) % W
    masks = []
    for t in range(9):
        ky, kx = divmod(t, 3)
        oy, ox = ky - 1, kx - 1
        valid = ((hh + oy >= 0) & (hh + oy < H) &
                 (ww + ox >= 0) & (ww + ox < W))
        masks.append(valid.astype(jnp.float32))
    tap_mask = jnp.stack(masks).reshape(9, 1, HW)

    def full(shape):
        return pl.BlockSpec(shape, lambda b: (0,) * len(shape))

    out_flat = pl.pallas_call(
        functools.partial(_pdu_kernel, W=W),
        out_shape=jax.ShapeDtypeStruct((B, C, HW), x.dtype),
        grid_spec=pltpu.PrefetchScalarGridSpec(
            num_scalar_prefetch=0,
            grid=(B,),
            in_specs=[
                pl.BlockSpec((1, C, HW), lambda b: (b, 0, 0)),       # x
                full((9, 1, HW)),                                    # tap masks
                full((9, C, C)), full((9, C, C)), full((9, C, C)),   # w1 w2 w3
                full((C, 1)),                                        # b3
                full((C, 1)), full((C, 1)), full((C, 1)), full((C, 1)),  # GN
                full((C, C)), full((1, C)), full((C, C)), full((C, 1)),  # linears
            ],
            out_specs=pl.BlockSpec((1, C, HW), lambda b: (b, 0, 0)),
        ),
        compiler_params=pltpu.CompilerParams(
            dimension_semantics=("parallel",),
            vmem_limit_bytes=32 * 1024 * 1024),
    )(x_flat, tap_mask, w1, w2, w3, b3, g1, be1, g2, be2, l1wt, l1b, l2w, l2b)

    return out_flat.reshape(B, C, H, W)


def pdu_reference(x, p):
    """Pure-JAX reference of the PyTorch forward (NCHW / OIHW)."""
    dn = ("NCHW", "OIHW", "NCHW")

    def conv_gn_tanh(v, w, g, b):
        y = jax.lax.conv_general_dilated(v, w, (1, 1), "SAME",
                                         dimension_numbers=dn)
        m = jnp.mean(y, axis=(2, 3), keepdims=True)
        var = jnp.var(y, axis=(2, 3), keepdims=True)
        y = (y - m) * jax.lax.rsqrt(var + 1e-5) * g.reshape(1, -1, 1, 1) \
            + b.reshape(1, -1, 1, 1)
        return jnp.tanh(y)

    xm = jnp.mean(x, axis=(2, 3))                                     # (B,C)
    h1 = jnp.maximum(xm @ p["l1w"].T + p["l1b"], 0.0)
    gate = _sigmoid(h1 @ p["l2w"].T + p["l2b"])                       # (B,C)

    t = conv_gn_tanh(x, p["w1"], p["g1"], p["be1"])
    t = conv_gn_tanh(t, p["w2"], p["g2"], p["be2"])
    y3 = jax.lax.conv_general_dilated(t, p["w3"], (1, 1), "SAME",
                                      dimension_numbers=dn)
    s3 = _sigmoid(y3 + p["b3"].reshape(1, -1, 1, 1))
    return gate[:, :, None, None] * (1.0 - s3) + x * s3


if __name__ == "__main__":
    B, C, H, W = 2, 4, 16, 16

    key = jax.random.PRNGKey(0)
    ks = jax.random.split(key, 12)
    f32 = jnp.float32

    x = jax.random.normal(ks[0], (B, C, H, W), f32)

    conv_scale = 1.0 / (3.0 * jnp.sqrt(float(C)))
    params = {
        # conv weights in PyTorch OIHW layout (out, in, kH, kW); conv1/2 no bias
        "w1": jax.random.normal(ks[1], (C, C, 3, 3), f32) * conv_scale,
        "w2": jax.random.normal(ks[2], (C, C, 3, 3), f32) * conv_scale,
        "w3": jax.random.normal(ks[3], (C, C, 3, 3), f32) * conv_scale,
        "b3": jax.random.normal(ks[4], (C,), f32) * 0.1,
        # GroupNorm affine params (perturbed from ones/zeros to exercise path)
        "g1": 1.0 + 0.1 * jax.random.normal(ks[5], (C,), f32),
        "be1": 0.1 * jax.random.normal(ks[6], (C,), f32),
        "g2": 1.0 + 0.1 * jax.random.normal(ks[7], (C,), f32),
        "be2": 0.1 * jax.random.normal(ks[8], (C,), f32),
        # Linear layers in PyTorch (out, in) layout: y = x @ W.T + b
        "l1w": jax.random.normal(ks[9], (C, C), f32) * 0.5,
        "l1b": 0.1 * jnp.arange(C, dtype=f32),
        "l2w": jax.random.normal(ks[10], (C, C), f32) * 0.5,
        "l2b": 0.05 * jnp.arange(C, dtype=f32),
    }

    out = pdu_forward(x, params)
    out = jax.block_until_ready(out)

    ref = pdu_reference(x, params)
    assert out.shape == x.shape
    max_err = float(jnp.max(jnp.abs(out - ref)))
    assert max_err < 1e-3, f"max abs error too large: {max_err}"

    print("KERNEL_OK")
</pallas_src>

<mosaic_0001>
module attributes {stable_mosaic.version = 11 : i64} {
  func.func @_pdu_kernel(%arg0: i32, %arg1: memref<1x4x256xf32, #tpu.memory_space<vmem>>, %arg2: memref<9x1x256xf32, #tpu.memory_space<vmem>>, %arg3: memref<9x4x4xf32, #tpu.memory_space<vmem>>, %arg4: memref<9x4x4xf32, #tpu.memory_space<vmem>>, %arg5: memref<9x4x4xf32, #tpu.memory_space<vmem>>, %arg6: memref<4x1xf32, #tpu.memory_space<vmem>>, %arg7: memref<4x1xf32, #tpu.memory_space<vmem>>, %arg8: memref<4x1xf32, #tpu.memory_space<vmem>>, %arg9: memref<4x1xf32, #tpu.memory_space<vmem>>, %arg10: memref<4x1xf32, #tpu.memory_space<vmem>>, %arg11: memref<4x4xf32, #tpu.memory_space<vmem>>, %arg12: memref<1x4xf32, #tpu.memory_space<vmem>>, %arg13: memref<4x4xf32, #tpu.memory_space<vmem>>, %arg14: memref<4x1xf32, #tpu.memory_space<vmem>>, %arg15: memref<1x4x256xf32, #tpu.memory_space<vmem>>) attributes {dimension_semantics = [#tpu.dimension_semantics<parallel>], iteration_bounds = array<i64: 2>, scalar_prefetch = 0 : i64, scratch_operands = 0 : i64, tpu.core_type = #tpu.core_type<tc>, window_params = [{transform_indices = @transform_0, window_bounds = array<i64: 1, 4, 256>}, {pipeline_mode = #tpu.pipeline_mode<synchronous>, transform_indices = @transform_1, window_bounds = array<i64: 9, 1, 256>}, {pipeline_mode = #tpu.pipeline_mode<synchronous>, transform_indices = @transform_2, window_bounds = array<i64: 9, 4, 4>}, {pipeline_mode = #tpu.pipeline_mode<synchronous>, transform_indices = @transform_3, window_bounds = array<i64: 9, 4, 4>}, {pipeline_mode = #tpu.pipeline_mode<synchronous>, transform_indices = @transform_4, window_bounds = array<i64: 9, 4, 4>}, {pipeline_mode = #tpu.pipeline_mode<synchronous>, transform_indices = @transform_5, window_bounds = array<i64: 4, 1>}, {pipeline_mode = #tpu.pipeline_mode<synchronous>, transform_indices = @transform_6, window_bounds = array<i64: 4, 1>}, {pipeline_mode = #tpu.pipeline_mode<synchronous>, transform_indices = @transform_7, window_bounds = array<i64: 4, 1>}, {pipeline_mode = #tpu.pipeline_mode<synchronous>, transform_indices = @transform_8, window_bounds = array<i64: 4, 1>}, {pipeline_mode = #tpu.pipeline_mode<synchronous>, transform_indices = @transform_9, window_bounds = array<i64: 4, 1>}, {pipeline_mode = #tpu.pipeline_mode<synchronous>, transform_indices = @transform_10, window_bounds = array<i64: 4, 4>}, {pipeline_mode = #tpu.pipeline_mode<synchronous>, transform_indices = @transform_11, window_bounds = array<i64: 1, 4>}, {pipeline_mode = #tpu.pipeline_mode<synchronous>, transform_indices = @transform_12, window_bounds = array<i64: 4, 4>}, {pipeline_mode = #tpu.pipeline_mode<synchronous>, transform_indices = @transform_13, window_bounds = array<i64: 4, 1>}, {transform_indices = @transform_14, window_bounds = array<i64: 1, 4, 256>}]} {
    %c0 = arith.constant 0 : index
    %c0_0 = arith.constant 0 : index
    %c0_1 = arith.constant 0 : index
    %0 = vector.load %arg1[%c0, %c0_0, %c0_1] : memref<1x4x256xf32, #tpu.memory_space<vmem>>, vector<1x4x256xf32>
    %1 = vector.shape_cast %0 : vector<1x4x256xf32> to vector<4x256xf32>
    %c0_2 = arith.constant 0 : index
    %c0_3 = arith.constant 0 : index
    %c0_4 = arith.constant 0 : index
    %2 = vector.load %arg2[%c0_2, %c0_3, %c0_4] : memref<9x1x256xf32, #tpu.memory_space<vmem>>, vector<1x1x256xf32>
    %3 = vector.shape_cast %2 : vector<1x1x256xf32> to vector<1x256xf32>
    %c1 = arith.constant 1 : index
    %c0_5 = arith.constant 0 : index
    %c0_6 = arith.constant 0 : index
    %4 = vector.load %arg2[%c1, %c0_5, %c0_6] : memref<9x1x256xf32, #tpu.memory_space<vmem>>, vector<1x1x256xf32>
    %5 = vector.shape_cast %4 : vector<1x1x256xf32> to vector<1x256xf32>
    %c2 = arith.constant 2 : index
    %c0_7 = arith.constant 0 : index
    %c0_8 = arith.constant 0 : index
    %6 = vector.load %arg2[%c2, %c0_7, %c0_8] : memref<9x1x256xf32, #tpu.memory_space<vmem>>, vector<1x1x256xf32>
    %7 = vector.shape_cast %6 : vector<1x1x256xf32> to vector<1x256xf32>
    %c3 = arith.constant 3 : index
    %c0_9 = arith.constant 0 : index
    %c0_10 = arith.constant 0 : index
    %8 = vector.load %arg2[%c3, %c0_9, %c0_10] : memref<9x1x256xf32, #tpu.memory_space<vmem>>, vector<1x1x256xf32>
    %9 = vector.shape_cast %8 : vector<1x1x256xf32> to vector<1x256xf32>
    %c5 = arith.constant 5 : index
    %c0_11 = arith.constant 0 : index
    %c0_12 = arith.constant 0 : index
    %10 = vector.load %arg2[%c5, %c0_11, %c0_12] : memref<9x1x256xf32, #tpu.memory_space<vmem>>, vector<1x1x256xf32>
    %11 = vector.shape_cast %10 : vector<1x1x256xf32> to vector<1x256xf32>
    %c6 = arith.constant 6 : index
    %c0_13 = arith.constant 0 : index
    %c0_14 = arith.constant 0 : index
    %12 = vector.load %arg2[%c6, %c0_13, %c0_14] : memref<9x1x256xf32, #tpu.memory_space<vmem>>, vector<1x1x256xf32>
    %13 = vector.shape_cast %12 : vector<1x1x256xf32> to vector<1x256xf32>
    %c7 = arith.constant 7 : index
    %c0_15 = arith.constant 0 : index
    %c0_16 = arith.constant 0 : index
    %14 = vector.load %arg2[%c7, %c0_15, %c0_16] : memref<9x1x256xf32, #tpu.memory_space<vmem>>, vector<1x1x256xf32>
    %15 = vector.shape_cast %14 : vector<1x1x256xf32> to vector<1x256xf32>
    %c8 = arith.constant 8 : index
    %c0_17 = arith.constant 0 : index
    %c0_18 = arith.constant 0 : index
    %16 = vector.load %arg2[%c8, %c0_17, %c0_18] : memref<9x1x256xf32, #tpu.memory_space<vmem>>, vector<1x1x256xf32>
    %17 = vector.shape_cast %16 : vector<1x1x256xf32> to vector<1x256xf32>
    %cst = arith.constant dense<0.000000e+00> : vector<4xf32>
    %18 = vector.multi_reduction <add>, %1, %cst [1] : vector<4x256xf32> to vector<4xf32>
    %19 = vector.shape_cast %18 : vector<4xf32> to vector<4x1xf32>
    %cst_19 = arith.constant 3.906250e-03 : f32
    %20 = vector.broadcast %cst_19 : f32 to vector<4x1xf32>
    %21 = arith.mulf %19, %20 : vector<4x1xf32>
    %c0_20 = arith.constant 0 : index
    %c0_21 = arith.constant 0 : index
    %22 = vector.load %arg11[%c0_20, %c0_21] : memref<4x4xf32, #tpu.memory_space<vmem>>, vector<4x4xf32>
    %23 = vector.broadcast %21 : vector<4x1xf32> to vector<4x4xf32>
    %24 = arith.mulf %22, %23 : vector<4x4xf32>
    %cst_22 = arith.constant dense<0.000000e+00> : vector<4xf32>
    %25 = vector.multi_reduction <add>, %24, %cst_22 [0] : vector<4x4xf32> to vector<4xf32>
    %26 = vector.shape_cast %25 : vector<4xf32> to vector<1x4xf32>
    %c0_23 = arith.constant 0 : index
    %c0_24 = arith.constant 0 : index
    %27 = vector.load %arg12[%c0_23, %c0_24] : memref<1x4xf32, #tpu.memory_space<vmem>>, vector<1x4xf32>
    %28 = arith.addf %26, %27 : vector<1x4xf32>
    %cst_25 = arith.constant 0.000000e+00 : f32
    %29 = vector.broadcast %cst_25 : f32 to vector<1x4xf32>
    %30 = arith.maximumf %28, %29 : vector<1x4xf32>
    %c0_26 = arith.constant 0 : index
    %c0_27 = arith.constant 0 : index
    %31 = vector.load %arg13[%c0_26, %c0_27] : memref<4x4xf32, #tpu.memory_space<vmem>>, vector<4x4xf32>
    %32 = vector.broadcast %30 : vector<1x4xf32> to vector<4x4xf32>
    %33 = arith.mulf %31, %32 : vector<4x4xf32>
    %cst_28 = arith.constant dense<0.000000e+00> : vector<4xf32>
    %34 = vector.multi_reduction <add>, %33, %cst_28 [1] : vector<4x4xf32> to vector<4xf32>
    %35 = vector.shape_cast %34 : vector<4xf32> to vector<4x1xf32>
    %c0_29 = arith.constant 0 : index
    %c0_30 = arith.constant 0 : index
    %36 = vector.load %arg14[%c0_29, %c0_30] : memref<4x1xf32, #tpu.memory_space<vmem>>, vector<4x1xf32>
    %37 = arith.addf %35, %36 : vector<4x1xf32>
    %cst_31 = arith.constant 0.000000e+00 : f32
    %38 = vector.broadcast %cst_31 : f32 to vector<4x1xf32>
    %39 = arith.subf %38, %37 : vector<4x1xf32>
    %40 = math.exp %39 : vector<4x1xf32>
    %cst_32 = arith.constant 1.000000e+00 : f32
    %41 = vector.broadcast %cst_32 : f32 to vector<4x1xf32>
    %42 = arith.addf %41, %40 : vector<4x1xf32>
    %cst_33 = arith.constant 1.000000e+00 : f32
    %43 = vector.broadcast %cst_33 : f32 to vector<4x1xf32>
    %44 = arith.divf %43, %42 : vector<4x1xf32>
    %cst_34 = arith.constant 0.000000e+00 : f32
    %45 = vector.broadcast %cst_34 : f32 to vector<4x256xf32>
    %c17_i32 = arith.constant 17 : i32
    %46 = tpu.dynamic_rotate %1 by %c17_i32 dim 1 : vector<4x256xf32>, i32 -> vector<4x256xf32>
    %47 = vector.broadcast %3 : vector<1x256xf32> to vector<4x256xf32>
    %48 = arith.mulf %46, %47 : vector<4x256xf32>
    %c0_35 = arith.constant 0 : index
    %c0_36 = arith.constant 0 : index
    %c0_37 = arith.constant 0 : index
    %49 = vector.load %arg3[%c0_35, %c0_36, %c0_37] : memref<9x4x4xf32, #tpu.memory_space<vmem>>, vector<1x4x4xf32>
    %50 = vector.shape_cast %49 : vector<1x4x4xf32> to vector<4x4xf32>
    %51 = vector.extract_strided_slice %50 {offsets = [0, 0], sizes = [4, 1], strides = [1, 1]} : vector<4x4xf32> to vector<4x1xf32>
    %52 = vector.extract_strided_slice %48 {offsets = [0, 0], sizes = [1, 256], strides = [1, 1]} : vector<4x256xf32> to vector<1x256xf32>
    %53 = vector.broadcast %51 : vector<4x1xf32> to vector<4x256xf32>
    %54 = vector.broadcast %52 : vector<1x256xf32> to vector<4x256xf32>
    %55 = arith.mulf %53, %54 : vector<4x256xf32>
    %56 = arith.addf %45, %55 : vector<4x256xf32>
    %57 = vector.extract_strided_slice %50 {offsets = [0, 1], sizes = [4, 1], strides = [1, 1]} : vector<4x4xf32> to vector<4x1xf32>
    %58 = vector.extract_strided_slice %48 {offsets = [1, 0], sizes = [1, 256], strides = [1, 1]} : vector<4x256xf32> to vector<1x256xf32>
    %59 = vector.broadcast %57 : vector<4x1xf32> to vector<4x256xf32>
    %60 = vector.broadcast %58 : vector<1x256xf32> to vector<4x256xf32>
    %61 = arith.mulf %59, %60 : vector<4x256xf32>
    %62 = arith.addf %56, %61 : vector<4x256xf32>
    %63 = vector.extract_strided_slice %50 {offsets = [0, 2], sizes = [4, 1], strides = [1, 1]} : vector<4x4xf32> to vector<4x1xf32>
    %64 = vector.extract_strided_slice %48 {offsets = [2, 0], sizes = [1, 256], strides = [1, 1]} : vector<4x256xf32> to vector<1x256xf32>
    %65 = vector.broadcast %63 : vector<4x1xf32> to vector<4x256xf32>
    %66 = vector.broadcast %64 : vector<1x256xf32> to vector<4x256xf32>
    %67 = arith.mulf %65, %66 : vector<4x256xf32>
    %68 = arith.addf %62, %67 : vector<4x256xf32>
    %69 = vector.extract_strided_slice %50 {offsets = [0, 3], sizes = [4, 1], strides = [1, 1]} : vector<4x4xf32> to vector<4x1xf32>
    %70 = vector.extract_strided_slice %48 {offsets = [3, 0], sizes = [1, 256], strides = [1, 1]} : vector<4x256xf32> to vector<1x256xf32>
    %71 = vector.broadcast %69 : vector<4x1xf32> to vector<4x256xf32>
    %72 = vector.broadcast %70 : vector<1x256xf32> to vector<4x256xf32>
    %73 = arith.mulf %71, %72 : vector<4x256xf32>
    %74 = arith.addf %68, %73 : vector<4x256xf32>
    %c16_i32 = arith.constant 16 : i32
    %75 = tpu.dynamic_rotate %1 by %c16_i32 dim 1 : vector<4x256xf32>, i32 -> vector<4x256xf32>
    %76 = vector.broadcast %5 : vector<1x256xf32> to vector<4x256xf32>
    %77 = arith.mulf %75, %76 : vector<4x256xf32>
    %c1_38 = arith.constant 1 : index
    %c0_39 = arith.constant 0 : index
    %c0_40 = arith.constant 0 : index
    %78 = vector.load %arg3[%c1_38, %c0_39, %c0_40] : memref<9x4x4xf32, #tpu.memory_space<vmem>>, vector<1x4x4xf32>
    %79 = vector.shape_cast %78 : vector<1x4x4xf32> to vector<4x4xf32>
    %80 = vector.extract_strided_slice %79 {offsets = [0, 0], sizes = [4, 1], strides = [1, 1]} : vector<4x4xf32> to vector<4x1xf32>
    %81 = vector.extract_strided_slice %77 {offsets = [0, 0], sizes = [1, 256], strides = [1, 1]} : vector<4x256xf32> to vector<1x256xf32>
    %82 = vector.broadcast %80 : vector<4x1xf32> to vector<4x256xf32>
    %83 = vector.broadcast %81 : vector<1x256xf32> to vector<4x256xf32>
    %84 = arith.mulf %82, %83 : vector<4x256xf32>
    %85 = arith.addf %74, %84 : vector<4x256xf32>
    %86 = vector.extract_strided_slice %79 {offsets = [0, 1], sizes = [4, 1], strides = [1, 1]} : vector<4x4xf32> to vector<4x1xf32>
    %87 = vector.extract_strided_slice %77 {offsets = [1, 0], sizes = [1, 256], strides = [1, 1]} : vector<4x256xf32> to vector<1x256xf32>
    %88 = vector.broadcast %86 : vector<4x1xf32> to vector<4x256xf32>
    %89 = vector.broadcast %87 : vector<1x256xf32> to vector<4x256xf32>
    %90 = arith.mulf %88, %89 : vector<4x256xf32>
    %91 = arith.addf %85, %90 : vector<4x256xf32>
    %92 = vector.extract_strided_slice %79 {offsets = [0, 2], sizes = [4, 1], strides = [1, 1]} : vector<4x4xf32> to vector<4x1xf32>
    %93 = vector.extract_strided_slice %77 {offsets = [2, 0], sizes = [1, 256], strides = [1, 1]} : vector<4x256xf32> to vector<1x256xf32>
    %94 = vector.broadcast %92 : vector<4x1xf32> to vector<4x256xf32>
    %95 = vector.broadcast %93 : vector<1x256xf32> to vector<4x256xf32>
    %96 = arith.mulf %94, %95 : vector<4x256xf32>
    %97 = arith.addf %91, %96 : vector<4x256xf32>
    %98 = vector.extract_strided_slice %79 {offsets = [0, 3], sizes = [4, 1], strides = [1, 1]} : vector<4x4xf32> to vector<4x1xf32>
    %99 = vector.extract_strided_slice %77 {offsets = [3, 0], sizes = [1, 256], strides = [1, 1]} : vector<4x256xf32> to vector<1x256xf32>
    %100 = vector.broadcast %98 : vector<4x1xf32> to vector<4x256xf32>
    %101 = vector.broadcast %99 : vector<1x256xf32> to vector<4x256xf32>
    %102 = arith.mulf %100, %101 : vector<4x256xf32>
    %103 = arith.addf %97, %102 : vector<4x256xf32>
    %c15_i32 = arith.constant 15 : i32
    %104 = tpu.dynamic_rotate %1 by %c15_i32 dim 1 : vector<4x256xf32>, i32 -> vector<4x256xf32>
    %105 = vector.broadcast %7 : vector<1x256xf32> to vector<4x256xf32>
    %106 = arith.mulf %104, %105 : vector<4x256xf32>
    %c2_41 = arith.constant 2 : index
    %c0_42 = arith.constant 0 : index
    %c0_43 = arith.constant 0 : index
    %107 = vector.load %arg3[%c2_41, %c0_42, %c0_43] : memref<9x4x4xf32, #tpu.memory_space<vmem>>, vector<1x4x4xf32>
    %108 = vector.shape_cast %107 : vector<1x4x4xf32> to vector<4x4xf32>
    %109 = vector.extract_strided_slice %108 {offsets = [0, 0], sizes = [4, 1], strides = [1, 1]} : vector<4x4xf32> to vector<4x1xf32>
    %110 = vector.extract_strided_slice %106 {offsets = [0, 0], sizes = [1, 256], strides = [1, 1]} : vector<4x256xf32> to vector<1x256xf32>
    %111 = vector.broadcast %109 : vector<4x1xf32> to vector<4x256xf32>
    %112 = vector.broadcast %110 : vector<1x256xf32> to vector<4x256xf32>
    %113 = arith.mulf %111, %112 : vector<4x256xf32>
    %114 = arith.addf %103, %113 : vector<4x256xf32>
    %115 = vector.extract_strided_slice %108 {offsets = [0, 1], sizes = [4, 1], strides = [1, 1]} : vector<4x4xf32> to vector<4x1xf32>
    %116 = vector.extract_strided_slice %106 {offsets = [1, 0], sizes = [1, 256], strides = [1, 1]} : vector<4x256xf32> to vector<1x256xf32>
    %117 = vector.broadcast %115 : vector<4x1xf32> to vector<4x256xf32>
    %118 = vector.broadcast %116 : vector<1x256xf32> to vector<4x256xf32>
    %119 = arith.mulf %117, %118 : vector<4x256xf32>
    %120 = arith.addf %114, %119 : vector<4x256xf32>
    %121 = vector.extract_strided_slice %108 {offsets = [0, 2], sizes = [4, 1], strides = [1, 1]} : vector<4x4xf32> to vector<4x1xf32>
    %122 = vector.extract_strided_slice %106 {offsets = [2, 0], sizes = [1, 256], strides = [1, 1]} : vector<4x256xf32> to vector<1x256xf32>
    %123 = vector.broadcast %121 : vector<4x1xf32> to vector<4x256xf32>
    %124 = vector.broadcast %122 : vector<1x256xf32> to vector<4x256xf32>
    %125 = arith.mulf %123, %124 : vector<4x256xf32>
    %126 = arith.addf %120, %125 : vector<4x256xf32>
    %127 = vector.extract_strided_slice %108 {offsets = [0, 3], sizes = [4, 1], strides = [1, 1]} : vector<4x4xf32> to vector<4x1xf32>
    %128 = vector.extract_strided_slice %106 {offsets = [3, 0], sizes = [1, 256], strides = [1, 1]} : vector<4x256xf32> to vector<1x256xf32>
    %129 = vector.broadcast %127 : vector<4x1xf32> to vector<4x256xf32>
    %130 = vector.broadcast %128 : vector<1x256xf32> to vector<4x256xf32>
    %131 = arith.mulf %129, %130 : vector<4x256xf32>
    %132 = arith.addf %126, %131 : vector<4x256xf32>
    %c1_i32 = arith.constant 1 : i32
    %133 = tpu.dynamic_rotate %1 by %c1_i32 dim 1 : vector<4x256xf32>, i32 -> vector<4x256xf32>
    %134 = vector.broadcast %9 : vector<1x256xf32> to vector<4x256xf32>
    %135 = arith.mulf %133, %134 : vector<4x256xf32>
    %c3_44 = arith.constant 3 : index
    %c0_45 = arith.constant 0 : index
    %c0_46 = arith.constant 0 : index
    %136 = vector.load %arg3[%c3_44, %c0_45, %c0_46] : memref<9x4x4xf32, #tpu.memory_space<vmem>>, vector<1x4x4xf32>
    %137 = vector.shape_cast %136 : vector<1x4x4xf32> to vector<4x4xf32>
    %138 = vector.extract_strided_slice %137 {offsets = [0, 0], sizes = [4, 1], strides = [1, 1]} : vector<4x4xf32> to vector<4x1xf32>
    %139 = vector.extract_strided_slice %135 {offsets = [0, 0], sizes = [1, 256], strides = [1, 1]} : vector<4x256xf32> to vector<1x256xf32>
    %140 = vector.broadcast %138 : vector<4x1xf32> to vector<4x256xf32>
    %141 = vector.broadcast %139 : vector<1x256xf32> to vector<4x256xf32>
    %142 = arith.mulf %140, %141 : vector<4x256xf32>
    %143 = arith.addf %132, %142 : vector<4x256xf32>
    %144 = vector.extract_strided_slice %137 {offsets = [0, 1], sizes = [4, 1], strides = [1, 1]} : vector<4x4xf32> to vector<4x1xf32>
    %145 = vector.extract_strided_slice %135 {offsets = [1, 0], sizes = [1, 256], strides = [1, 1]} : vector<4x256xf32> to vector<1x256xf32>
    %146 = vector.broadcast %144 : vector<4x1xf32> to vector<4x256xf32>
    %147 = vector.broadcast %145 : vector<1x256xf32> to vector<4x256xf32>
    %148 = arith.mulf %146, %147 : vector<4x256xf32>
    %149 = arith.addf %143, %148 : vector<4x256xf32>
    %150 = vector.extract_strided_slice %137 {offsets = [0, 2], sizes = [4, 1], strides = [1, 1]} : vector<4x4xf32> to vector<4x1xf32>
    %151 = vector.extract_strided_slice %135 {offsets = [2, 0], sizes = [1, 256], strides = [1, 1]} : vector<4x256xf32> to vector<1x256xf32>
    %152 = vector.broadcast %150 : vector<4x1xf32> to vector<4x256xf32>
    %153 = vector.broadcast %151 : vector<1x256xf32> to vector<4x256xf32>
    %154 = arith.mulf %152, %153 : vector<4x256xf32>
    %155 = arith.addf %149, %154 : vector<4x256xf32>
    %156 = vector.extract_strided_slice %137 {offsets = [0, 3], sizes = [4, 1], strides = [1, 1]} : vector<4x4xf32> to vector<4x1xf32>
    %157 = vector.extract_strided_slice %135 {offsets = [3, 0], sizes = [1, 256], strides = [1, 1]} : vector<4x256xf32> to vector<1x256xf32>
    %158 = vector.broadcast %156 : vector<4x1xf32> to vector<4x256xf32>
    %159 = vector.broadcast %157 : vector<1x256xf32> to vector<4x256xf32>
    %160 = arith.mulf %158, %159 : vector<4x256xf32>
    %161 = arith.addf %155, %160 : vector<4x256xf32>
    %c4 = arith.constant 4 : index
    %c0_47 = arith.constant 0 : index
    %c0_48 = arith.constant 0 : index
    %162 = vector.load %arg3[%c4, %c0_47, %c0_48] : memref<9x4x4xf32, #tpu.memory_space<vmem>>, vector<1x4x4xf32>
    %163 = vector.shape_cast %162 : vector<1x4x4xf32> to vector<4x4xf32>
    %164 = vector.extract_strided_slice %163 {offsets = [0, 0], sizes = [4, 1], strides = [1, 1]} : vector<4x4xf32> to vector<4x1xf32>
    %165 = vector.extract_strided_slice %1 {offsets = [0, 0], sizes = [1, 256], strides = [1, 1]} : vector<4x256xf32> to vector<1x256xf32>
    %166 = vector.broadcast %164 : vector<4x1xf32> to vector<4x256xf32>
    %167 = vector.broadcast %165 : vector<1x256xf32> to vector<4x256xf32>
    %168 = arith.mulf %166, %167 : vector<4x256xf32>
    %169 = arith.addf %161, %168 : vector<4x256xf32>
    %170 = vector.extract_strided_slice %163 {offsets = [0, 1], sizes = [4, 1], strides = [1, 1]} : vector<4x4xf32> to vector<4x1xf32>
    %171 = vector.extract_strided_slice %1 {offsets = [1, 0], sizes = [1, 256], strides = [1, 1]} : vector<4x256xf32> to vector<1x256xf32>
    %172 = vector.broadcast %170 : vector<4x1xf32> to vector<4x256xf32>
    %173 = vector.broadcast %171 : vector<1x256xf32> to vector<4x256xf32>
    %174 = arith.mulf %172, %173 : vector<4x256xf32>
    %175 = arith.addf %169, %174 : vector<4x256xf32>
    %176 = vector.extract_strided_slice %163 {offsets = [0, 2], sizes = [4, 1], strides = [1, 1]} : vector<4x4xf32> to vector<4x1xf32>
    %177 = vector.extract_strided_slice %1 {offsets = [2, 0], sizes = [1, 256], strides = [1, 1]} : vector<4x256xf32> to vector<1x256xf32>
    %178 = vector.broadcast %176 : vector<4x1xf32> to vector<4x256xf32>
    %179 = vector.broadcast %177 : vector<1x256xf32> to vector<4x256xf32>
    %180 = arith.mulf %178, %179 : vector<4x256xf32>
    %181 = arith.addf %175, %180 : vector<4x256xf32>
    %182 = vector.extract_strided_slice %163 {offsets = [0, 3], sizes = [4, 1], strides = [1, 1]} : vector<4x4xf32> to vector<4x1xf32>
    %183 = vector.extract_strided_slice %1 {offsets = [3, 0], sizes = [1, 256], strides = [1, 1]} : vector<4x256xf32> to vector<1x256xf32>
    %184 = vector.broadcast %182 : vector<4x1xf32> to vector<4x256xf32>
    %185 = vector.broadcast %183 : vector<1x256xf32> to vector<4x256xf32>
    %186 = arith.mulf %184, %185 : vector<4x256xf32>
    %187 = arith.addf %181, %186 : vector<4x256xf32>
    %c255_i32 = arith.constant 255 : i32
    %188 = tpu.dynamic_rotate %1 by %c255_i32 dim 1 : vector<4x256xf32>, i32 -> vector<4x256xf32>
    %189 = vector.broadcast %11 : vector<1x256xf32> to vector<4x256xf32>
    %190 = arith.mulf %188, %189 : vector<4x256xf32>
    %c5_49 = arith.constant 5 : index
    %c0_50 = arith.constant 0 : index
    %c0_51 = arith.constant 0 : index
    %191 = vector.load %arg3[%c5_49, %c0_50, %c0_51] : memref<9x4x4xf32, #tpu.memory_space<vmem>>, vector<1x4x4xf32>
    %192 = vector.shape_cast %191 : vector<1x4x4xf32> to vector<4x4xf32>
    %193 = vector.extract_strided_slice %192 {offsets = [0, 0], sizes = [4, 1], strides = [1, 1]} : vector<4x4xf32> to vector<4x1xf32>
    %194 = vector.extract_strided_slice %190 {offsets = [0, 0], sizes = [1, 256], strides = [1, 1]} : vector<4x256xf32> to vector<1x256xf32>
    %195 = vector.broadcast %193 : vector<4x1xf32> to vector<4x256xf32>
    %196 = vector.broadcast %194 : vector<1x256xf32> to vector<4x256xf32>
    %197 = arith.mulf %195, %196 : vector<4x256xf32>
    %198 = arith.addf %187, %197 : vector<4x256xf32>
    %199 = vector.extract_strided_slice %192 {offsets = [0, 1], sizes = [4, 1], strides = [1, 1]} : vector<4x4xf32> to vector<4x1xf32>
    %200 = vector.extract_strided_slice %190 {offsets = [1, 0], sizes = [1, 256], strides = [1, 1]} : vector<4x256xf32> to vector<1x256xf32>
    %201 = vector.broadcast %199 : vector<4x1xf32> to vector<4x256xf32>
    %202 = vector.broadcast %200 : vector<1x256xf32> to vector<4x256xf32>
    %203 = arith.mulf %201, %202 : vector<4x256xf32>
    %204 = arith.addf %198, %203 : vector<4x256xf32>
    %205 = vector.extract_strided_slice %192 {offsets = [0, 2], sizes = [4, 1], strides = [1, 1]} : vector<4x4xf32> to vector<4x1xf32>
    %206 = vector.extract_strided_slice %190 {offsets = [2, 0], sizes = [1, 256], strides = [1, 1]} : vector<4x256xf32> to vector<1x256xf32>
    %207 = vector.broadcast %205 : vector<4x1xf32> to vector<4x256xf32>
    %208 = vector.broadcast %206 : vector<1x256xf32> to vector<4x256xf32>
    %209 = arith.mulf %207, %208 : vector<4x256xf32>
    %210 = arith.addf %204, %209 : vector<4x256xf32>
    %211 = vector.extract_strided_slice %192 {offsets = [0, 3], sizes = [4, 1], strides = [1, 1]} : vector<4x4xf32> to vector<4x1xf32>
    %212 = vector.extract_strided_slice %190 {offsets = [3, 0], sizes = [1, 256], strides = [1, 1]} : vector<4x256xf32> to vector<1x256xf32>
    %213 = vector.broadcast %211 : vector<4x1xf32> to vector<4x256xf32>
    %214 = vector.broadcast %212 : vector<1x256xf32> to vector<4x256xf32>
    %215 = arith.mulf %213, %214 : vector<4x256xf32>
    %216 = arith.addf %210, %215 : vector<4x256xf32>
    %c241_i32 = arith.constant 241 : i32
    %217 = tpu.dynamic_rotate %1 by %c241_i32 dim 1 : vector<4x256xf32>, i32 -> vector<4x256xf32>
    %218 = vector.broadcast %13 : vector<1x256xf32> to vector<4x256xf32>
    %219 = arith.mulf %217, %218 : vector<4x256xf32>
    %c6_52 = arith.constant 6 : index
    %c0_53 = arith.constant 0 : index
    %c0_54 = arith.constant 0 : index
    %220 = vector.load %arg3[%c6_52, %c0_53, %c0_54] : memref<9x4x4xf32, #tpu.memory_space<vmem>>, vector<1x4x4xf32>
    %221 = vector.shape_cast %220 : vector<1x4x4xf32> to vector<4x4xf32>
    %222 = vector.extract_strided_slice %221 {offsets = [0, 0], sizes = [4, 1], strides = [1, 1]} : vector<4x4xf32> to vector<4x1xf32>
    %223 = vector.extract_strided_slice %219 {offsets = [0, 0], sizes = [1, 256], strides = [1, 1]} : vector<4x256xf32> to vector<1x256xf32>
    %224 = vector.broadcast %222 : vector<4x1xf32> to vector<4x256xf32>
    %225 = vector.broadcast %223 : vector<1x256xf32> to vector<4x256xf32>
    %226 = arith.mulf %224, %225 : vector<4x256xf32>
    %227 = arith.addf %216, %226 : vector<4x256xf32>
    %228 = vector.extract_strided_slice %221 {offsets = [0, 1], sizes = [4, 1], strides = [1, 1]} : vector<4x4xf32> to vector<4x1xf32>
    %229 = vector.extract_strided_slice %219 {offsets = [1, 0], sizes = [1, 256], strides = [1, 1]} : vector<4x256xf32> to vector<1x256xf32>
    %230 = vector.broadcast %228 : vector<4x1xf32> to vector<4x256xf32>
    %231 = vector.broadcast %229 : vector<1x256xf32> to vector<4x256xf32>
    %232 = arith.mulf %230, %231 : vector<4x256xf32>
    %233 = arith.addf %227, %232 : vector<4x256xf32>
    %234 = vector.extract_strided_slice %221 {offsets = [0, 2], sizes = [4, 1], strides = [1, 1]} : vector<4x4xf32> to vector<4x1xf32>
    %235 = vector.extract_strided_slice %219 {offsets = [2, 0], sizes = [1, 256], strides = [1, 1]} : vector<4x256xf32> to vector<1x256xf32>
    %236 = vector.broadcast %234 : vector<4x1xf32> to vector<4x256xf32>
    %237 = vector.broadcast %235 : vector<1x256xf32> to vector<4x256xf32>
    %238 = arith.mulf %236, %237 : vector<4x256xf32>
    %239 = arith.addf %233, %238 : vector<4x256xf32>
    %240 = vector.extract_strided_slice %221 {offsets = [0, 3], sizes = [4, 1], strides = [1, 1]} : vector<4x4xf32> to vector<4x1xf32>
    %241 = vector.extract_strided_slice %219 {offsets = [3, 0], sizes = [1, 256], strides = [1, 1]} : vector<4x256xf32> to vector<1x256xf32>
    %242 = vector.broadcast %240 : vector<4x1xf32> to vector<4x256xf32>
    %243 = vector.broadcast %241 : vector<1x256xf32> to vector<4x256xf32>
    %244 = arith.mulf %242, %243 : vector<4x256xf32>
    %245 = arith.addf %239, %244 : vector<4x256xf32>
    %c240_i32 = arith.constant 240 : i32
    %246 = tpu.dynamic_rotate %1 by %c240_i32 dim 1 : vector<4x256xf32>, i32 -> vector<4x256xf32>
    %247 = vector.broadcast %15 : vector<1x256xf32> to vector<4x256xf32>
    %248 = arith.mulf %246, %247 : vector<4x256xf32>
    %c7_55 = arith.constant 7 : index
    %c0_56 = arith.constant 0 : index
    %c0_57 = arith.constant 0 : index
    %249 = vector.load %arg3[%c7_55, %c0_56, %c0_57] : memref<9x4x4xf32, #tpu.memory_space<vmem>>, vector<1x4x4xf32>
    %250 = vector.shape_cast %249 : vector<1x4x4xf32> to vector<4x4xf32>
    %251 = vector.extract_strided_slice %250 {offsets = [0, 0], sizes = [4, 1], strides = [1, 1]} : vector<4x4xf32> to vector<4x1xf32>
    %252 = vector.extract_strided_slice %248 {offsets = [0, 0], sizes = [1, 256], strides = [1, 1]} : vector<4x256xf32> to vector<1x256xf32>
    %253 = vector.broadcast %251 : vector<4x1xf32> to vector<4x256xf32>
    %254 = vector.broadcast %252 : vector<1x256xf32> to vector<4x256xf32>
    %255 = arith.mulf %253, %254 : vector<4x256xf32>
    %256 = arith.addf %245, %255 : vector<4x256xf32>
    %257 = vector.extract_strided_slice %250 {offsets = [0, 1], sizes = [4, 1], strides = [1, 1]} : vector<4x4xf32> to vector<4x1xf32>
    %258 = vector.extract_strided_slice %248 {offsets = [1, 0], sizes = [1, 256], strides = [1, 1]} : vector<4x256xf32> to vector<1x256xf32>
    %259 = vector.broadcast %257 : vector<4x1xf32> to vector<4x256xf32>
    %260 = vector.broadcast %258 : vector<1x256xf32> to vector<4x256xf32>
    %261 = arith.mulf %259, %260 : vector<4x256xf32>
    %262 = arith.addf %256, %261 : vector<4x256xf32>
    %263 = vector.extract_strided_slice %250 {offsets = [0, 2], sizes = [4, 1], strides = [1, 1]} : vector<4x4xf32> to vector<4x1xf32>
    %264 = vector.extract_strided_slice %248 {offsets = [2, 0], sizes = [1, 256], strides = [1, 1]} : vector<4x256xf32> to vector<1x256xf32>
    %265 = vector.broadcast %263 : vector<4x1xf32> to vector<4x256xf32>
    %266 = vector.broadcast %264 : vector<1x256xf32> to vector<4x256xf32>
    %267 = arith.mulf %265, %266 : vector<4x256xf32>
    %268 = arith.addf %262, %267 : vector<4x256xf32>
    %269 = vector.extract_strided_slice %250 {offsets = [0, 3], sizes = [4, 1], strides = [1, 1]} : vector<4x4xf32> to vector<4x1xf32>
    %270 = vector.extract_strided_slice %248 {offsets = [3, 0], sizes = [1, 256], strides = [1, 1]} : vector<4x256xf32> to vector<1x256xf32>
    %271 = vector.broadcast %269 : vector<4x1xf32> to vector<4x256xf32>
    %272 = vector.broadcast %270 : vector<1x256xf32> to vector<4x256xf32>
    %273 = arith.mulf %271, %272 : vector<4x256xf32>
    %274 = arith.addf %268, %273 : vector<4x256xf32>
    %c239_i32 = arith.constant 239 : i32
    %275 = tpu.dynamic_rotate %1 by %c239_i32 dim 1 : vector<4x256xf32>, i32 -> vector<4x256xf32>
    %276 = vector.broadcast %17 : vector<1x256xf32> to vector<4x256xf32>
    %277 = arith.mulf %275, %276 : vector<4x256xf32>
    %c8_58 = arith.constant 8 : index
    %c0_59 = arith.constant 0 : index
    %c0_60 = arith.constant 0 : index
    %278 = vector.load %arg3[%c8_58, %c0_59, %c0_60] : memref<9x4x4xf32, #tpu.memory_space<vmem>>, vector<1x4x4xf32>
    %279 = vector.shape_cast %278 : vector<1x4x4xf32> to vector<4x4xf32>
    %280 = vector.extract_strided_slice %279 {offsets = [0, 0], sizes = [4, 1], strides = [1, 1]} : vector<4x4xf32> to vector<4x1xf32>
    %281 = vector.extract_strided_slice %277 {offsets = [0, 0], sizes = [1, 256], strides = [1, 1]} : vector<4x256xf32> to vector<1x256xf32>
    %282 = vector.broadcast %280 : vector<4x1xf32> to vector<4x256xf32>
    %283 = vector.broadcast %281 : vector<1x256xf32> to vector<4x256xf32>
    %284 = arith.mulf %282, %283 : vector<4x256xf32>
    %285 = arith.addf %274, %284 : vector<4x256xf32>
    %286 = vector.extract_strided_slice %279 {offsets = [0, 1], sizes = [4, 1], strides = [1, 1]} : vector<4x4xf32> to vector<4x1xf32>
    %287 = vector.extract_strided_slice %277 {offsets = [1, 0], sizes = [1, 256], strides = [1, 1]} : vector<4x256xf32> to vector<1x256xf32>
    %288 = vector.broadcast %286 : vector<4x1xf32> to vector<4x256xf32>
    %289 = vector.broadcast %287 : vector<1x256xf32> to vector<4x256xf32>
    %290 = arith.mulf %288, %289 : vector<4x256xf32>
    %291 = arith.addf %285, %290 : vector<4x256xf32>
    %292 = vector.extract_strided_slice %279 {offsets = [0, 2], sizes = [4, 1], strides = [1, 1]} : vector<4x4xf32> to vector<4x1xf32>
    %293 = vector.extract_strided_slice %277 {offsets = [2, 0], sizes = [1, 256], strides = [1, 1]} : vector<4x256xf32> to vector<1x256xf32>
    %294 = vector.broadcast %292 : vector<4x1xf32> to vector<4x256xf32>
    %295 = vector.broadcast %293 : vector<1x256xf32> to vector<4x256xf32>
    %296 = arith.mulf %294, %295 : vector<4x256xf32>
    %297 = arith.addf %291, %296 : vector<4x256xf32>
    %298 = vector.extract_strided_slice %279 {offsets = [0, 3], sizes = [4, 1], strides = [1, 1]} : vector<4x4xf32> to vector<4x1xf32>
    %299 = vector.extract_strided_slice %277 {offsets = [3, 0], sizes = [1, 256], strides = [1, 1]} : vector<4x256xf32> to vector<1x256xf32>
    %300 = vector.broadcast %298 : vector<4x1xf32> to vector<4x256xf32>
    %301 = vector.broadcast %299 : vector<1x256xf32> to vector<4x256xf32>
    %302 = arith.mulf %300, %301 : vector<4x256xf32>
    %303 = arith.addf %297, %302 : vector<4x256xf32>
    %c0_61 = arith.constant 0 : index
    %c0_62 = arith.constant 0 : index
    %304 = vector.load %arg7[%c0_61, %c0_62] : memref<4x1xf32, #tpu.memory_space<vmem>>, vector<4x1xf32>
    %c0_63 = arith.constant 0 : index
    %c0_64 = arith.constant 0 : index
    %305 = vector.load %arg8[%c0_63, %c0_64] : memref<4x1xf32, #tpu.memory_space<vmem>>, vector<4x1xf32>
    %cst_65 = arith.constant dense<0.000000e+00> : vector<4xf32>
    %306 = vector.multi_reduction <add>, %303, %cst_65 [1] : vector<4x256xf32> to vector<4xf32>
    %307 = vector.shape_cast %306 : vector<4xf32> to vector<4x1xf32>
    %cst_66 = arith.constant 3.906250e-03 : f32
    %308 = vector.broadcast %cst_66 : f32 to vector<4x1xf32>
    %309 = arith.mulf %307, %308 : vector<4x1xf32>
    %310 = arith.mulf %303, %303 : vector<4x256xf32>
    %cst_67 = arith.constant dense<0.000000e+00> : vector<4xf32>
    %311 = vector.multi_reduction <add>, %310, %cst_67 [1] : vector<4x256xf32> to vector<4xf32>
    %312 = vector.shape_cast %311 : vector<4xf32> to vector<4x1xf32>
    %cst_68 = arith.constant 3.906250e-03 : f32
    %313 = vector.broadcast %cst_68 : f32 to vector<4x1xf32>
    %314 = arith.mulf %312, %313 : vector<4x1xf32>
    %315 = arith.mulf %309, %309 : vector<4x1xf32>
    %316 = arith.subf %314, %315 : vector<4x1xf32>
    %cst_69 = arith.constant 9.99999974E-6 : f32
    %317 = vector.broadcast %cst_69 : f32 to vector<4x1xf32>
    %318 = arith.addf %316, %317 : vector<4x1xf32>
    %319 = math.rsqrt %318 : vector<4x1xf32>
    %320 = vector.broadcast %309 : vector<4x1xf32> to vector<4x256xf32>
    %321 = arith.subf %303, %320 : vector<4x256xf32>
    %322 = arith.mulf %304, %319 : vector<4x1xf32>
    %323 = vector.broadcast %322 : vector<4x1xf32> to vector<4x256xf32>
    %324 = arith.mulf %321, %323 : vector<4x256xf32>
    %325 = vector.broadcast %305 : vector<4x1xf32> to vector<4x256xf32>
    %326 = arith.addf %324, %325 : vector<4x256xf32>
    %327 = math.tanh %326 : vector<4x256xf32>
    %cst_70 = arith.constant 0.000000e+00 : f32
    %328 = vector.broadcast %cst_70 : f32 to vector<4x256xf32>
    %c17_i32_71 = arith.constant 17 : i32
    %329 = tpu.dynamic_rotate %327 by %c17_i32_71 dim 1 : vector<4x256xf32>, i32 -> vector<4x256xf32>
    %330 = vector.broadcast %3 : vector<1x256xf32> to vector<4x256xf32>
    %331 = arith.mulf %329, %330 : vector<4x256xf32>
    %c0_72 = arith.constant 0 : index
    %c0_73 = arith.constant 0 : index
    %c0_74 = arith.constant 0 : index
    %332 = vector.load %arg4[%c0_72, %c0_73, %c0_74] : memref<9x4x4xf32, #tpu.memory_space<vmem>>, vector<1x4x4xf32>
    %333 = vector.shape_cast %332 : vector<1x4x4xf32> to vector<4x4xf32>
    %334 = vector.extract_strided_slice %333 {offsets = [0, 0], sizes = [4, 1], strides = [1, 1]} : vector<4x4xf32> to vector<4x1xf32>
    %335 = vector.extract_strided_slice %331 {offsets = [0, 0], sizes = [1, 256], strides = [1, 1]} : vector<4x256xf32> to vector<1x256xf32>
    %336 = vector.broadcast %334 : vector<4x1xf32> to vector<4x256xf32>
    %337 = vector.broadcast %335 : vector<1x256xf32> to vector<4x256xf32>
    %338 = arith.mulf %336, %337 : vector<4x256xf32>
    %339 = arith.addf %328, %338 : vector<4x256xf32>
    %340 = vector.extract_strided_slice %333 {offsets = [0, 1], sizes = [4, 1], strides = [1, 1]} : vector<4x4xf32> to vector<4x1xf32>
    %341 = vector.extract_strided_slice %331 {offsets = [1, 0], sizes = [1, 256], strides = [1, 1]} : vector<4x256xf32> to vector<1x256xf32>
    %342 = vector.broadcast %340 : vector<4x1xf32> to vector<4x256xf32>
    %343 = vector.broadcast %341 : vector<1x256xf32> to vector<4x256xf32>
    %344 = arith.mulf %342, %343 : vector<4x256xf32>
    %345 = arith.addf %339, %344 : vector<4x256xf32>
    %346 = vector.extract_strided_slice %333 {offsets = [0, 2], sizes = [4, 1], strides = [1, 1]} : vector<4x4xf32> to vector<4x1xf32>
    %347 = vector.extract_strided_slice %331 {offsets = [2, 0], sizes = [1, 256], strides = [1, 1]} : vector<4x256xf32> to vector<1x256xf32>
    %348 = vector.broadcast %346 : vector<4x1xf32> to vector<4x256xf32>
    %349 = vector.broadcast %347 : vector<1x256xf32> to vector<4x256xf32>
    %350 = arith.mulf %348, %349 : vector<4x256xf32>
    %351 = arith.addf %345, %350 : vector<4x256xf32>
    %352 = vector.extract_strided_slice %333 {offsets = [0, 3], sizes = [4, 1], strides = [1, 1]} : vector<4x4xf32> to vector<4x1xf32>
    %353 = vector.extract_strided_slice %331 {offsets = [3, 0], sizes = [1, 256], strides = [1, 1]} : vector<4x256xf32> to vector<1x256xf32>
    %354 = vector.broadcast %352 : vector<4x1xf32> to vector<4x256xf32>
    %355 = vector.broadcast %353 : vector<1x256xf32> to vector<4x256xf32>
    %356 = arith.mulf %354, %355 : vector<4x256xf32>
    %357 = arith.addf %351, %356 : vector<4x256xf32>
    %c16_i32_75 = arith.constant 16 : i32
    %358 = tpu.dynamic_rotate %327 by %c16_i32_75 dim 1 : vector<4x256xf32>, i32 -> vector<4x256xf32>
    %359 = vector.broadcast %5 : vector<1x256xf32> to vector<4x256xf32>
    %360 = arith.mulf %358, %359 : vector<4x256xf32>
    %c1_76 = arith.constant 1 : index
    %c0_77 = arith.constant 0 : index
    %c0_78 = arith.constant 0 : index
    %361 = vector.load %arg4[%c1_76, %c0_77, %c0_78] : memref<9x4x4xf32, #tpu.memory_space<vmem>>, vector<1x4x4xf32>
    %362 = vector.shape_cast %361 : vector<1x4x4xf32> to vector<4x4xf32>
    %363 = vector.extract_strided_slice %362 {offsets = [0, 0], sizes = [4, 1], strides = [1, 1]} : vector<4x4xf32> to vector<4x1xf32>
    %364 = vector.extract_strided_slice %360 {offsets = [0, 0], sizes = [1, 256], strides = [1, 1]} : vector<4x256xf32> to vector<1x256xf32>
    %365 = vector.broadcast %363 : vector<4x1xf32> to vector<4x256xf32>
    %366 = vector.broadcast %364 : vector<1x256xf32> to vector<4x256xf32>
    %367 = arith.mulf %365, %366 : vector<4x256xf32>
    %368 = arith.addf %357, %367 : vector<4x256xf32>
    %369 = vector.extract_strided_slice %362 {offsets = [0, 1], sizes = [4, 1], strides = [1, 1]} : vector<4x4xf32> to vector<4x1xf32>
    %370 = vector.extract_strided_slice %360 {offsets = [1, 0], sizes = [1, 256], strides = [1, 1]} : vector<4x256xf32> to vector<1x256xf32>
    %371 = vector.broadcast %369 : vector<4x1xf32> to vector<4x256xf32>
    %372 = vector.broadcast %370 : vector<1x256xf32> to vector<4x256xf32>
    %373 = arith.mulf %371, %372 : vector<4x256xf32>
    %374 = arith.addf %368, %373 : vector<4x256xf32>
    %375 = vector.extract_strided_slice %362 {offsets = [0, 2], sizes = [4, 1], strides = [1, 1]} : vector<4x4xf32> to vector<4x1xf32>
    %376 = vector.extract_strided_slice %360 {offsets = [2, 0], sizes = [1, 256], strides = [1, 1]} : vector<4x256xf32> to vector<1x256xf32>
    %377 = vector.broadcast %375 : vector<4x1xf32> to vector<4x256xf32>
    %378 = vector.broadcast %376 : vector<1x256xf32> to vector<4x256xf32>
    %379 = arith.mulf %377, %378 : vector<4x256xf32>
    %380 = arith.addf %374, %379 : vector<4x256xf32>
    %381 = vector.extract_strided_slice %362 {offsets = [0, 3], sizes = [4, 1], strides = [1, 1]} : vector<4x4xf32> to vector<4x1xf32>
    %382 = vector.extract_strided_slice %360 {offsets = [3, 0], sizes = [1, 256], strides = [1, 1]} : vector<4x256xf32> to vector<1x256xf32>
    %383 = vector.broadcast %381 : vector<4x1xf32> to vector<4x256xf32>
    %384 = vector.broadcast %382 : vector<1x256xf32> to vector<4x256xf32>
    %385 = arith.mulf %383, %384 : vector<4x256xf32>
    %386 = arith.addf %380, %385 : vector<4x256xf32>
    %c15_i32_79 = arith.constant 15 : i32
    %387 = tpu.dynamic_rotate %327 by %c15_i32_79 dim 1 : vector<4x256xf32>, i32 -> vector<4x256xf32>
    %388 = vector.broadcast %7 : vector<1x256xf32> to vector<4x256xf32>
    %389 = arith.mulf %387, %388 : vector<4x256xf32>
    %c2_80 = arith.constant 2 : index
    %c0_81 = arith.constant 0 : index
    %c0_82 = arith.constant 0 : index
    %390 = vector.load %arg4[%c2_80, %c0_81, %c0_82] : memref<9x4x4xf32, #tpu.memory_space<vmem>>, vector<1x4x4xf32>
    %391 = vector.shape_cast %390 : vector<1x4x4xf32> to vector<4x4xf32>
    %392 = vector.extract_strided_slice %391 {offsets = [0, 0], sizes = [4, 1], strides = [1, 1]} : vector<4x4xf32> to vector<4x1xf32>
    %393 = vector.extract_strided_slice %389 {offsets = [0, 0], sizes = [1, 256], strides = [1, 1]} : vector<4x256xf32> to vector<1x256xf32>
    %394 = vector.broadcast %392 : vector<4x1xf32> to vector<4x256xf32>
    %395 = vector.broadcast %393 : vector<1x256xf32> to vector<4x256xf32>
    %396 = arith.mulf %394, %395 : vector<4x256xf32>
    %397 = arith.addf %386, %396 : vector<4x256xf32>
    %398 = vector.extract_strided_slice %391 {offsets = [0, 1], sizes = [4, 1], strides = [1, 1]} : vector<4x4xf32> to vector<4x1xf32>
    %399 = vector.extract_strided_slice %389 {offsets = [1, 0], sizes = [1, 256], strides = [1, 1]} : vector<4x256xf32> to vector<1x256xf32>
    %400 = vector.broadcast %398 : vector<4x1xf32> to vector<4x256xf32>
    %401 = vector.broadcast %399 : vector<1x256xf32> to vector<4x256xf32>
    %402 = arith.mulf %400, %401 : vector<4x256xf32>
    %403 = arith.addf %397, %402 : vector<4x256xf32>
    %404 = vector.extract_strided_slice %391 {offsets = [0, 2], sizes = [4, 1], strides = [1, 1]} : vector<4x4xf32> to vector<4x1xf32>
    %405 = vector.extract_strided_slice %389 {offsets = [2, 0], sizes = [1, 256], strides = [1, 1]} : vector<4x256xf32> to vector<1x256xf32>
    %406 = vector.broadcast %404 : vector<4x1xf32> to vector<4x256xf32>
    %407 = vector.broadcast %405 : vector<1x256xf32> to vector<4x256xf32>
    %408 = arith.mulf %406, %407 : vector<4x256xf32>
    %409 = arith.addf %403, %408 : vector<4x256xf32>
    %410 = vector.extract_strided_slice %391 {offsets = [0, 3], sizes = [4, 1], strides = [1, 1]} : vector<4x4xf32> to vector<4x1xf32>
    %411 = vector.extract_strided_slice %389 {offsets = [3, 0], sizes = [1, 256], strides = [1, 1]} : vector<4x256xf32> to vector<1x256xf32>
    %412 = vector.broadcast %410 : vector<4x1xf32> to vector<4x256xf32>
    %413 = vector.broadcast %411 : vector<1x256xf32> to vector<4x256xf32>
    %414 = arith.mulf %412, %413 : vector<4x256xf32>
    %415 = arith.addf %409, %414 : vector<4x256xf32>
    %c1_i32_83 = arith.constant 1 : i32
    %416 = tpu.dynamic_rotate %327 by %c1_i32_83 dim 1 : vector<4x256xf32>, i32 -> vector<4x256xf32>
    %417 = vector.broadcast %9 : vector<1x256xf32> to vector<4x256xf32>
    %418 = arith.mulf %416, %417 : vector<4x256xf32>
    %c3_84 = arith.constant 3 : index
    %c0_85 = arith.constant 0 : index
    %c0_86 = arith.constant 0 : index
    %419 = vector.load %arg4[%c3_84, %c0_85, %c0_86] : memref<9x4x4xf32, #tpu.memory_space<vmem>>, vector<1x4x4xf32>
    %420 = vector.shape_cast %419 : vector<1x4x4xf32> to vector<4x4xf32>
    %421 = vector.extract_strided_slice %420 {offsets = [0, 0], sizes = [4, 1], strides = [1, 1]} : vector<4x4xf32> to vector<4x1xf32>
    %422 = vector.extract_strided_slice %418 {offsets = [0, 0], sizes = [1, 256], strides = [1, 1]} : vector<4x256xf32> to vector<1x256xf32>
    %423 = vector.broadcast %421 : vector<4x1xf32> to vector<4x256xf32>
    %424 = vector.broadcast %422 : vector<1x256xf32> to vector<4x256xf32>
    %425 = arith.mulf %423, %424 : vector<4x256xf32>
    %426 = arith.addf %415, %425 : vector<4x256xf32>
    %427 = vector.extract_strided_slice %420 {offsets = [0, 1], sizes = [4, 1], strides = [1, 1]} : vector<4x4xf32> to vector<4x1xf32>
    %428 = vector.extract_strided_slice %418 {offsets = [1, 0], sizes = [1, 256], strides = [1, 1]} : vector<4x256xf32> to vector<1x256xf32>
    %429 = vector.broadcast %427 : vector<4x1xf32> to vector<4x256xf32>
    %430 = vector.broadcast %428 : vector<1x256xf32> to vector<4x256xf32>
    %431 = arith.mulf %429, %430 : vector<4x256xf32>
    %432 = arith.addf %426, %431 : vector<4x256xf32>
    %433 = vector.extract_strided_slice %420 {offsets = [0, 2], sizes = [4, 1], strides = [1, 1]} : vector<4x4xf32> to vector<4x1xf32>
    %434 = vector.extract_strided_slice %418 {offsets = [2, 0], sizes = [1, 256], strides = [1, 1]} : vector<4x256xf32> to vector<1x256xf32>
    %435 = vector.broadcast %433 : vector<4x1xf32> to vector<4x256xf32>
    %436 = vector.broadcast %434 : vector<1x256xf32> to vector<4x256xf32>
    %437 = arith.mulf %435, %436 : vector<4x256xf32>
    %438 = arith.addf %432, %437 : vector<4x256xf32>
    %439 = vector.extract_strided_slice %420 {offsets = [0, 3], sizes = [4, 1], strides = [1, 1]} : vector<4x4xf32> to vector<4x1xf32>
    %440 = vector.extract_strided_slice %418 {offsets = [3, 0], sizes = [1, 256], strides = [1, 1]} : vector<4x256xf32> to vector<1x256xf32>
    %441 = vector.broadcast %439 : vector<4x1xf32> to vector<4x256xf32>
    %442 = vector.broadcast %440 : vector<1x256xf32> to vector<4x256xf32>
    %443 = arith.mulf %441, %442 : vector<4x256xf32>
    %444 = arith.addf %438, %443 : vector<4x256xf32>
    %c4_87 = arith.constant 4 : index
    %c0_88 = arith.constant 0 : index
    %c0_89 = arith.constant 0 : index
    %445 = vector.load %arg4[%c4_87, %c0_88, %c0_89] : memref<9x4x4xf32, #tpu.memory_space<vmem>>, vector<1x4x4xf32>
    %446 = vector.shape_cast %445 : vector<1x4x4xf32> to vector<4x4xf32>
    %447 = vector.extract_strided_slice %446 {offsets = [0, 0], sizes = [4, 1], strides = [1, 1]} : vector<4x4xf32> to vector<4x1xf32>
    %448 = vector.extract_strided_slice %327 {offsets = [0, 0], sizes = [1, 256], strides = [1, 1]} : vector<4x256xf32> to vector<1x256xf32>
    %449 = vector.broadcast %447 : vector<4x1xf32> to vector<4x256xf32>
    %450 = vector.broadcast %448 : vector<1x256xf32> to vector<4x256xf32>
    %451 = arith.mulf %449, %450 : vector<4x256xf32>
    %452 = arith.addf %444, %451 : vector<4x256xf32>
    %453 = vector.extract_strided_slice %446 {offsets = [0, 1], sizes = [4, 1], strides = [1, 1]} : vector<4x4xf32> to vector<4x1xf32>
    %454 = vector.extract_strided_slice %327 {offsets = [1, 0], sizes = [1, 256], strides = [1, 1]} : vector<4x256xf32> to vector<1x256xf32>
    %455 = vector.broadcast %453 : vector<4x1xf32> to vector<4x256xf32>
    %456 = vector.broadcast %454 : vector<1x256xf32> to vector<4x256xf32>
    %457 = arith.mulf %455, %456 : vector<4x256xf32>
    %458 = arith.addf %452, %457 : vector<4x256xf32>
    %459 = vector.extract_strided_slice %446 {offsets = [0, 2], sizes = [4, 1], strides = [1, 1]} : vector<4x4xf32> to vector<4x1xf32>
    %460 = vector.extract_strided_slice %327 {offsets = [2, 0], sizes = [1, 256], strides = [1, 1]} : vector<4x256xf32> to vector<1x256xf32>
    %461 = vector.broadcast %459 : vector<4x1xf32> to vector<4x256xf32>
    %462 = vector.broadcast %460 : vector<1x256xf32> to vector<4x256xf32>
    %463 = arith.mulf %461, %462 : vector<4x256xf32>
    %464 = arith.addf %458, %463 : vector<4x256xf32>
    %465 = vector.extract_strided_slice %446 {offsets = [0, 3], sizes = [4, 1], strides = [1, 1]} : vector<4x4xf32> to vector<4x1xf32>
    %466 = vector.extract_strided_slice %327 {offsets = [3, 0], sizes = [1, 256], strides = [1, 1]} : vector<4x256xf32> to vector<1x256xf32>
    %467 = vector.broadcast %465 : vector<4x1xf32> to vector<4x256xf32>
    %468 = vector.broadcast %466 : vector<1x256xf32> to vector<4x256xf32>
    %469 = arith.mulf %467, %468 : vector<4x256xf32>
    %470 = arith.addf %464, %469 : vector<4x256xf32>
    %c255_i32_90 = arith.constant 255 : i32
    %471 = tpu.dynamic_rotate %327 by %c255_i32_90 dim 1 : vector<4x256xf32>, i32 -> vector<4x256xf32>
    %472 = vector.broadcast %11 : vector<1x256xf32> to vector<4x256xf32>
    %473 = arith.mulf %471, %472 : vector<4x256xf32>
    %c5_91 = arith.constant 5 : index
    %c0_92 = arith.constant 0 : index
    %c0_93 = arith.constant 0 : index
    %474 = vector.load %arg4[%c5_91, %c0_92, %c0_93] : memref<9x4x4xf32, #tpu.memory_space<vmem>>, vector<1x4x4xf32>
    %475 = vector.shape_cast %474 : vector<1x4x4xf32> to vector<4x4xf32>
    %476 = vector.extract_strided_slice %475 {offsets = [0, 0], sizes = [4, 1], strides = [1, 1]} : vector<4x4xf32> to vector<4x1xf32>
    %477 = vector.extract_strided_slice %473 {offsets = [0, 0], sizes = [1, 256], strides = [1, 1]} : vector<4x256xf32> to vector<1x256xf32>
    %478 = vector.broadcast %476 : vector<4x1xf32> to vector<4x256xf32>
    %479 = vector.broadcast %477 : vector<1x256xf32> to vector<4x256xf32>
    %480 = arith.mulf %478, %479 : vector<4x256xf32>
    %481 = arith.addf %470, %480 : vector<4x256xf32>
    %482 = vector.extract_strided_slice %475 {offsets = [0, 1], sizes = [4, 1], strides = [1, 1]} : vector<4x4xf32> to vector<4x1xf32>
    %483 = vector.extract_strided_slice %473 {offsets = [1, 0], sizes = [1, 256], strides = [1, 1]} : vector<4x256xf32> to vector<1x256xf32>
    %484 = vector.broadcast %482 : vector<4x1xf32> to vector<4x256xf32>
    %485 = vector.broadcast %483 : vector<1x256xf32> to vector<4x256xf32>
    %486 = arith.mulf %484, %485 : vector<4x256xf32>
    %487 = arith.addf %481, %486 : vector<4x256xf32>
    %488 = vector.extract_strided_slice %475 {offsets = [0, 2], sizes = [4, 1], strides = [1, 1]} : vector<4x4xf32> to vector<4x1xf32>
    %489 = vector.extract_strided_slice %473 {offsets = [2, 0], sizes = [1, 256], strides = [1, 1]} : vector<4x256xf32> to vector<1x256xf32>
    %490 = vector.broadcast %488 : vector<4x1xf32> to vector<4x256xf32>
    %491 = vector.broadcast %489 : vector<1x256xf32> to vector<4x256xf32>
    %492 = arith.mulf %490, %491 : vector<4x256xf32>
    %493 = arith.addf %487, %492 : vector<4x256xf32>
    %494 = vector.extract_strided_slice %475 {offsets = [0, 3], sizes = [4, 1], strides = [1, 1]} : vector<4x4xf32> to vector<4x1xf32>
    %495 = vector.extract_strided_slice %473 {offsets = [3, 0], sizes = [1, 256], strides = [1, 1]} : vector<4x256xf32> to vector<1x256xf32>
    %496 = vector.broadcast %494 : vector<4x1xf32> to vector<4x256xf32>
    %497 = vector.broadcast %495 : vector<1x256xf32> to vector<4x256xf32>
    %498 = arith.mulf %496, %497 : vector<4x256xf32>
    %499 = arith.addf %493, %498 : vector<4x256xf32>
    %c241_i32_94 = arith.constant 241 : i32
    %500 = tpu.dynamic_rotate %327 by %c241_i32_94 dim 1 : vector<4x256xf32>, i32 -> vector<4x256xf32>
    %501 = vector.broadcast %13 : vector<1x256xf32> to vector<4x256xf32>
    %502 = arith.mulf %500, %501 : vector<4x256xf32>
    %c6_95 = arith.constant 6 : index
    %c0_96 = arith.constant 0 : index
    %c0_97 = arith.constant 0 : index
    %503 = vector.load %arg4[%c6_95, %c0_96, %c0_97] : memref<9x4x4xf32, #tpu.memory_space<vmem>>, vector<1x4x4xf32>
    %504 = vector.shape_cast %503 : vector<1x4x4xf32> to vector<4x4xf32>
    %505 = vector.extract_strided_slice %504 {offsets = [0, 0], sizes = [4, 1], strides = [1, 1]} : vector<4x4xf32> to vector<4x1xf32>
    %506 = vector.extract_strided_slice %502 {offsets = [0, 0], sizes = [1, 256], strides = [1, 1]} : vector<4x256xf32> to vector<1x256xf32>
    %507 = vector.broadcast %505 : vector<4x1xf32> to vector<4x256xf32>
    %508 = vector.broadcast %506 : vector<1x256xf32> to vector<4x256xf32>
    %509 = arith.mulf %507, %508 : vector<4x256xf32>
    %510 = arith.addf %499, %509 : vector<4x256xf32>
    %511 = vector.extract_strided_slice %504 {offsets = [0, 1], sizes = [4, 1], strides = [1, 1]} : vector<4x4xf32> to vector<4x1xf32>
    %512 = vector.extract_strided_slice %502 {offsets = [1, 0], sizes = [1, 256], strides = [1, 1]} : vector<4x256xf32> to vector<1x256xf32>
    %513 = vector.broadcast %511 : vector<4x1xf32> to vector<4x256xf32>
    %514 = vector.broadcast %512 : vector<1x256xf32> to vector<4x256xf32>
    %515 = arith.mulf %513, %514 : vector<4x256xf32>
    %516 = arith.addf %510, %515 : vector<4x256xf32>
    %517 = vector.extract_strided_slice %504 {offsets = [0, 2], sizes = [4, 1], strides = [1, 1]} : vector<4x4xf32> to vector<4x1xf32>
    %518 = vector.extract_strided_slice %502 {offsets = [2, 0], sizes = [1, 256], strides = [1, 1]} : vector<4x256xf32> to vector<1x256xf32>
    %519 = vector.broadcast %517 : vector<4x1xf32> to vector<4x256xf32>
    %520 = vector.broadcast %518 : vector<1x256xf32> to vector<4x256xf32>
    %521 = arith.mulf %519, %520 : vector<4x256xf32>
    %522 = arith.addf %516, %521 : vector<4x256xf32>
    %523 = vector.extract_strided_slice %504 {offsets = [0, 3], sizes = [4, 1], strides = [1, 1]} : vector<4x4xf32> to vector<4x1xf32>
    %524 = vector.extract_strided_slice %502 {offsets = [3, 0], sizes = [1, 256], strides = [1, 1]} : vector<4x256xf32> to vector<1x256xf32>
    %525 = vector.broadcast %523 : vector<4x1xf32> to vector<4x256xf32>
    %526 = vector.broadcast %524 : vector<1x256xf32> to vector<4x256xf32>
    %527 = arith.mulf %525, %526 : vector<4x256xf32>
    %528 = arith.addf %522, %527 : vector<4x256xf32>
    %c240_i32_98 = arith.constant 240 : i32
    %529 = tpu.dynamic_rotate %327 by %c240_i32_98 dim 1 : vector<4x256xf32>, i32 -> vector<4x256xf32>
    %530 = vector.broadcast %15 : vector<1x256xf32> to vector<4x256xf32>
    %531 = arith.mulf %529, %530 : vector<4x256xf32>
    %c7_99 = arith.constant 7 : index
    %c0_100 = arith.constant 0 : index
    %c0_101 = arith.constant 0 : index
    %532 = vector.load %arg4[%c7_99, %c0_100, %c0_101] : memref<9x4x4xf32, #tpu.memory_space<vmem>>, vector<1x4x4xf32>
    %533 = vector.shape_cast %532 : vector<1x4x4xf32> to vector<4x4xf32>
    %534 = vector.extract_strided_slice %533 {offsets = [0, 0], sizes = [4, 1], strides = [1, 1]} : vector<4x4xf32> to vector<4x1xf32>
    %535 = vector.extract_strided_slice %531 {offsets = [0, 0], sizes = [1, 256], strides = [1, 1]} : vector<4x256xf32> to vector<1x256xf32>
    %536 = vector.broadcast %534 : vector<4x1xf32> to vector<4x256xf32>
    %537 = vector.broadcast %535 : vector<1x256xf32> to vector<4x256xf32>
    %538 = arith.mulf %536, %537 : vector<4x256xf32>
    %539 = arith.addf %528, %538 : vector<4x256xf32>
    %540 = vector.extract_strided_slice %533 {offsets = [0, 1], sizes = [4, 1], strides = [1, 1]} : vector<4x4xf32> to vector<4x1xf32>
    %541 = vector.extract_strided_slice %531 {offsets = [1, 0], sizes = [1, 256], strides = [1, 1]} : vector<4x256xf32> to vector<1x256xf32>
    %542 = vector.broadcast %540 : vector<4x1xf32> to vector<4x256xf32>
    %543 = vector.broadcast %541 : vector<1x256xf32> to vector<4x256xf32>
    %544 = arith.mulf %542, %543 : vector<4x256xf32>
    %545 = arith.addf %539, %544 : vector<4x256xf32>
    %546 = vector.extract_strided_slice %533 {offsets = [0, 2], sizes = [4, 1], strides = [1, 1]} : vector<4x4xf32> to vector<4x1xf32>
    %547 = vector.extract_strided_slice %531 {offsets = [2, 0], sizes = [1, 256], strides = [1, 1]} : vector<4x256xf32> to vector<1x256xf32>
    %548 = vector.broadcast %546 : vector<4x1xf32> to vector<4x256xf32>
    %549 = vector.broadcast %547 : vector<1x256xf32> to vector<4x256xf32>
    %550 = arith.mulf %548, %549 : vector<4x256xf32>
    %551 = arith.addf %545, %550 : vector<4x256xf32>
    %552 = vector.extract_strided_slice %533 {offsets = [0, 3], sizes = [4, 1], strides = [1, 1]} : vector<4x4xf32> to vector<4x1xf32>
    %553 = vector.extract_strided_slice %531 {offsets = [3, 0], sizes = [1, 256], strides = [1, 1]} : vector<4x256xf32> to vector<1x256xf32>
    %554 = vector.broadcast %552 : vector<4x1xf32> to vector<4x256xf32>
    %555 = vector.broadcast %553 : vector<1x256xf32> to vector<4x256xf32>
    %556 = arith.mulf %554, %555 : vector<4x256xf32>
    %557 = arith.addf %551, %556 : vector<4x256xf32>
    %c239_i32_102 = arith.constant 239 : i32
    %558 = tpu.dynamic_rotate %327 by %c239_i32_102 dim 1 : vector<4x256xf32>, i32 -> vector<4x256xf32>
    %559 = vector.broadcast %17 : vector<1x256xf32> to vector<4x256xf32>
    %560 = arith.mulf %558, %559 : vector<4x256xf32>
    %c8_103 = arith.constant 8 : index
    %c0_104 = arith.constant 0 : index
    %c0_105 = arith.constant 0 : index
    %561 = vector.load %arg4[%c8_103, %c0_104, %c0_105] : memref<9x4x4xf32, #tpu.memory_space<vmem>>, vector<1x4x4xf32>
    %562 = vector.shape_cast %561 : vector<1x4x4xf32> to vector<4x4xf32>
    %563 = vector.extract_strided_slice %562 {offsets = [0, 0], sizes = [4, 1], strides = [1, 1]} : vector<4x4xf32> to vector<4x1xf32>
    %564 = vector.extract_strided_slice %560 {offsets = [0, 0], sizes = [1, 256], strides = [1, 1]} : vector<4x256xf32> to vector<1x256xf32>
    %565 = vector.broadcast %563 : vector<4x1xf32> to vector<4x256xf32>
    %566 = vector.broadcast %564 : vector<1x256xf32> to vector<4x256xf32>
    %567 = arith.mulf %565, %566 : vector<4x256xf32>
    %568 = arith.addf %557, %567 : vector<4x256xf32>
    %569 = vector.extract_strided_slice %562 {offsets = [0, 1], sizes = [4, 1], strides = [1, 1]} : vector<4x4xf32> to vector<4x1xf32>
    %570 = vector.extract_strided_slice %560 {offsets = [1, 0], sizes = [1, 256], strides = [1, 1]} : vector<4x256xf32> to vector<1x256xf32>
    %571 = vector.broadcast %569 : vector<4x1xf32> to vector<4x256xf32>
    %572 = vector.broadcast %570 : vector<1x256xf32> to vector<4x256xf32>
    %573 = arith.mulf %571, %572 : vector<4x256xf32>
    %574 = arith.addf %568, %573 : vector<4x256xf32>
    %575 = vector.extract_strided_slice %562 {offsets = [0, 2], sizes = [4, 1], strides = [1, 1]} : vector<4x4xf32> to vector<4x1xf32>
    %576 = vector.extract_strided_slice %560 {offsets = [2, 0], sizes = [1, 256], strides = [1, 1]} : vector<4x256xf32> to vector<1x256xf32>
    %577 = vector.broadcast %575 : vector<4x1xf32> to vector<4x256xf32>
    %578 = vector.broadcast %576 : vector<1x256xf32> to vector<4x256xf32>
    %579 = arith.mulf %577, %578 : vector<4x256xf32>
    %580 = arith.addf %574, %579 : vector<4x256xf32>
    %581 = vector.extract_strided_slice %562 {offsets = [0, 3], sizes = [4, 1], strides = [1, 1]} : vector<4x4xf32> to vector<4x1xf32>
    %582 = vector.extract_strided_slice %560 {offsets = [3, 0], sizes = [1, 256], strides = [1, 1]} : vector<4x256xf32> to vector<1x256xf32>
    %583 = vector.broadcast %581 : vector<4x1xf32> to vector<4x256xf32>
    %584 = vector.broadcast %582 : vector<1x256xf32> to vector<4x256xf32>
    %585 = arith.mulf %583, %584 : vector<4x256xf32>
    %586 = arith.addf %580, %585 : vector<4x256xf32>
    %c0_106 = arith.constant 0 : index
    %c0_107 = arith.constant 0 : index
    %587 = vector.load %arg9[%c0_106, %c0_107] : memref<4x1xf32, #tpu.memory_space<vmem>>, vector<4x1xf32>
    %c0_108 = arith.constant 0 : index
    %c0_109 = arith.constant 0 : index
    %588 = vector.load %arg10[%c0_108, %c0_109] : memref<4x1xf32, #tpu.memory_space<vmem>>, vector<4x1xf32>
    %cst_110 = arith.constant dense<0.000000e+00> : vector<4xf32>
    %589 = vector.multi_reduction <add>, %586, %cst_110 [1] : vector<4x256xf32> to vector<4xf32>
    %590 = vector.shape_cast %589 : vector<4xf32> to vector<4x1xf32>
    %cst_111 = arith.constant 3.906250e-03 : f32
    %591 = vector.broadcast %cst_111 : f32 to vector<4x1xf32>
    %592 = arith.mulf %590, %591 : vector<4x1xf32>
    %593 = arith.mulf %586, %586 : vector<4x256xf32>
    %cst_112 = arith.constant dense<0.000000e+00> : vector<4xf32>
    %594 = vector.multi_reduction <add>, %593, %cst_112 [1] : vector<4x256xf32> to vector<4xf32>
    %595 = vector.shape_cast %594 : vector<4xf32> to vector<4x1xf32>
    %cst_113 = arith.constant 3.906250e-03 : f32
    %596 = vector.broadcast %cst_113 : f32 to vector<4x1xf32>
    %597 = arith.mulf %595, %596 : vector<4x1xf32>
    %598 = arith.mulf %592, %592 : vector<4x1xf32>
    %599 = arith.subf %597, %598 : vector<4x1xf32>
    %cst_114 = arith.constant 9.99999974E-6 : f32
    %600 = vector.broadcast %cst_114 : f32 to vector<4x1xf32>
    %601 = arith.addf %599, %600 : vector<4x1xf32>
    %602 = math.rsqrt %601 : vector<4x1xf32>
    %603 = vector.broadcast %592 : vector<4x1xf32> to vector<4x256xf32>
    %604 = arith.subf %586, %603 : vector<4x256xf32>
    %605 = arith.mulf %587, %602 : vector<4x1xf32>
    %606 = vector.broadcast %605 : vector<4x1xf32> to vector<4x256xf32>
    %607 = arith.mulf %604, %606 : vector<4x256xf32>
    %608 = vector.broadcast %588 : vector<4x1xf32> to vector<4x256xf32>
    %609 = arith.addf %607, %608 : vector<4x256xf32>
    %610 = math.tanh %609 : vector<4x256xf32>
    %cst_115 = arith.constant 0.000000e+00 : f32
    %611 = vector.broadcast %cst_115 : f32 to vector<4x256xf32>
    %c17_i32_116 = arith.constant 17 : i32
    %612 = tpu.dynamic_rotate %610 by %c17_i32_116 dim 1 : vector<4x256xf32>, i32 -> vector<4x256xf32>
    %613 = vector.broadcast %3 : vector<1x256xf32> to vector<4x256xf32>
    %614 = arith.mulf %612, %613 : vector<4x256xf32>
    %c0_117 = arith.constant 0 : index
    %c0_118 = arith.constant 0 : index
    %c0_119 = arith.constant 0 : index
    %615 = vector.load %arg5[%c0_117, %c0_118, %c0_119] : memref<9x4x4xf32, #tpu.memory_space<vmem>>, vector<1x4x4xf32>
    %616 = vector.shape_cast %615 : vector<1x4x4xf32> to vector<4x4xf32>
    %617 = vector.extract_strided_slice %616 {offsets = [0, 0], sizes = [4, 1], strides = [1, 1]} : vector<4x4xf32> to vector<4x1xf32>
    %618 = vector.extract_strided_slice %614 {offsets = [0, 0], sizes = [1, 256], strides = [1, 1]} : vector<4x256xf32> to vector<1x256xf32>
    %619 = vector.broadcast %617 : vector<4x1xf32> to vector<4x256xf32>
    %620 = vector.broadcast %618 : vector<1x256xf32> to vector<4x256xf32>
    %621 = arith.mulf %619, %620 : vector<4x256xf32>
    %622 = arith.addf %611, %621 : vector<4x256xf32>
    %623 = vector.extract_strided_slice %616 {offsets = [0, 1], sizes = [4, 1], strides = [1, 1]} : vector<4x4xf32> to vector<4x1xf32>
    %624 = vector.extract_strided_slice %614 {offsets = [1, 0], sizes = [1, 256], strides = [1, 1]} : vector<4x256xf32> to vector<1x256xf32>
    %625 = vector.broadcast %623 : vector<4x1xf32> to vector<4x256xf32>
    %626 = vector.broadcast %624 : vector<1x256xf32> to vector<4x256xf32>
    %627 = arith.mulf %625, %626 : vector<4x256xf32>
    %628 = arith.addf %622, %627 : vector<4x256xf32>
    %629 = vector.extract_strided_slice %616 {offsets = [0, 2], sizes = [4, 1], strides = [1, 1]} : vector<4x4xf32> to vector<4x1xf32>
    %630 = vector.extract_strided_slice %614 {offsets = [2, 0], sizes = [1, 256], strides = [1, 1]} : vector<4x256xf32> to vector<1x256xf32>
    %631 = vector.broadcast %629 : vector<4x1xf32> to vector<4x256xf32>
    %632 = vector.broadcast %630 : vector<1x256xf32> to vector<4x256xf32>
    %633 = arith.mulf %631, %632 : vector<4x256xf32>
    %634 = arith.addf %628, %633 : vector<4x256xf32>
    %635 = vector.extract_strided_slice %616 {offsets = [0, 3], sizes = [4, 1], strides = [1, 1]} : vector<4x4xf32> to vector<4x1xf32>
    %636 = vector.extract_strided_slice %614 {offsets = [3, 0], sizes = [1, 256], strides = [1, 1]} : vector<4x256xf32> to vector<1x256xf32>
    %637 = vector.broadcast %635 : vector<4x1xf32> to vector<4x256xf32>
    %638 = vector.broadcast %636 : vector<1x256xf32> to vector<4x256xf32>
    %639 = arith.mulf %637, %638 : vector<4x256xf32>
    %640 = arith.addf %634, %639 : vector<4x256xf32>
    %c16_i32_120 = arith.constant 16 : i32
    %641 = tpu.dynamic_rotate %610 by %c16_i32_120 dim 1 : vector<4x256xf32>, i32 -> vector<4x256xf32>
    %642 = vector.broadcast %5 : vector<1x256xf32> to vector<4x256xf32>
    %643 = arith.mulf %641, %642 : vector<4x256xf32>
    %c1_121 = arith.constant 1 : index
    %c0_122 = arith.constant 0 : index
    %c0_123 = arith.constant 0 : index
    %644 = vector.load %arg5[%c1_121, %c0_122, %c0_123] : memref<9x4x4xf32, #tpu.memory_space<vmem>>, vector<1x4x4xf32>
    %645 = vector.shape_cast %644 : vector<1x4x4xf32> to vector<4x4xf32>
    %646 = vector.extract_strided_slice %645 {offsets = [0, 0], sizes = [4, 1], strides = [1, 1]} : vector<4x4xf32> to vector<4x1xf32>
    %647 = vector.extract_strided_slice %643 {offsets = [0, 0], sizes = [1, 256], strides = [1, 1]} : vector<4x256xf32> to vector<1x256xf32>
    %648 = vector.broadcast %646 : vector<4x1xf32> to vector<4x256xf32>
    %649 = vector.broadcast %647 : vector<1x256xf32> to vector<4x256xf32>
    %650 = arith.mulf %648, %649 : vector<4x256xf32>
    %651 = arith.addf %640, %650 : vector<4x256xf32>
    %652 = vector.extract_strided_slice %645 {offsets = [0, 1], sizes = [4, 1], strides = [1, 1]} : vector<4x4xf32> to vector<4x1xf32>
    %653 = vector.extract_strided_slice %643 {offsets = [1, 0], sizes = [1, 256], strides = [1, 1]} : vector<4x256xf32> to vector<1x256xf32>
    %654 = vector.broadcast %652 : vector<4x1xf32> to vector<4x256xf32>
    %655 = vector.broadcast %653 : vector<1x256xf32> to vector<4x256xf32>
    %656 = arith.mulf %654, %655 : vector<4x256xf32>
    %657 = arith.addf %651, %656 : vector<4x256xf32>
    %658 = vector.extract_strided_slice %645 {offsets = [0, 2], sizes = [4, 1], strides = [1, 1]} : vector<4x4xf32> to vector<4x1xf32>
    %659 = vector.extract_strided_slice %643 {offsets = [2, 0], sizes = [1, 256], strides = [1, 1]} : vector<4x256xf32> to vector<1x256xf32>
    %660 = vector.broadcast %658 : vector<4x1xf32> to vector<4x256xf32>
    %661 = vector.broadcast %659 : vector<1x256xf32> to vector<4x256xf32>
    %662 = arith.mulf %660, %661 : vector<4x256xf32>
    %663 = arith.addf %657, %662 : vector<4x256xf32>
    %664 = vector.extract_strided_slice %645 {offsets = [0, 3], sizes = [4, 1], strides = [1, 1]} : vector<4x4xf32> to vector<4x1xf32>
    %665 = vector.extract_strided_slice %643 {offsets = [3, 0], sizes = [1, 256], strides = [1, 1]} : vector<4x256xf32> to vector<1x256xf32>
    %666 = vector.broadcast %664 : vector<4x1xf32> to vector<4x256xf32>
    %667 = vector.broadcast %665 : vector<1x256xf32> to vector<4x256xf32>
    %668 = arith.mulf %666, %667 : vector<4x256xf32>
    %669 = arith.addf %663, %668 : vector<4x256xf32>
    %c15_i32_124 = arith.constant 15 : i32
    %670 = tpu.dynamic_rotate %610 by %c15_i32_124 dim 1 : vector<4x256xf32>, i32 -> vector<4x256xf32>
    %671 = vector.broadcast %7 : vector<1x256xf32> to vector<4x256xf32>
    %672 = arith.mulf %670, %671 : vector<4x256xf32>
    %c2_125 = arith.constant 2 : index
    %c0_126 = arith.constant 0 : index
    %c0_127 = arith.constant 0 : index
    %673 = vector.load %arg5[%c2_125, %c0_126, %c0_127] : memref<9x4x4xf32, #tpu.memory_space<vmem>>, vector<1x4x4xf32>
    %674 = vector.shape_cast %673 : vector<1x4x4xf32> to vector<4x4xf32>
    %675 = vector.extract_strided_slice %674 {offsets = [0, 0], sizes = [4, 1], strides = [1, 1]} : vector<4x4xf32> to vector<4x1xf32>
    %676 = vector.extract_strided_slice %672 {offsets = [0, 0], sizes = [1, 256], strides = [1, 1]} : vector<4x256xf32> to vector<1x256xf32>
    %677 = vector.broadcast %675 : vector<4x1xf32> to vector<4x256xf32>
    %678 = vector.broadcast %676 : vector<1x256xf32> to vector<4x256xf32>
    %679 = arith.mulf %677, %678 : vector<4x256xf32>
    %680 = arith.addf %669, %679 : vector<4x256xf32>
    %681 = vector.extract_strided_slice %674 {offsets = [0, 1], sizes = [4, 1], strides = [1, 1]} : vector<4x4xf32> to vector<4x1xf32>
    %682 = vector.extract_strided_slice %672 {offsets = [1, 0], sizes = [1, 256], strides = [1, 1]} : vector<4x256xf32> to vector<1x256xf32>
    %683 = vector.broadcast %681 : vector<4x1xf32> to vector<4x256xf32>
    %684 = vector.broadcast %682 : vector<1x256xf32> to vector<4x256xf32>
    %685 = arith.mulf %683, %684 : vector<4x256xf32>
    %686 = arith.addf %680, %685 : vector<4x256xf32>
    %687 = vector.extract_strided_slice %674 {offsets = [0, 2], sizes = [4, 1], strides = [1, 1]} : vector<4x4xf32> to vector<4x1xf32>
    %688 = vector.extract_strided_slice %672 {offsets = [2, 0], sizes = [1, 256], strides = [1, 1]} : vector<4x256xf32> to vector<1x256xf32>
    %689 = vector.broadcast %687 : vector<4x1xf32> to vector<4x256xf32>
    %690 = vector.broadcast %688 : vector<1x256xf32> to vector<4x256xf32>
    %691 = arith.mulf %689, %690 : vector<4x256xf32>
    %692 = arith.addf %686, %691 : vector<4x256xf32>
    %693 = vector.extract_strided_slice %674 {offsets = [0, 3], sizes = [4, 1], strides = [1, 1]} : vector<4x4xf32> to vector<4x1xf32>
    %694 = vector.extract_strided_slice %672 {offsets = [3, 0], sizes = [1, 256], strides = [1, 1]} : vector<4x256xf32> to vector<1x256xf32>
    %695 = vector.broadcast %693 : vector<4x1xf32> to vector<4x256xf32>
    %696 = vector.broadcast %694 : vector<1x256xf32> to vector<4x256xf32>
    %697 = arith.mulf %695, %696 : vector<4x256xf32>
    %698 = arith.addf %692, %697 : vector<4x256xf32>
    %c1_i32_128 = arith.constant 1 : i32
    %699 = tpu.dynamic_rotate %610 by %c1_i32_128 dim 1 : vector<4x256xf32>, i32 -> vector<4x256xf32>
    %700 = vector.broadcast %9 : vector<1x256xf32> to vector<4x256xf32>
    %701 = arith.mulf %699, %700 : vector<4x256xf32>
    %c3_129 = arith.constant 3 : index
    %c0_130 = arith.constant 0 : index
    %c0_131 = arith.constant 0 : index
    %702 = vector.load %arg5[%c3_129, %c0_130, %c0_131] : memref<9x4x4xf32, #tpu.memory_space<vmem>>, vector<1x4x4xf32>
    %703 = vector.shape_cast %702 : vector<1x4x4xf32> to vector<4x4xf32>
    %704 = vector.extract_strided_slice %703 {offsets = [0, 0], sizes = [4, 1], strides = [1, 1]} : vector<4x4xf32> to vector<4x1xf32>
    %705 = vector.extract_strided_slice %701 {offsets = [0, 0], sizes = [1, 256], strides = [1, 1]} : vector<4x256xf32> to vector<1x256xf32>
    %706 = vector.broadcast %704 : vector<4x1xf32> to vector<4x256xf32>
    %707 = vector.broadcast %705 : vector<1x256xf32> to vector<4x256xf32>
    %708 = arith.mulf %706, %707 : vector<4x256xf32>
    %709 = arith.addf %698, %708 : vector<4x256xf32>
    %710 = vector.extract_strided_slice %703 {offsets = [0, 1], sizes = [4, 1], strides = [1, 1]} : vector<4x4xf32> to vector<4x1xf32>
    %711 = vector.extract_strided_slice %701 {offsets = [1, 0], sizes = [1, 256], strides = [1, 1]} : vector<4x256xf32> to vector<1x256xf32>
    %712 = vector.broadcast %710 : vector<4x1xf32> to vector<4x256xf32>
    %713 = vector.broadcast %711 : vector<1x256xf32> to vector<4x256xf32>
    %714 = arith.mulf %712, %713 : vector<4x256xf32>
    %715 = arith.addf %709, %714 : vector<4x256xf32>
    %716 = vector.extract_strided_slice %703 {offsets = [0, 2], sizes = [4, 1], strides = [1, 1]} : vector<4x4xf32> to vector<4x1xf32>
    %717 = vector.extract_strided_slice %701 {offsets = [2, 0], sizes = [1, 256], strides = [1, 1]} : vector<4x256xf32> to vector<1x256xf32>
    %718 = vector.broadcast %716 : vector<4x1xf32> to vector<4x256xf32>
    %719 = vector.broadcast %717 : vector<1x256xf32> to vector<4x256xf32>
    %720 = arith.mulf %718, %719 : vector<4x256xf32>
    %721 = arith.addf %715, %720 : vector<4x256xf32>
    %722 = vector.extract_strided_slice %703 {offsets = [0, 3], sizes = [4, 1], strides = [1, 1]} : vector<4x4xf32> to vector<4x1xf32>
    %723 = vector.extract_strided_slice %701 {offsets = [3, 0], sizes = [1, 256], strides = [1, 1]} : vector<4x256xf32> to vector<1x256xf32>
    %724 = vector.broadcast %722 : vector<4x1xf32> to vector<4x256xf32>
    %725 = vector.broadcast %723 : vector<1x256xf32> to vector<4x256xf32>
    %726 = arith.mulf %724, %725 : vector<4x256xf32>
    %727 = arith.addf %721, %726 : vector<4x256xf32>
    %c4_132 = arith.constant 4 : index
    %c0_133 = arith.constant 0 : index
    %c0_134 = arith.constant 0 : index
    %728 = vector.load %arg5[%c4_132, %c0_133, %c0_134] : memref<9x4x4xf32, #tpu.memory_space<vmem>>, vector<1x4x4xf32>
    %729 = vector.shape_cast %728 : vector<1x4x4xf32> to vector<4x4xf32>
    %730 = vector.extract_strided_slice %729 {offsets = [0, 0], sizes = [4, 1], strides = [1, 1]} : vector<4x4xf32> to vector<4x1xf32>
    %731 = vector.extract_strided_slice %610 {offsets = [0, 0], sizes = [1, 256], strides = [1, 1]} : vector<4x256xf32> to vector<1x256xf32>
    %732 = vector.broadcast %730 : vector<4x1xf32> to vector<4x256xf32>
    %733 = vector.broadcast %731 : vector<1x256xf32> to vector<4x256xf32>
    %734 = arith.mulf %732, %733 : vector<4x256xf32>
    %735 = arith.addf %727, %734 : vector<4x256xf32>
    %736 = vector.extract_strided_slice %729 {offsets = [0, 1], sizes = [4, 1], strides = [1, 1]} : vector<4x4xf32> to vector<4x1xf32>
    %737 = vector.extract_strided_slice %610 {offsets = [1, 0], sizes = [1, 256], strides = [1, 1]} : vector<4x256xf32> to vector<1x256xf32>
    %738 = vector.broadcast %736 : vector<4x1xf32> to vector<4x256xf32>
    %739 = vector.broadcast %737 : vector<1x256xf32> to vector<4x256xf32>
    %740 = arith.mulf %738, %739 : vector<4x256xf32>
    %741 = arith.addf %735, %740 : vector<4x256xf32>
    %742 = vector.extract_strided_slice %729 {offsets = [0, 2], sizes = [4, 1], strides = [1, 1]} : vector<4x4xf32> to vector<4x1xf32>
    %743 = vector.extract_strided_slice %610 {offsets = [2, 0], sizes = [1, 256], strides = [1, 1]} : vector<4x256xf32> to vector<1x256xf32>
    %744 = vector.broadcast %742 : vector<4x1xf32> to vector<4x256xf32>
    %745 = vector.broadcast %743 : vector<1x256xf32> to vector<4x256xf32>
    %746 = arith.mulf %744, %745 : vector<4x256xf32>
    %747 = arith.addf %741, %746 : vector<4x256xf32>
    %748 = vector.extract_strided_slice %729 {offsets = [0, 3], sizes = [4, 1], strides = [1, 1]} : vector<4x4xf32> to vector<4x1xf32>
    %749 = vector.extract_strided_slice %610 {offsets = [3, 0], sizes = [1, 256], strides = [1, 1]} : vector<4x256xf32> to vector<1x256xf32>
    %750 = vector.broadcast %748 : vector<4x1xf32> to vector<4x256xf32>
    %751 = vector.broadcast %749 : vector<1x256xf32> to vector<4x256xf32>
    %752 = arith.mulf %750, %751 : vector<4x256xf32>
    %753 = arith.addf %747, %752 : vector<4x256xf32>
    %c255_i32_135 = arith.constant 255 : i32
    %754 = tpu.dynamic_rotate %610 by %c255_i32_135 dim 1 : vector<4x256xf32>, i32 -> vector<4x256xf32>
    %755 = vector.broadcast %11 : vector<1x256xf32> to vector<4x256xf32>
    %756 = arith.mulf %754, %755 : vector<4x256xf32>
    %c5_136 = arith.constant 5 : index
    %c0_137 = arith.constant 0 : index
    %c0_138 = arith.constant 0 : index
    %757 = vector.load %arg5[%c5_136, %c0_137, %c0_138] : memref<9x4x4xf32, #tpu.memory_space<vmem>>, vector<1x4x4xf32>
    %758 = vector.shape_cast %757 : vector<1x4x4xf32> to vector<4x4xf32>
    %759 = vector.extract_strided_slice %758 {offsets = [0, 0], sizes = [4, 1], strides = [1, 1]} : vector<4x4xf32> to vector<4x1xf32>
    %760 = vector.extract_strided_slice %756 {offsets = [0, 0], sizes = [1, 256], strides = [1, 1]} : vector<4x256xf32> to vector<1x256xf32>
    %761 = vector.broadcast %759 : vector<4x1xf32> to vector<4x256xf32>
    %762 = vector.broadcast %760 : vector<1x256xf32> to vector<4x256xf32>
    %763 = arith.mulf %761, %762 : vector<4x256xf32>
    %764 = arith.addf %753, %763 : vector<4x256xf32>
    %765 = vector.extract_strided_slice %758 {offsets = [0, 1], sizes = [4, 1], strides = [1, 1]} : vector<4x4xf32> to vector<4x1xf32>
    %766 = vector.extract_strided_slice %756 {offsets = [1, 0], sizes = [1, 256], strides = [1, 1]} : vector<4x256xf32> to vector<1x256xf32>
    %767 = vector.broadcast %765 : vector<4x1xf32> to vector<4x256xf32>
    %768 = vector.broadcast %766 : vector<1x256xf32> to vector<4x256xf32>
    %769 = arith.mulf %767, %768 : vector<4x256xf32>
    %770 = arith.addf %764, %769 : vector<4x256xf32>
    %771 = vector.extract_strided_slice %758 {offsets = [0, 2], sizes = [4, 1], strides = [1, 1]} : vector<4x4xf32> to vector<4x1xf32>
    %772 = vector.extract_strided_slice %756 {offsets = [2, 0], sizes = [1, 256], strides = [1, 1]} : vector<4x256xf32> to vector<1x256xf32>
    %773 = vector.broadcast %771 : vector<4x1xf32> to vector<4x256xf32>
    %774 = vector.broadcast %772 : vector<1x256xf32> to vector<4x256xf32>
    %775 = arith.mulf %773, %774 : vector<4x256xf32>
    %776 = arith.addf %770, %775 : vector<4x256xf32>
    %777 = vector.extract_strided_slice %758 {offsets = [0, 3], sizes = [4, 1], strides = [1, 1]} : vector<4x4xf32> to vector<4x1xf32>
    %778 = vector.extract_strided_slice %756 {offsets = [3, 0], sizes = [1, 256], strides = [1, 1]} : vector<4x256xf32> to vector<1x256xf32>
    %779 = vector.broadcast %777 : vector<4x1xf32> to vector<4x256xf32>
    %780 = vector.broadcast %778 : vector<1x256xf32> to vector<4x256xf32>
    %781 = arith.mulf %779, %780 : vector<4x256xf32>
    %782 = arith.addf %776, %781 : vector<4x256xf32>
    %c241_i32_139 = arith.constant 241 : i32
    %783 = tpu.dynamic_rotate %610 by %c241_i32_139 dim 1 : vector<4x256xf32>, i32 -> vector<4x256xf32>
    %784 = vector.broadcast %13 : vector<1x256xf32> to vector<4x256xf32>
    %785 = arith.mulf %783, %784 : vector<4x256xf32>
    %c6_140 = arith.constant 6 : index
    %c0_141 = arith.constant 0 : index
    %c0_142 = arith.constant 0 : index
    %786 = vector.load %arg5[%c6_140, %c0_141, %c0_142] : memref<9x4x4xf32, #tpu.memory_space<vmem>>, vector<1x4x4xf32>
    %787 = vector.shape_cast %786 : vector<1x4x4xf32> to vector<4x4xf32>
    %788 = vector.extract_strided_slice %787 {offsets = [0, 0], sizes = [4, 1], strides = [1, 1]} : vector<4x4xf32> to vector<4x1xf32>
    %789 = vector.extract_strided_slice %785 {offsets = [0, 0], sizes = [1, 256], strides = [1, 1]} : vector<4x256xf32> to vector<1x256xf32>
    %790 = vector.broadcast %788 : vector<4x1xf32> to vector<4x256xf32>
    %791 = vector.broadcast %789 : vector<1x256xf32> to vector<4x256xf32>
    %792 = arith.mulf %790, %791 : vector<4x256xf32>
    %793 = arith.addf %782, %792 : vector<4x256xf32>
    %794 = vector.extract_strided_slice %787 {offsets = [0, 1], sizes = [4, 1], strides = [1, 1]} : vector<4x4xf32> to vector<4x1xf32>
    %795 = vector.extract_strided_slice %785 {offsets = [1, 0], sizes = [1, 256], strides = [1, 1]} : vector<4x256xf32> to vector<1x256xf32>
    %796 = vector.broadcast %794 : vector<4x1xf32> to vector<4x256xf32>
    %797 = vector.broadcast %795 : vector<1x256xf32> to vector<4x256xf32>
    %798 = arith.mulf %796, %797 : vector<4x256xf32>
    %799 = arith.addf %793, %798 : vector<4x256xf32>
    %800 = vector.extract_strided_slice %787 {offsets = [0, 2], sizes = [4, 1], strides = [1, 1]} : vector<4x4xf32> to vector<4x1xf32>
    %801 = vector.extract_strided_slice %785 {offsets = [2, 0], sizes = [1, 256], strides = [1, 1]} : vector<4x256xf32> to vector<1x256xf32>
    %802 = vector.broadcast %800 : vector<4x1xf32> to vector<4x256xf32>
    %803 = vector.broadcast %801 : vector<1x256xf32> to vector<4x256xf32>
    %804 = arith.mulf %802, %803 : vector<4x256xf32>
    %805 = arith.addf %799, %804 : vector<4x256xf32>
    %806 = vector.extract_strided_slice %787 {offsets = [0, 3], sizes = [4, 1], strides = [1, 1]} : vector<4x4xf32> to vector<4x1xf32>
    %807 = vector.extract_strided_slice %785 {offsets = [3, 0], sizes = [1, 256], strides = [1, 1]} : vector<4x256xf32> to vector<1x256xf32>
    %808 = vector.broadcast %806 : vector<4x1xf32> to vector<4x256xf32>
    %809 = vector.broadcast %807 : vector<1x256xf32> to vector<4x256xf32>
    %810 = arith.mulf %808, %809 : vector<4x256xf32>
    %811 = arith.addf %805, %810 : vector<4x256xf32>
    %c240_i32_143 = arith.constant 240 : i32
    %812 = tpu.dynamic_rotate %610 by %c240_i32_143 dim 1 : vector<4x256xf32>, i32 -> vector<4x256xf32>
    %813 = vector.broadcast %15 : vector<1x256xf32> to vector<4x256xf32>
    %814 = arith.mulf %812, %813 : vector<4x256xf32>
    %c7_144 = arith.constant 7 : index
    %c0_145 = arith.constant 0 : index
    %c0_146 = arith.constant 0 : index
    %815 = vector.load %arg5[%c7_144, %c0_145, %c0_146] : memref<9x4x4xf32, #tpu.memory_space<vmem>>, vector<1x4x4xf32>
    %816 = vector.shape_cast %815 : vector<1x4x4xf32> to vector<4x4xf32>
    %817 = vector.extract_strided_slice %816 {offsets = [0, 0], sizes = [4, 1], strides = [1, 1]} : vector<4x4xf32> to vector<4x1xf32>
    %818 = vector.extract_strided_slice %814 {offsets = [0, 0], sizes = [1, 256], strides = [1, 1]} : vector<4x256xf32> to vector<1x256xf32>
    %819 = vector.broadcast %817 : vector<4x1xf32> to vector<4x256xf32>
    %820 = vector.broadcast %818 : vector<1x256xf32> to vector<4x256xf32>
    %821 = arith.mulf %819, %820 : vector<4x256xf32>
    %822 = arith.addf %811, %821 : vector<4x256xf32>
    %823 = vector.extract_strided_slice %816 {offsets = [0, 1], sizes = [4, 1], strides = [1, 1]} : vector<4x4xf32> to vector<4x1xf32>
    %824 = vector.extract_strided_slice %814 {offsets = [1, 0], sizes = [1, 256], strides = [1, 1]} : vector<4x256xf32> to vector<1x256xf32>
    %825 = vector.broadcast %823 : vector<4x1xf32> to vector<4x256xf32>
    %826 = vector.broadcast %824 : vector<1x256xf32> to vector<4x256xf32>
    %827 = arith.mulf %825, %826 : vector<4x256xf32>
    %828 = arith.addf %822, %827 : vector<4x256xf32>
    %829 = vector.extract_strided_slice %816 {offsets = [0, 2], sizes = [4, 1], strides = [1, 1]} : vector<4x4xf32> to vector<4x1xf32>
    %830 = vector.extract_strided_slice %814 {offsets = [2, 0], sizes = [1, 256], strides = [1, 1]} : vector<4x256xf32> to vector<1x256xf32>
    %831 = vector.broadcast %829 : vector<4x1xf32> to vector<4x256xf32>
    %832 = vector.broadcast %830 : vector<1x256xf32> to vector<4x256xf32>
    %833 = arith.mulf %831, %832 : vector<4x256xf32>
    %834 = arith.addf %828, %833 : vector<4x256xf32>
    %835 = vector.extract_strided_slice %816 {offsets = [0, 3], sizes = [4, 1], strides = [1, 1]} : vector<4x4xf32> to vector<4x1xf32>
    %836 = vector.extract_strided_slice %814 {offsets = [3, 0], sizes = [1, 256], strides = [1, 1]} : vector<4x256xf32> to vector<1x256xf32>
    %837 = vector.broadcast %835 : vector<4x1xf32> to vector<4x256xf32>
    %838 = vector.broadcast %836 : vector<1x256xf32> to vector<4x256xf32>
    %839 = arith.mulf %837, %838 : vector<4x256xf32>
    %840 = arith.addf %834, %839 : vector<4x256xf32>
    %c239_i32_147 = arith.constant 239 : i32
    %841 = tpu.dynamic_rotate %610 by %c239_i32_147 dim 1 : vector<4x256xf32>, i32 -> vector<4x256xf32>
    %842 = vector.broadcast %17 : vector<1x256xf32> to vector<4x256xf32>
    %843 = arith.mulf %841, %842 : vector<4x256xf32>
    %c8_148 = arith.constant 8 : index
    %c0_149 = arith.constant 0 : index
    %c0_150 = arith.constant 0 : index
    %844 = vector.load %arg5[%c8_148, %c0_149, %c0_150] : memref<9x4x4xf32, #tpu.memory_space<vmem>>, vector<1x4x4xf32>
    %845 = vector.shape_cast %844 : vector<1x4x4xf32> to vector<4x4xf32>
    %846 = vector.extract_strided_slice %845 {offsets = [0, 0], sizes = [4, 1], strides = [1, 1]} : vector<4x4xf32> to vector<4x1xf32>
    %847 = vector.extract_strided_slice %843 {offsets = [0, 0], sizes = [1, 256], strides = [1, 1]} : vector<4x256xf32> to vector<1x256xf32>
    %848 = vector.broadcast %846 : vector<4x1xf32> to vector<4x256xf32>
    %849 = vector.broadcast %847 : vector<1x256xf32> to vector<4x256xf32>
    %850 = arith.mulf %848, %849 : vector<4x256xf32>
    %851 = arith.addf %840, %850 : vector<4x256xf32>
    %852 = vector.extract_strided_slice %845 {offsets = [0, 1], sizes = [4, 1], strides = [1, 1]} : vector<4x4xf32> to vector<4x1xf32>
    %853 = vector.extract_strided_slice %843 {offsets = [1, 0], sizes = [1, 256], strides = [1, 1]} : vector<4x256xf32> to vector<1x256xf32>
    %854 = vector.broadcast %852 : vector<4x1xf32> to vector<4x256xf32>
    %855 = vector.broadcast %853 : vector<1x256xf32> to vector<4x256xf32>
    %856 = arith.mulf %854, %855 : vector<4x256xf32>
    %857 = arith.addf %851, %856 : vector<4x256xf32>
    %858 = vector.extract_strided_slice %845 {offsets = [0, 2], sizes = [4, 1], strides = [1, 1]} : vector<4x4xf32> to vector<4x1xf32>
    %859 = vector.extract_strided_slice %843 {offsets = [2, 0], sizes = [1, 256], strides = [1, 1]} : vector<4x256xf32> to vector<1x256xf32>
    %860 = vector.broadcast %858 : vector<4x1xf32> to vector<4x256xf32>
    %861 = vector.broadcast %859 : vector<1x256xf32> to vector<4x256xf32>
    %862 = arith.mulf %860, %861 : vector<4x256xf32>
    %863 = arith.addf %857, %862 : vector<4x256xf32>
    %864 = vector.extract_strided_slice %845 {offsets = [0, 3], sizes = [4, 1], strides = [1, 1]} : vector<4x4xf32> to vector<4x1xf32>
    %865 = vector.extract_strided_slice %843 {offsets = [3, 0], sizes = [1, 256], strides = [1, 1]} : vector<4x256xf32> to vector<1x256xf32>
    %866 = vector.broadcast %864 : vector<4x1xf32> to vector<4x256xf32>
    %867 = vector.broadcast %865 : vector<1x256xf32> to vector<4x256xf32>
    %868 = arith.mulf %866, %867 : vector<4x256xf32>
    %869 = arith.addf %863, %868 : vector<4x256xf32>
    %c0_151 = arith.constant 0 : index
    %c0_152 = arith.constant 0 : index
    %870 = vector.load %arg6[%c0_151, %c0_152] : memref<4x1xf32, #tpu.memory_space<vmem>>, vector<4x1xf32>
    %871 = vector.broadcast %870 : vector<4x1xf32> to vector<4x256xf32>
    %872 = arith.addf %869, %871 : vector<4x256xf32>
    %cst_153 = arith.constant 0.000000e+00 : f32
    %873 = vector.broadcast %cst_153 : f32 to vector<4x256xf32>
    %874 = arith.subf %873, %872 : vector<4x256xf32>
    %875 = math.exp %874 : vector<4x256xf32>
    %cst_154 = arith.constant 1.000000e+00 : f32
    %876 = vector.broadcast %cst_154 : f32 to vector<4x256xf32>
    %877 = arith.addf %876, %875 : vector<4x256xf32>
    %cst_155 = arith.constant 1.000000e+00 : f32
    %878 = vector.broadcast %cst_155 : f32 to vector<4x256xf32>
    %879 = arith.divf %878, %877 : vector<4x256xf32>
    %cst_156 = arith.constant 1.000000e+00 : f32
    %880 = vector.broadcast %cst_156 : f32 to vector<4x256xf32>
    %881 = arith.subf %880, %879 : vector<4x256xf32>
    %882 = vector.broadcast %44 : vector<4x1xf32> to vector<4x256xf32>
    %883 = arith.mulf %882, %881 : vector<4x256xf32>
    %884 = arith.mulf %1, %879 : vector<4x256xf32>
    %885 = arith.addf %883, %884 : vector<4x256xf32>
    %c0_157 = arith.constant 0 : index
    %c0_158 = arith.constant 0 : index
    %c0_159 = arith.constant 0 : index
    %886 = vector.load %arg15[%c0_157, %c0_158, %c0_159] : memref<1x4x256xf32, #tpu.memory_space<vmem>>, vector<1x4x256xf32>
    %887 = vector.shape_cast %886 : vector<1x4x256xf32> to vector<4x256xf32>
    %888 = vector.shape_cast %885 : vector<4x256xf32> to vector<1x4x256xf32>
    tpu.vector_store %arg15[%c0_157, %c0_158, %c0_159], %888 {strides = array<i32>} : memref<1x4x256xf32, #tpu.memory_space<vmem>>, vector<1x4x256xf32>,
    return
  }
  func.func @transform_0(%arg0: i32) -> (i32, i32, i32) {
    %c0_i32 = arith.constant 0 : i32
    %c0_i32_0 = arith.constant 0 : i32
    %c0_i32_1 = arith.constant 0 : i32
    return %arg0, %c0_i32, %c0_i32_0 : i32, i32, i32
  }
  func.func @transform_1(%arg0: i32) -> (i32, i32, i32) {
    %c0_i32 = arith.constant 0 : i32
    %c0_i32_0 = arith.constant 0 : i32
    %c0_i32_1 = arith.constant 0 : i32
    %c0_i32_2 = arith.constant 0 : i32
    return %c0_i32, %c0_i32_0, %c0_i32_1 : i32, i32, i32
  }
  func.func @transform_2(%arg0: i32) -> (i32, i32, i32) {
    %c0_i32 = arith.constant 0 : i32
    %c0_i32_0 = arith.constant 0 : i32
    %c0_i32_1 = arith.constant 0 : i32
    %c0_i32_2 = arith.constant 0 : i32
    return %c0_i32, %c0_i32_0, %c0_i32_1 : i32, i32, i32
  }
  func.func @transform_3(%arg0: i32) -> (i32, i32, i32) {
    %c0_i32 = arith.constant 0 : i32
    %c0_i32_0 = arith.constant 0 : i32
    %c0_i32_1 = arith.constant 0 : i32
    %c0_i32_2 = arith.constant 0 : i32
    return %c0_i32, %c0_i32_0, %c0_i32_1 : i32, i32, i32
  }
  func.func @transform_4(%arg0: i32) -> (i32, i32, i32) {
    %c0_i32 = arith.constant 0 : i32
    %c0_i32_0 = arith.constant 0 : i32
    %c0_i32_1 = arith.constant 0 : i32
    %c0_i32_2 = arith.constant 0 : i32
    return %c0_i32, %c0_i32_0, %c0_i32_1 : i32, i32, i32
  }
  func.func @transform_5(%arg0: i32) -> (i32, i32) {
    %c0_i32 = arith.constant 0 : i32
    %c0_i32_0 = arith.constant 0 : i32
    %c0_i32_1 = arith.constant 0 : i32
    return %c0_i32, %c0_i32_0 : i32, i32
  }
  func.func @transform_6(%arg0: i32) -> (i32, i32) {
    %c0_i32 = arith.constant 0 : i32
    %c0_i32_0 = arith.constant 0 : i32
    %c0_i32_1 = arith.constant 0 : i32
    return %c0_i32, %c0_i32_0 : i32, i32
  }
  func.func @transform_7(%arg0: i32) -> (i32, i32) {
    %c0_i32 = arith.constant 0 : i32
    %c0_i32_0 = arith.constant 0 : i32
    %c0_i32_1 = arith.constant 0 : i32
    return %c0_i32, %c0_i32_0 : i32, i32
  }
  func.func @transform_8(%arg0: i32) -> (i32, i32) {
    %c0_i32 = arith.constant 0 : i32
    %c0_i32_0 = arith.constant 0 : i32
    %c0_i32_1 = arith.constant 0 : i32
    return %c0_i32, %c0_i32_0 : i32, i32
  }
  func.func @transform_9(%arg0: i32) -> (i32, i32) {
    %c0_i32 = arith.constant 0 : i32
    %c0_i32_0 = arith.constant 0 : i32
    %c0_i32_1 = arith.constant 0 : i32
    return %c0_i32, %c0_i32_0 : i32, i32
  }
  func.func @transform_10(%arg0: i32) -> (i32, i32) {
    %c0_i32 = arith.constant 0 : i32
    %c0_i32_0 = arith.constant 0 : i32
    %c0_i32_1 = arith.constant 0 : i32
    return %c0_i32, %c0_i32_0 : i32, i32
  }
  func.func @transform_11(%arg0: i32) -> (i32, i32) {
    %c0_i32 = arith.constant 0 : i32
    %c0_i32_0 = arith.constant 0 : i32
    %c0_i32_1 = arith.constant 0 : i32
    return %c0_i32, %c0_i32_0 : i32, i32
  }
  func.func @transform_12(%arg0: i32) -> (i32, i32) {
    %c0_i32 = arith.constant 0 : i32
    %c0_i32_0 = arith.constant 0 : i32
    %c0_i32_1 = arith.constant 0 : i32
    return %c0_i32, %c0_i32_0 : i32, i32
  }
  func.func @transform_13(%arg0: i32) -> (i32, i32) {
    %c0_i32 = arith.constant 0 : i32
    %c0_i32_0 = arith.constant 0 : i32
    %c0_i32_1 = arith.constant 0 : i32
    return %c0_i32, %c0_i32_0 : i32, i32
  }
  func.func @transform_14(%arg0: i32) -> (i32, i32, i32) {
    %c0_i32 = arith.constant 0 : i32
    %c0_i32_0 = arith.constant 0 : i32
    %c0_i32_1 = arith.constant 0 : i32
    return %arg0, %c0_i32, %c0_i32_0 : i32, i32, i32
  }
}

</mosaic_0001>

<llo_original>
// kernel: tpu_custom_call.1
$region0: #{tpu_custom_call.1}
  #allocation0 [shape = 'u32[]', space=smem, size = 0x4, offset = 0x4, fixed_abs, tag = 'smem constant byte address 0x4 - core index']
  #allocation1 [shape = 'u32[144,128]{1,0:T(1,128)}', space=vmem, size = 0x12000, scoped, tag = 'internal scratch']
  %s0 = inlined_call_operand.vmem [shape: f32[2,4,256], index: 0, kind: input, shape index: {}]
  %s1 = inlined_call_operand.vmem [shape: f32[9,1,256], index: 1, kind: input, shape index: {}]
  %s2 = inlined_call_operand.vmem [shape: f32[9,4,4], index: 2, kind: input, shape index: {}]
  %s3 = inlined_call_operand.vmem [shape: f32[9,4,4], index: 3, kind: input, shape index: {}]
  %s4 = inlined_call_operand.vmem [shape: f32[9,4,4], index: 4, kind: input, shape index: {}]
  %s5 = inlined_call_operand.vmem [shape: f32[4,1], index: 5, kind: input, shape index: {}]
  %s6 = inlined_call_operand.vmem [shape: f32[4,1], index: 6, kind: input, shape index: {}]
  %s7 = inlined_call_operand.vmem [shape: f32[4,1], index: 7, kind: input, shape index: {}]
  %s8 = inlined_call_operand.vmem [shape: f32[4,1], index: 8, kind: input, shape index: {}]
  %s9 = inlined_call_operand.vmem [shape: f32[4,1], index: 9, kind: input, shape index: {}]
  %s10 = inlined_call_operand.vmem [shape: f32[4,4], index: 10, kind: input, shape index: {}]
  %s11 = inlined_call_operand.vmem [shape: f32[1,4], index: 11, kind: input, shape index: {}]
  %s12 = inlined_call_operand.vmem [shape: f32[4,4], index: 12, kind: input, shape index: {}]
  %s13 = inlined_call_operand.vmem [shape: f32[4,1], index: 13, kind: input, shape index: {}]
  %s14 = inlined_call_operand.hbm [shape: f32[2,4,256], index: 14, kind: output, shape index: {}]
  %s15 = sld [smem:[#allocation0]]
  $region89: #{tpu_custom_call.1} parent=0
    _
  %s17 = ssub.s32 1, %s15
  %s18 = scalar_select 0, %s17, %s15
  $region1: #{tpu_custom_call.1} parent=0
    #allocation2 [shape = 'u8[8192]{0}', space=vmem, size = 0x2000, scoped, tag = 'output window, operand 0']
    #allocation3 [shape = 's32[2]{0}', space=sflag, size = 0x8, scoped, tag = 'scoped memory for tpu_custom_call.1']
    %19 = vsyncpa [#allocation3], 0
    %s20 = scalar_lea.sflag [#allocation3], 1
    %21 = vsyncpa %s20, 0
    loop: start=0, step=1, limit=4
    $region2: #{tpu_custom_call.1} parent=1 // loop_pre_header
      _
    $region3: #{tpu_custom_call.1} parent=1 // loop_header
      %s23 = sphi 0, %s27
      %p24 = scmp.ge.s32.totalorder %s23, 4
      %s33 = sphi 0, %s35
      %s36 = sphi 0, %s33
      %s37 = sphi 0, %s36
      %s53 = sphi 0, %s37
      %s57 = sphi 0, %s57
      %s59 = sphi 0, %s57
      %s60 = sphi 0, %s59
      %s74 = sphi 0, %s60
      %s78 = sphi 0, %s78
      %s80 = sphi 0, %s78
      %s81 = sphi 0, %s80
      %s95 = sphi 0, %s81
      %s99 = sphi 0, %s99
      %s101 = sphi 0, %s99
      %s102 = sphi 0, %s101
      %s116 = sphi 0, %s102
      %s120 = sphi 0, %s120
      %s122 = sphi 0, %s120
      %s123 = sphi 0, %s122
      %s137 = sphi 0, %s123
      %s141 = sphi 0, %s141
      %s143 = sphi 0, %s141
      %s144 = sphi 0, %s143
      %s158 = sphi 0, %s144
      %s162 = sphi 0, %s162
      %s164 = sphi 0, %s162
      %s165 = sphi 0, %s164
      %s179 = sphi 0, %s165
      %s183 = sphi 0, %s183
      %s185 = sphi 0, %s183
      %s186 = sphi 0, %s185
      %s200 = sphi 0, %s186
      %s204 = sphi 0, %s204
      %s206 = sphi 0, %s204
      %s207 = sphi 0, %s206
      %s221 = sphi 0, %s207
      %s225 = sphi 0, %s225
      %s227 = sphi 0, %s225
      %s228 = sphi 0, %s227
      %s242 = sphi 0, %s228
      %s246 = sphi 0, %s246
      %s248 = sphi 0, %s246
      %s249 = sphi 0, %s248
      %s263 = sphi 0, %s249
      %s267 = sphi 0, %s267
      %s269 = sphi 0, %s267
      %s270 = sphi 0, %s269
      %s284 = sphi 0, %s270
      %s288 = sphi 0, %s288
      %s290 = sphi 0, %s288
      %s291 = sphi 0, %s290
      %s305 = sphi 0, %s291
      %s309 = sphi 0, %s309
      %s311 = sphi 0, %s309
      %s312 = sphi 0, %s311
      %s326 = sphi 0, %s312
      %s332 = sphi 0, %s334
      %s335 = sphi 0, %s332
      %s336 = sphi 0, %s335
      %s352 = sphi 0, %s336
    $region4: #{tpu_custom_call.1} parent=1 // loop_header_branch
      %26 = sbr.rel (%p24) target = $region8
    $region5: #{tpu_custom_call.1} parent=1 // loop_body
      %s28 = ssub.s32 %s23, 1
      %s29 = ssub.s32 %s23, 2
      %s30 = sadd.s32 %s23, 1
      %s31 = ssub.s32 %s23, %s30
      %p32 = scmp.eq.s32.totalorder %s31, 0
      %s34 = sadd.s32 %s33, 1
      %s35 = scalar_select %p32, %s33, %s34
      %p38 = pneg %p32
      %p39 = scmp.eq.s32.totalorder %s23, 1
      %p40 = por %p38, %p39
      %p41 = scmp.ne.s32.totalorder %s33, %s36
      %p42 = scmp.eq.s32.totalorder %s23, 0
      %p43 = por %p41, %p42
      %p44 = scmp.ne.s32.totalorder %s33, %s36
      %p45 = scmp.eq.s32.totalorder %s28, 1
      %p46 = por %p44, %p45
      %p47 = scmp.ne.s32.totalorder %s36, %s37
      %p48 = scmp.eq.s32.totalorder %s28, 0
      %p49 = por %p47, %p48
      %p50 = scmp.ne.s32.totalorder %s36, %s37
      %p51 = scmp.eq.s32.totalorder %s29, 1
      %p52 = por %p50, %p51
      %p54 = scmp.ne.s32.totalorder %s37, %s53
      %p55 = scmp.eq.s32.totalorder %s29, 0
      %p56 = por %p54, %p55
      %s58 = sadd.s32 %s57, 1
      %p61 = scmp.eq.s32.totalorder %s23, 1
      %p62 = scmp.ne.s32.totalorder %s57, %s59
      %p63 = scmp.eq.s32.totalorder %s23, 0
      %p64 = por %p62, %p63
      %p65 = scmp.ne.s32.totalorder %s57, %s59
      %p66 = scmp.eq.s32.totalorder %s28, 1
      %p67 = por %p65, %p66
      %p68 = scmp.ne.s32.totalorder %s59, %s60
      %p69 = scmp.eq.s32.totalorder %s28, 0
      %p70 = por %p68, %p69
      %p71 = scmp.ne.s32.totalorder %s59, %s60
      %p72 = scmp.eq.s32.totalorder %s29, 1
      %p73 = por %p71, %p72
      %p75 = scmp.ne.s32.totalorder %s60, %s74
      %p76 = scmp.eq.s32.totalorder %s29, 0
      %p77 = por %p75, %p76
      %s79 = sadd.s32 %s78, 1
      %p82 = scmp.eq.s32.totalorder %s23, 1
      %p83 = scmp.ne.s32.totalorder %s78, %s80
      %p84 = scmp.eq.s32.totalorder %s23, 0
      %p85 = por %p83, %p84
      %p86 = scmp.ne.s32.totalorder %s78, %s80
      %p87 = scmp.eq.s32.totalorder %s28, 1
      %p88 = por %p86, %p87
      %p89 = scmp.ne.s32.totalorder %s80, %s81
      %p90 = scmp.eq.s32.totalorder %s28, 0
      %p91 = por %p89, %p90
      %p92 = scmp.ne.s32.totalorder %s80, %s81
      %p93 = scmp.eq.s32.totalorder %s29, 1
      %p94 = por %p92, %p93
      %p96 = scmp.ne.s32.totalorder %s81, %s95
      %p97 = scmp.eq.s32.totalorder %s29, 0
      %p98 = por %p96, %p97
      %s100 = sadd.s32 %s99, 1
      %p103 = scmp.eq.s32.totalorder %s23, 1
      %p104 = scmp.ne.s32.totalorder %s99, %s101
      %p105 = scmp.eq.s32.totalorder %s23, 0
      %p106 = por %p104, %p105
      %p107 = scmp.ne.s32.totalorder %s99, %s101
      %p108 = scmp.eq.s32.totalorder %s28, 1
      %p109 = por %p107, %p108
      %p110 = scmp.ne.s32.totalorder %s101, %s102
      %p111 = scmp.eq.s32.totalorder %s28, 0
      %p112 = por %p110, %p111
      %p113 = scmp.ne.s32.totalorder %s101, %s102
      %p114 = scmp.eq.s32.totalorder %s29, 1
      %p115 = por %p113, %p114
      %p117 = scmp.ne.s32.totalorder %s102, %s116
      %p118 = scmp.eq.s32.totalorder %s29, 0
      %p119 = por %p117, %p118
      %s121 = sadd.s32 %s120, 1
      %p124 = scmp.eq.s32.totalorder %s23, 1
      %p125 = scmp.ne.s32.totalorder %s120, %s122
      %p126 = scmp.eq.s32.totalorder %s23, 0
      %p127 = por %p125, %p126
      %p128 = scmp.ne.s32.totalorder %s120, %s122
      %p129 = scmp.eq.s32.totalorder %s28, 1
      %p130 = por %p128, %p129
      %p131 = scmp.ne.s32.totalorder %s122, %s123
      %p132 = scmp.eq.s32.totalorder %s28, 0
      %p133 = por %p131, %p132
      %p134 = scmp.ne.s32.totalorder %s122, %s123
      %p135 = scmp.eq.s32.totalorder %s29, 1
      %p136 = por %p134, %p135
      %p138 = scmp.ne.s32.totalorder %s123, %s137
      %p139 = scmp.eq.s32.totalorder %s29, 0
      %p140 = por %p138, %p139
      %s142 = sadd.s32 %s141, 1
      %p145 = scmp.eq.s32.totalorder %s23, 1
      %p146 = scmp.ne.s32.totalorder %s141, %s143
      %p147 = scmp.eq.s32.totalorder %s23, 0
      %p148 = por %p146, %p147
      %p149 = scmp.ne.s32.totalorder %s141, %s143
      %p150 = scmp.eq.s32.totalorder %s28, 1
      %p151 = por %p149, %p150
      %p152 = scmp.ne.s32.totalorder %s143, %s144
      %p153 = scmp.eq.s32.totalorder %s28, 0
      %p154 = por %p152, %p153
      %p155 = scmp.ne.s32.totalorder %s143, %s144
      %p156 = scmp.eq.s32.totalorder %s29, 1
      %p157 = por %p155, %p156
      %p159 = scmp.ne.s32.totalorder %s144, %s158
      %p160 = scmp.eq.s32.totalorder %s29, 0
      %p161 = por %p159, %p160
      %s163 = sadd.s32 %s162, 1
      %p166 = scmp.eq.s32.totalorder %s23, 1
      %p167 = scmp.ne.s32.totalorder %s162, %s164
      %p168 = scmp.eq.s32.totalorder %s23, 0
      %p169 = por %p167, %p168
      %p170 = scmp.ne.s32.totalorder %s162, %s164
      %p171 = scmp.eq.s32.totalorder %s28, 1
      %p172 = por %p170, %p171
      %p173 = scmp.ne.s32.totalorder %s164, %s165
      %p174 = scmp.eq.s32.totalorder %s28, 0
      %p175 = por %p173, %p174
      %p176 = scmp.ne.s32.totalorder %s164, %s165
      %p177 = scmp.eq.s32.totalorder %s29, 1
      %p178 = por %p176, %p177
      %p180 = scmp.ne.s32.totalorder %s165, %s179
      %p181 = scmp.eq.s32.totalorder %s29, 0
      %p182 = por %p180, %p181
      %s184 = sadd.s32 %s183, 1
      %p187 = scmp.eq.s32.totalorder %s23, 1
      %p188 = scmp.ne.s32.totalorder %s183, %s185
      %p189 = scmp.eq.s32.totalorder %s23, 0
      %p190 = por %p188, %p189
      %p191 = scmp.ne.s32.totalorder %s183, %s185
      %p192 = scmp.eq.s32.totalorder %s28, 1
      %p193 = por %p191, %p192
      %p194 = scmp.ne.s32.totalorder %s185, %s186
      %p195 = scmp.eq.s32.totalorder %s28, 0
      %p196 = por %p194, %p195
      %p197 = scmp.ne.s32.totalorder %s185, %s186
      %p198 = scmp.eq.s32.totalorder %s29, 1
      %p199 = por %p197, %p198
      %p201 = scmp.ne.s32.totalorder %s186, %s200
      %p202 = scmp.eq.s32.totalorder %s29, 0
      %p203 = por %p201, %p202
      %s205 = sadd.s32 %s204, 1
      %p208 = scmp.eq.s32.totalorder %s23, 1
      %p209 = scmp.ne.s32.totalorder %s204, %s206
      %p210 = scmp.eq.s32.totalorder %s23, 0
      %p211 = por %p209, %p210
      %p212 = scmp.ne.s32.totalorder %s204, %s206
      %p213 = scmp.eq.s32.totalorder %s28, 1
      %p214 = por %p212, %p213
      %p215 = scmp.ne.s32.totalorder %s206, %s207
      %p216 = scmp.eq.s32.totalorder %s28, 0
      %p217 = por %p215, %p216
      %p218 = scmp.ne.s32.totalorder %s206, %s207
      %p219 = scmp.eq.s32.totalorder %s29, 1
      %p220 = por %p218, %p219
      %p222 = scmp.ne.s32.totalorder %s207, %s221
      %p223 = scmp.eq.s32.totalorder %s29, 0
      %p224 = por %p222, %p223
      %s226 = sadd.s32 %s225, 1
      %p229 = scmp.eq.s32.totalorder %s23, 1
      %p230 = scmp.ne.s32.totalorder %s225, %s227
      %p231 = scmp.eq.s32.totalorder %s23, 0
      %p232 = por %p230, %p231
      %p233 = scmp.ne.s32.totalorder %s225, %s227
      %p234 = scmp.eq.s32.totalorder %s28, 1
      %p235 = por %p233, %p234
      %p236 = scmp.ne.s32.totalorder %s227, %s228
      %p237 = scmp.eq.s32.totalorder %s28, 0
      %p238 = por %p236, %p237
      %p239 = scmp.ne.s32.totalorder %s227, %s228
      %p240 = scmp.eq.s32.totalorder %s29, 1
      %p241 = por %p239, %p240
      %p243 = scmp.ne.s32.totalorder %s228, %s242
      %p244 = scmp.eq.s32.totalorder %s29, 0
      %p245 = por %p243, %p244
      %s247 = sadd.s32 %s246, 1
      %p250 = scmp.eq.s32.totalorder %s23, 1
      %p251 = scmp.ne.s32.totalorder %s246, %s248
      %p252 = scmp.eq.s32.totalorder %s23, 0
      %p253 = por %p251, %p252
      %p254 = scmp.ne.s32.totalorder %s246, %s248
      %p255 = scmp.eq.s32.totalorder %s28, 1
      %p256 = por %p254, %p255
      %p257 = scmp.ne.s32.totalorder %s248, %s249
      %p258 = scmp.eq.s32.totalorder %s28, 0
      %p259 = por %p257, %p258
      %p260 = scmp.ne.s32.totalorder %s248, %s249
      %p261 = scmp.eq.s32.totalorder %s29, 1
      %p262 = por %p260, %p261
      %p264 = scmp.ne.s32.totalorder %s249, %s263
      %p265 = scmp.eq.s32.totalorder %s29, 0
      %p266 = por %p264, %p265
      %s268 = sadd.s32 %s267, 1
      %p271 = scmp.eq.s32.totalorder %s23, 1
      %p272 = scmp.ne.s32.totalorder %s267, %s269
      %p273 = scmp.eq.s32.totalorder %s23, 0
      %p274 = por %p272, %p273
      %p275 = scmp.ne.s32.totalorder %s267, %s269
      %p276 = scmp.eq.s32.totalorder %s28, 1
      %p277 = por %p275, %p276
      %p278 = scmp.ne.s32.totalorder %s269, %s270
      %p279 = scmp.eq.s32.totalorder %s28, 0
      %p280 = por %p278, %p279
      %p281 = scmp.ne.s32.totalorder %s269, %s270
      %p282 = scmp.eq.s32.totalorder %s29, 1
      %p283 = por %p281, %p282
      %p285 = scmp.ne.s32.totalorder %s270, %s284
      %p286 = scmp.eq.s32.totalorder %s29, 0
      %p287 = por %p285, %p286
      %s289 = sadd.s32 %s288, 1
      %p292 = scmp.eq.s32.totalorder %s23, 1
      %p293 = scmp.ne.s32.totalorder %s288, %s290
      %p294 = scmp.eq.s32.totalorder %s23, 0
      %p295 = por %p293, %p294
      %p296 = scmp.ne.s32.totalorder %s288, %s290
      %p297 = scmp.eq.s32.totalorder %s28, 1
      %p298 = por %p296, %p297
      %p299 = scmp.ne.s32.totalorder %s290, %s291
      %p300 = scmp.eq.s32.totalorder %s28, 0
      %p301 = por %p299, %p300
      %p302 = scmp.ne.s32.totalorder %s290, %s291
      %p303 = scmp.eq.s32.totalorder %s29, 1
      %p304 = por %p302, %p303
      %p306 = scmp.ne.s32.totalorder %s291, %s305
      %p307 = scmp.eq.s32.totalorder %s29, 0
      %p308 = por %p306, %p307
      %s310 = sadd.s32 %s309, 1
      %p313 = scmp.eq.s32.totalorder %s23, 1
      %p314 = scmp.ne.s32.totalorder %s309, %s311
      %p315 = scmp.eq.s32.totalorder %s23, 0
      %p316 = por %p314, %p315
      %p317 = scmp.ne.s32.totalorder %s309, %s311
      %p318 = scmp.eq.s32.totalorder %s28, 1
      %p319 = por %p317, %p318
      %p320 = scmp.ne.s32.totalorder %s311, %s312
      %p321 = scmp.eq.s32.totalorder %s28, 0
      %p322 = por %p320, %p321
      %p323 = scmp.ne.s32.totalorder %s311, %s312
      %p324 = scmp.eq.s32.totalorder %s29, 1
      %p325 = por %p323, %p324
      %p327 = scmp.ne.s32.totalorder %s312, %s326
      %p328 = scmp.eq.s32.totalorder %s29, 0
      %p329 = por %p327, %p328
      %s330 = ssub.s32 %s23, %s30
      %p331 = scmp.eq.s32.totalorder %s330, 0
      %s333 = sadd.s32 %s332, 1
      %s334 = scalar_select %p331, %s332, %s333
      %p337 = pneg %p331
      %p338 = scmp.eq.s32.totalorder %s23, 1
      %p339 = por %p337, %p338
      %p340 = scmp.ne.s32.totalorder %s332, %s335
      %p341 = scmp.eq.s32.totalorder %s23, 0
      %p342 = por %p340, %p341
      %p343 = scmp.ne.s32.totalorder %s332, %s335
      %p344 = scmp.eq.s32.totalorder %s28, 1
      %p345 = por %p343, %p344
      %p346 = scmp.ne.s32.totalorder %s335, %s336
      %p347 = scmp.eq.s32.totalorder %s28, 0
      %p348 = por %p346, %p347
      %p349 = scmp.ne.s32.totalorder %s335, %s336
      %p350 = scmp.eq.s32.totalorder %s29, 1
      %p351 = por %p349, %p350
      %p353 = scmp.ne.s32.totalorder %s336, %s352
      %p354 = scmp.eq.s32.totalorder %s29, 0
      %p355 = por %p353, %p354
      %p356 = scmp.le.s32.totalorder 1, %s23
      %p357 = scmp.lt.s32.totalorder %s23, 3
      %p358 = pnand %p356, %p357
      %p359 = pneg %p358
      // Predicated region
      $region9: #{tpu_custom_call.1} parent=5 // pred_check
        _
      $region10: #{tpu_custom_call.1} parent=5 // pred_check_branch
        %361 = sbr.rel (%p358) target = $region12
      $region11: #{tpu_custom_call.1} parent=5 // pred_region
        %s362 = ssub.s32 %s23, 1
        // Predicated region
        $region13: #{tpu_custom_call.1} parent=11 // pred_check
          %p363 = pneg %p70
        $region14: #{tpu_custom_call.1} parent=11 // pred_check_branch
          %365 = sbr.rel (%p363) target = $region16
        $region15: #{tpu_custom_call.1} parent=11 // pred_region
          _
        $region16: #{tpu_custom_call.1} parent=11 // pred_fallthru
          _
        // Predicated region
        $region17: #{tpu_custom_call.1} parent=11 // pred_check
          %p366 = pneg %p91
        $region18: #{tpu_custom_call.1} parent=11 // pred_check_branch
          %368 = sbr.rel (%p366) target = $region20
        $region19: #{tpu_custom_call.1} parent=11 // pred_region
          _
        $region20: #{tpu_custom_call.1} parent=11 // pred_fallthru
          _
        // Predicated region
        $region21: #{tpu_custom_call.1} parent=11 // pred_check
          %p369 = pneg %p112
        $region22: #{tpu_custom_call.1} parent=11 // pred_check_branch
          %371 = sbr.rel (%p369) target = $region24
        $region23: #{tpu_custom_call.1} parent=11 // pred_region
          _
        $region24: #{tpu_custom_call.1} parent=11 // pred_fallthru
          _
        // Predicated region
        $region25: #{tpu_custom_call.1} parent=11 // pred_check
          %p372 = pneg %p133
        $region26: #{tpu_custom_call.1} parent=11 // pred_check_branch
          %374 = sbr.rel (%p372) target = $region28
        $region27: #{tpu_custom_call.1} parent=11 // pred_region
          _
        $region28: #{tpu_custom_call.1} parent=11 // pred_fallthru
          _
        // Predicated region
        $region29: #{tpu_custom_call.1} parent=11 // pred_check
          %p375 = pneg %p154
        $region30: #{tpu_custom_call.1} parent=11 // pred_check_branch
          %377 = sbr.rel (%p375) target = $region32
        $region31: #{tpu_custom_call.1} parent=11 // pred_region
          _
        $region32: #{tpu_custom_call.1} parent=11 // pred_fallthru
          _
        // Predicated region
        $region33: #{tpu_custom_call.1} parent=11 // pred_check
          %p378 = pneg %p175
        $region34: #{tpu_custom_call.1} parent=11 // pred_check_branch
          %380 = sbr.rel (%p378) target = $region36
        $region35: #{tpu_custom_call.1} parent=11 // pred_region
          _
        $region36: #{tpu_custom_call.1} parent=11 // pred_fallthru
          _
        // Predicated region
        $region37: #{tpu_custom_call.1} parent=11 // pred_check
          %p381 = pneg %p196
        $region38: #{tpu_custom_call.1} parent=11 // pred_check_branch
          %383 = sbr.rel (%p381) target = $region40
        $region39: #{tpu_custom_call.1} parent=11 // pred_region
          _
        $region40: #{tpu_custom_call.1} parent=11 // pred_fallthru
          _
        // Predicated region
        $region41: #{tpu_custom_call.1} parent=11 // pred_check
          %p384 = pneg %p217
        $region42: #{tpu_custom_call.1} parent=11 // pred_check_branch
          %386 = sbr.rel (%p384) target = $region44
        $region43: #{tpu_custom_call.1} parent=11 // pred_region
          _
        $region44: #{tpu_custom_call.1} parent=11 // pred_fallthru
          _
        // Predicated region
        $region45: #{tpu_custom_call.1} parent=11 // pred_check
          %p387 = pneg %p238
        $region46: #{tpu_custom_call.1} parent=11 // pred_check_branch
          %389 = sbr.rel (%p387) target = $region48
        $region47: #{tpu_custom_call.1} parent=11 // pred_region
          _
        $region48: #{tpu_custom_call.1} parent=11 // pred_fallthru
          _
        // Predicated region
        $region49: #{tpu_custom_call.1} parent=11 // pred_check
          %p390 = pneg %p259
        $region50: #{tpu_custom_call.1} parent=11 // pred_check_branch
          %392 = sbr.rel (%p390) target = $region52
        $region51: #{tpu_custom_call.1} parent=11 // pred_region
          _
        $region52: #{tpu_custom_call.1} parent=11 // pred_fallthru
          _
        // Predicated region
        $region53: #{tpu_custom_call.1} parent=11 // pred_check
          %p393 = pneg %p280
        $region54: #{tpu_custom_call.1} parent=11 // pred_check_branch
          %395 = sbr.rel (%p393) target = $region56
        $region55: #{tpu_custom_call.1} parent=11 // pred_region
          _
        $region56: #{tpu_custom_call.1} parent=11 // pred_fallthru
          _
        // Predicated region
        $region57: #{tpu_custom_call.1} parent=11 // pred_check
          %p396 = pneg %p301
        $region58: #{tpu_custom_call.1} parent=11 // pred_check_branch
          %398 = sbr.rel (%p396) target = $region60
        $region59: #{tpu_custom_call.1} parent=11 // pred_region
          _
        $region60: #{tpu_custom_call.1} parent=11 // pred_fallthru
          _
        // Predicated region
        $region61: #{tpu_custom_call.1} parent=11 // pred_check
          %p399 = pneg %p322
        $region62: #{tpu_custom_call.1} parent=11 // pred_check_branch
          %401 = sbr.rel (%p399) target = $region64
        $region63: #{tpu_custom_call.1} parent=11 // pred_region
          _
        $region64: #{tpu_custom_call.1} parent=11 // pred_fallthru
          _
      $region12: #{tpu_custom_call.1} parent=5 // pred_fallthru
        _
      %p402 = scmp.lt.s32.totalorder %s23, 2
      // Predicated region
      $region65: #{tpu_custom_call.1} parent=5 // pred_check
        %p403 = pneg %p402
      $region66: #{tpu_custom_call.1} parent=5 // pred_check_branch
        %405 = sbr.rel (%p403) target = $region68
      $region67: #{tpu_custom_call.1} parent=5 // pred_region
        // Predicated region
        $region69: #{tpu_custom_call.1} parent=67 // pred_check
          %p406 = pneg %p43
        $region70: #{tpu_custom_call.1} parent=67 // pred_check_branch
          %408 = sbr.rel (%p406) target = $region72
        $region71: #{tpu_custom_call.1} parent=67 // pred_region
          %p409 = scmp.lt.s32.totalorder %s23, 1
          %s410 = scalar_select %p409, %s23, 1
          %s411 = smul.addr %s410, 2
          %s412 = smul.addr %s411, 4
          %s413 = scalar_lea.vmem %s0, %s412
        $region72: #{tpu_custom_call.1} parent=67 // pred_fallthru
          _
      $region68: #{tpu_custom_call.1} parent=5 // pred_fallthru
        _
      %p414 = scmp.le.s32.totalorder 1, %s23
      %p415 = scmp.lt.s32.totalorder %s23, 3
      %p416 = pnand %p414, %p415
      %p417 = pneg %p416
      // Predicated region
      $region73: #{tpu_custom_call.1} parent=5 // pred_check
        _
      $region74: #{tpu_custom_call.1} parent=5 // pred_check_branch
        %419 = sbr.rel (%p416) target = $region76
      $region75: #{tpu_custom_call.1} parent=5 // pred_region
        %s420 = ssub.s32 %s23, 1
        %p421 = scmp.lt.s32.totalorder %s28, 1
        %s422 = scalar_select %p421, %s28, 1
        %s423 = smul.addr %s422, 2
        %s424 = smul.addr %s423, 4
        %s425 = scalar_lea.vmem %s0, %s424
        %p426 = pneg %p49
        %p427 = pneg %p46
        %p428 = pneg %p70
        %p429 = pneg %p67
        %p430 = pneg %p91
        %p431 = pneg %p88
        %p432 = pneg %p112
        %p433 = pneg %p109
        %p434 = pneg %p133
        %p435 = pneg %p130
        %p436 = pneg %p154
        %p437 = pneg %p151
        %p438 = pneg %p175
        %p439 = pneg %p172
        %p440 = pneg %p196
        %p441 = pneg %p193
        %p442 = pneg %p217
        %p443 = pneg %p214
        %p444 = pneg %p238
        %p445 = pneg %p235
        %p446 = pneg %p259
        %p447 = pneg %p256
        %p448 = pneg %p280
        %p449 = pneg %p277
        %p450 = pneg %p301
        %p451 = pneg %p298
        %p452 = pneg %p322
        %p453 = pneg %p319
        %p454 = pneg %p348
        %p455 = pneg %p345
        %s456 = sand.u32 %s335, 1
        %s457 = scalar_lea.sflag [#allocation3], %s456
        %s458 = sand.u32 %s335, 1
        %s459 = smul.addr %s458, 8
        %s460 = scalar_lea.vmem [#allocation2], %s459
        %p461 = scmp.lt.s32.totalorder %s28, 1
        %s462 = scalar_select %p461, %s28, 1
        %s463 = smul.addr %s462, 2
        %s464 = smul.addr %s463, 4
        %s465 = scalar_lea.vmem %s0, %s464
        %v466 = vld [vmem:[%s465] sm:$0xff]
        %v467 = vld [vmem:[%s1] sm:$0x3]
        %s468 = scalar_lea.vmem %s1, 2
        %v469 = vld [vmem:[%s468] sm:$0x3]
        %s470 = scalar_lea.vmem %s1, 4
        %v471 = vld [vmem:[%s470] sm:$0x3]
        %s472 = scalar_lea.vmem %s1, 6
        %v473 = vld [vmem:[%s472] sm:$0x3]
        %s474 = scalar_lea.vmem %s1, 10
        %v475 = vld [vmem:[%s474] sm:$0x3]
        %s476 = scalar_lea.vmem %s1, 12
        %v477 = vld [vmem:[%s476] sm:$0x3]
        %s478 = scalar_lea.vmem %s1, 14
        %v479 = vld [vmem:[%s478] sm:$0x3]
        %s480 = scalar_lea.vmem %s1, 16
        %v481 = vld [vmem:[%s480] sm:$0x3]
        %v483 = vcombine.high %v466, %v466
        %vm485 = vcmask 1043456
        %v486 = vsel %vm485, %v466, 0.0
        %v487 = vsel %vm485, %v483, 0.0
        %v488 = vadd.f32 %v486, %v487
        %489 = vadd.xlane.f32.xlu0 %v488
        %v490 = vpop.xlane.xlu0 %489
        %v491 = vmul.f32 %v490, 0.00390625
        %v492 = vld [vmem:[%s10] sm:$0xf]
        %v493 = vmul.f32 %v492, %v491
        %vm494 = vcmask 27648
        %v495 = vsel %vm494, %v493, 0.0
        %v496 = vrot.slane %v495, 4
        %v497 = vadd.f32 %v495, %v496
        %v498 = vrot.slane %v497, 2
        %v499 = vadd.f32 %v497, %v498
        %v500 = vrot.slane %v499, 1
        %v501 = vadd.f32 %v499, %v500
        %v502 = vld [vmem:[%s11] sm:$0x1]
        %v503 = vadd.f32 %v501, %v502
        %v504 = vmax.f32 %v503, 0.0
        %v505 = vld [vmem:[%s12] sm:$0xf]
        %v506 = vlaneseq
        %v507 = vshrl.u32 %v506, 7
        %v508 = vsub.s32 0, %v507
        %v509 = vrot.slane %v504, %v508
        %v510 = vmul.f32 %v505, %v509
        %v511 = vsel %vm494, %v510, 0.0
        %512 = vadd.xlane.f32.xlu0 %v511
        %v513 = vpop.xlane.xlu0 %512
        %v514 = vld [vmem:[%s13] sm:$0xf]
        %v515 = vadd.f32 %v513, %v514
        %v516 = vsub.f32 0.0, %v515
        %v517 = vmul.f32 %v516, 1.442695
        %v518 = vpow.pop %v517
        %v519 = vadd.f32 %v518, 1.0
        %v520 = vrcp.pop %v519
        %v521 = vmul.f32 1.0, %v520
        %522 = vrot.lane.b32.xlu0 %v466, 17
        %v523 = vpop.permute.xlu0 %522
        %524 = vrot.lane.b32.xlu0 %v483, 17
        %v525 = vpop.permute.xlu0 %524
        %v526 = vlaneseq
        %v527 = vand.u32 %v526, 127
        %vm528 = vcmp.lt.s32.totalorder %v527, 17
        %v529 = vsel %vm528, %v523, %v525
        %v530 = vsel %vm528, %v525, %v523
        %v532 = vlaneseq
        %v533 = vshrl.u32 %v532, 7
        %v534 = vsub.s32 0, %v533
        %v535 = vrot.slane %v467, %v534
        %v536 = vlaneseq
        %v537 = vshrl.u32 %v536, 7
        %v538 = vsub.s32 1, %v537
        %v539 = vrot.slane %v467, %v538
        %v542 = vmul.f32 %v530, %v535
        %v543 = vmul.f32 %v529, %v539
        %v544 = vld [vmem:[%s2] sm:$0xf]
        %546 = vset.pattern.permute.xlu0 0
        %547 = vperm.xlu0 %546, %v544
        %v548 = vpop.permute.xlu0 %547
        %v550 = vlaneseq
        %v551 = vshrl.u32 %v550, 7
        %v552 = vsub.s32 0, %v551
        %v553 = vrot.slane %v542, %v552
        %v554 = vlaneseq
        %v555 = vshrl.u32 %v554, 7
        %v556 = vsub.s32 0, %v555
        %v557 = vrot.slane %v543, %v556
        %v558 = vmul.f32 %v548, %v553
        %v559 = vmul.f32 %v548, %v557
        %v560 = vadd.f32 %v558, 0.0
        %v561 = vadd.f32 %v559, 0.0
        %562 = vset.pattern.permute.xlu0 1
        %563 = vperm.xlu0 %562, %v544
        %v564 = vpop.permute.xlu0 %563
        %v566 = vlaneseq
        %v567 = vshrl.u32 %v566, 7
        %v568 = vsub.s32 1, %v567
        %v569 = vrot.slane %v542, %v568
        %v570 = vlaneseq
        %v571 = vshrl.u32 %v570, 7
        %v572 = vsub.s32 1, %v571
        %v573 = vrot.slane %v543, %v572
        %v574 = vmul.f32 %v564, %v569
        %v575 = vmul.f32 %v564, %v573
        %v576 = vadd.f32 %v560, %v574
        %v577 = vadd.f32 %v561, %v575
        %578 = vset.pattern.permute.xlu0 2
        %579 = vperm.xlu0 %578, %v544
        %v580 = vpop.permute.xlu0 %579
        %v582 = vlaneseq
        %v583 = vshrl.u32 %v582, 7
        %v584 = vsub.s32 2, %v583
        %v585 = vrot.slane %v542, %v584
        %v586 = vlaneseq
        %v587 = vshrl.u32 %v586, 7
        %v588 = vsub.s32 2, %v587
        %v589 = vrot.slane %v543, %v588
        %v590 = vmul.f32 %v580, %v585
        %v591 = vmul.f32 %v580, %v589
        %v592 = vadd.f32 %v576, %v590
        %v593 = vadd.f32 %v577, %v591
        %594 = vset.pattern.permute.xlu0 3
        %595 = vperm.xlu0 %594, %v544
        %v596 = vpop.permute.xlu0 %595
        %v598 = vlaneseq
        %v599 = vshrl.u32 %v598, 7
        %v600 = vsub.s32 3, %v599
        %v601 = vrot.slane %v542, %v600
        %v602 = vlaneseq
        %v603 = vshrl.u32 %v602, 7
        %v604 = vsub.s32 3, %v603
        %v605 = vrot.slane %v543, %v604
        %v606 = vmul.f32 %v596, %v601
        %v607 = vmul.f32 %v596, %v605
        %v608 = vadd.f32 %v592, %v606
        %v609 = vadd.f32 %v593, %v607
        %610 = vrot.lane.b32.xlu0 %v466, 16
        %v611 = vpop.permute.xlu0 %610
        %612 = vrot.lane.b32.xlu0 %v483, 16
        %v613 = vpop.permute.xlu0 %612
        %vm614 = vcmp.lt.s32.totalorder %v527, 16
        %v615 = vsel %vm614, %v611, %v613
        %v616 = vsel %vm614, %v613, %v611
        %v618 = vlaneseq
        %v619 = vshrl.u32 %v618, 7
        %v620 = vsub.s32 0, %v619
        %v621 = vrot.slane %v469, %v620
        %v622 = vlaneseq
        %v623 = vshrl.u32 %v622, 7
        %v624 = vsub.s32 1, %v623
        %v625 = vrot.slane %v469, %v624
        %v628 = vmul.f32 %v616, %v621
        %v629 = vmul.f32 %v615, %v625
        %s630 = scalar_lea.vmem %s2, 4
        %v631 = vld [vmem:[%s630] sm:$0xf]
        %633 = vset.pattern.permute.xlu0 0
        %634 = vperm.xlu0 %633, %v631
        %v635 = vpop.permute.xlu0 %634
        %v637 = vlaneseq
        %v638 = vshrl.u32 %v637, 7
        %v639 = vsub.s32 0, %v638
        %v640 = vrot.slane %v628, %v639
        %v641 = vlaneseq
        %v642 = vshrl.u32 %v641, 7
        %v643 = vsub.s32 0, %v642
        %v644 = vrot.slane %v629, %v643
        %v645 = vmul.f32 %v635, %v640
        %v646 = vmul.f32 %v635, %v644
        %v647 = vadd.f32 %v608, %v645
        %v648 = vadd.f32 %v609, %v646
        %649 = vset.pattern.permute.xlu0 1
        %650 = vperm.xlu0 %649, %v631
        %v651 = vpop.permute.xlu0 %650
        %v653 = vlaneseq
        %v654 = vshrl.u32 %v653, 7
        %v655 = vsub.s32 1, %v654
        %v656 = vrot.slane %v628, %v655
        %v657 = vlaneseq
        %v658 = vshrl.u32 %v657, 7
        %v659 = vsub.s32 1, %v658
        %v660 = vrot.slane %v629, %v659
        %v661 = vmul.f32 %v651, %v656
        %v662 = vmul.f32 %v651, %v660
        %v663 = vadd.f32 %v647, %v661
        %v664 = vadd.f32 %v648, %v662
        %665 = vset.pattern.permute.xlu0 2
        %666 = vperm.xlu0 %665, %v631
        %v667 = vpop.permute.xlu0 %666
        %v669 = vlaneseq
        %v670 = vshrl.u32 %v669, 7
        %v671 = vsub.s32 2, %v670
        %v672 = vrot.slane %v628, %v671
        %v673 = vlaneseq
        %v674 = vshrl.u32 %v673, 7
        %v675 = vsub.s32 2, %v674
        %v676 = vrot.slane %v629, %v675
        %v677 = vmul.f32 %v667, %v672
        %v678 = vmul.f32 %v667, %v676
        %v679 = vadd.f32 %v663, %v677
        %v680 = vadd.f32 %v664, %v678
        %681 = vset.pattern.permute.xlu0 3
        %682 = vperm.xlu0 %681, %v631
        %v683 = vpop.permute.xlu0 %682
        %v685 = vlaneseq
        %v686 = vshrl.u32 %v685, 7
        %v687 = vsub.s32 3, %v686
        %v688 = vrot.slane %v628, %v687
        %v689 = vlaneseq
        %v690 = vshrl.u32 %v689, 7
        %v691 = vsub.s32 3, %v690
        %v692 = vrot.slane %v629, %v691
        %v693 = vmul.f32 %v683, %v688
        %v694 = vmul.f32 %v683, %v692
        %v695 = vadd.f32 %v679, %v693
        %v696 = vadd.f32 %v680, %v694
        %697 = vrot.lane.b32.xlu0 %v466, 15
        %v698 = vpop.permute.xlu0 %697
        %699 = vrot.lane.b32.xlu0 %v483, 15
        %v700 = vpop.permute.xlu0 %699
        %vm701 = vcmp.lt.s32.totalorder %v527, 15
        %v702 = vsel %vm701, %v698, %v700
        %v703 = vsel %vm701, %v700, %v698
        %v705 = vlaneseq
        %v706 = vshrl.u32 %v705, 7
        %v707 = vsub.s32 0, %v706
        %v708 = vrot.slane %v471, %v707
        %v709 = vlaneseq
        %v710 = vshrl.u32 %v709, 7
        %v711 = vsub.s32 1, %v710
        %v712 = vrot.slane %v471, %v711
        %v715 = vmul.f32 %v703, %v708
        %v716 = vmul.f32 %v702, %v712
        %s717 = scalar_lea.vmem %s2, 8
        %v718 = vld [vmem:[%s717] sm:$0xf]
        %720 = vset.pattern.permute.xlu0 0
        %721 = vperm.xlu0 %720, %v718
        %v722 = vpop.permute.xlu0 %721
        %v724 = vlaneseq
        %v725 = vshrl.u32 %v724, 7
        %v726 = vsub.s32 0, %v725
        %v727 = vrot.slane %v715, %v726
        %v728 = vlaneseq
        %v729 = vshrl.u32 %v728, 7
        %v730 = vsub.s32 0, %v729
        %v731 = vrot.slane %v716, %v730
        %v732 = vmul.f32 %v722, %v727
        %v733 = vmul.f32 %v722, %v731
        %v734 = vadd.f32 %v695, %v732
        %v735 = vadd.f32 %v696, %v733
        %736 = vset.pattern.permute.xlu0 1
        %737 = vperm.xlu0 %736, %v718
        %v738 = vpop.permute.xlu0 %737
        %v740 = vlaneseq
        %v741 = vshrl.u32 %v740, 7
        %v742 = vsub.s32 1, %v741
        %v743 = vrot.slane %v715, %v742
        %v744 = vlaneseq
        %v745 = vshrl.u32 %v744, 7
        %v746 = vsub.s32 1, %v745
        %v747 = vrot.slane %v716, %v746
        %v748 = vmul.f32 %v738, %v743
        %v749 = vmul.f32 %v738, %v747
        %v750 = vadd.f32 %v734, %v748
        %v751 = vadd.f32 %v735, %v749
        %752 = vset.pattern.permute.xlu0 2
        %753 = vperm.xlu0 %752, %v718
        %v754 = vpop.permute.xlu0 %753
        %v756 = vlaneseq
        %v757 = vshrl.u32 %v756, 7
        %v758 = vsub.s32 2, %v757
        %v759 = vrot.slane %v715, %v758
        %v760 = vlaneseq
        %v761 = vshrl.u32 %v760, 7
        %v762 = vsub.s32 2, %v761
        %v763 = vrot.slane %v716, %v762
        %v764 = vmul.f32 %v754, %v759
        %v765 = vmul.f32 %v754, %v763
        %v766 = vadd.f32 %v750, %v764
        %v767 = vadd.f32 %v751, %v765
        %768 = vset.pattern.permute.xlu0 3
        %769 = vperm.xlu0 %768, %v718
        %v770 = vpop.permute.xlu0 %769
        %v772 = vlaneseq
        %v773 = vshrl.u32 %v772, 7
        %v774 = vsub.s32 3, %v773
        %v775 = vrot.slane %v715, %v774
        %v776 = vlaneseq
        %v777 = vshrl.u32 %v776, 7
        %v778 = vsub.s32 3, %v777
        %v779 = vrot.slane %v716, %v778
        %v780 = vmul.f32 %v770, %v775
        %v781 = vmul.f32 %v770, %v779
        %v782 = vadd.f32 %v766, %v780
        %v783 = vadd.f32 %v767, %v781
        %784 = vrot.lane.b32.xlu0 %v466, 1
        %v785 = vpop.permute.xlu0 %784
        %786 = vrot.lane.b32.xlu0 %v483, 1
        %v787 = vpop.permute.xlu0 %786
        %vm788 = vcmp.lt.s32.totalorder %v527, 1
        %v789 = vsel %vm788, %v785, %v787
        %v790 = vsel %vm788, %v787, %v785
        %v792 = vlaneseq
        %v793 = vshrl.u32 %v792, 7
        %v794 = vsub.s32 0, %v793
        %v795 = vrot.slane %v473, %v794
        %v796 = vlaneseq
        %v797 = vshrl.u32 %v796, 7
        %v798 = vsub.s32 1, %v797
        %v799 = vrot.slane %v473, %v798
        %v802 = vmul.f32 %v790, %v795
        %v803 = vmul.f32 %v789, %v799
        %s804 = scalar_lea.vmem %s2, 12
        %v805 = vld [vmem:[%s804] sm:$0xf]
        %807 = vset.pattern.permute.xlu0 0
        %808 = vperm.xlu0 %807, %v805
        %v809 = vpop.permute.xlu0 %808
        %v811 = vlaneseq
        %v812 = vshrl.u32 %v811, 7
        %v813 = vsub.s32 0, %v812
        %v814 = vrot.slane %v802, %v813
        %v815 = vlaneseq
        %v816 = vshrl.u32 %v815, 7
        %v817 = vsub.s32 0, %v816
        %v818 = vrot.slane %v803, %v817
        %v819 = vmul.f32 %v809, %v814
        %v820 = vmul.f32 %v809, %v818
        %v821 = vadd.f32 %v782, %v819
        %v822 = vadd.f32 %v783, %v820
        %823 = vset.pattern.permute.xlu0 1
        %824 = vperm.xlu0 %823, %v805
        %v825 = vpop.permute.xlu0 %824
        %v827 = vlaneseq
        %v828 = vshrl.u32 %v827, 7
        %v829 = vsub.s32 1, %v828
        %v830 = vrot.slane %v802, %v829
        %v831 = vlaneseq
        %v832 = vshrl.u32 %v831, 7
        %v833 = vsub.s32 1, %v832
        %v834 = vrot.slane %v803, %v833
        %v835 = vmul.f32 %v825, %v830
        %v836 = vmul.f32 %v825, %v834
        %v837 = vadd.f32 %v821, %v835
        %v838 = vadd.f32 %v822, %v836
        %839 = vset.pattern.permute.xlu0 2
        %840 = vperm.xlu0 %839, %v805
        %v841 = vpop.permute.xlu0 %840
        %v843 = vlaneseq
        %v844 = vshrl.u32 %v843, 7
        %v845 = vsub.s32 2, %v844
        %v846 = vrot.slane %v802, %v845
        %v847 = vlaneseq
        %v848 = vshrl.u32 %v847, 7
        %v849 = vsub.s32 2, %v848
        %v850 = vrot.slane %v803, %v849
        %v851 = vmul.f32 %v841, %v846
        %v852 = vmul.f32 %v841, %v850
        %v853 = vadd.f32 %v837, %v851
        %v854 = vadd.f32 %v838, %v852
        %855 = vset.pattern.permute.xlu0 3
        %856 = vperm.xlu0 %855, %v805
        %v857 = vpop.permute.xlu0 %856
        %v859 = vlaneseq
        %v860 = vshrl.u32 %v859, 7
        %v861 = vsub.s32 3, %v860
        %v862 = vrot.slane %v802, %v861
        %v863 = vlaneseq
        %v864 = vshrl.u32 %v863, 7
        %v865 = vsub.s32 3, %v864
        %v866 = vrot.slane %v803, %v865
        %v867 = vmul.f32 %v857, %v862
        %v868 = vmul.f32 %v857, %v866
        %v869 = vadd.f32 %v853, %v867
        %v870 = vadd.f32 %v854, %v868
        %s871 = scalar_lea.vmem %s2, 16
        %v872 = vld [vmem:[%s871] sm:$0xf]
        %874 = vset.pattern.permute.xlu0 0
        %875 = vperm.xlu0 %874, %v872
        %v876 = vpop.permute.xlu0 %875
        %v878 = vlaneseq
        %v879 = vshrl.u32 %v878, 7
        %v880 = vsub.s32 0, %v879
        %v881 = vrot.slane %v466, %v880
        %v882 = vlaneseq
        %v883 = vshrl.u32 %v882, 7
        %v884 = vsub.s32 4, %v883
        %v885 = vrot.slane %v466, %v884
        %v888 = vlaneseq
        %v889 = vshrl.u32 %v888, 7
        %v890 = vsub.s32 0, %v889
        %v891 = vrot.slane %v881, %v890
        %v892 = vlaneseq
        %v893 = vshrl.u32 %v892, 7
        %v894 = vsub.s32 0, %v893
        %v895 = vrot.slane %v885, %v894
        %v896 = vmul.f32 %v876, %v891
        %v897 = vmul.f32 %v876, %v895
        %v898 = vadd.f32 %v869, %v896
        %v899 = vadd.f32 %v870, %v897
        %900 = vset.pattern.permute.xlu0 1
        %901 = vperm.xlu0 %900, %v872
        %v902 = vpop.permute.xlu0 %901
        %v904 = vlaneseq
        %v905 = vshrl.u32 %v904, 7
        %v906 = vsub.s32 1, %v905
        %v907 = vrot.slane %v466, %v906
        %v908 = vlaneseq
        %v909 = vshrl.u32 %v908, 7
        %v910 = vsub.s32 5, %v909
        %v911 = vrot.slane %v466, %v910
        %v914 = vlaneseq
        %v915 = vshrl.u32 %v914, 7
        %v916 = vsub.s32 1, %v915
        %v917 = vrot.slane %v907, %v916
        %v918 = vlaneseq
        %v919 = vshrl.u32 %v918, 7
        %v920 = vsub.s32 1, %v919
        %v921 = vrot.slane %v911, %v920
        %v922 = vmul.f32 %v902, %v917
        %v923 = vmul.f32 %v902, %v921
        %v924 = vadd.f32 %v898, %v922
        %v925 = vadd.f32 %v899, %v923
        %926 = vset.pattern.permute.xlu0 2
        %927 = vperm.xlu0 %926, %v872
        %v928 = vpop.permute.xlu0 %927
        %v930 = vlaneseq
        %v931 = vshrl.u32 %v930, 7
        %v932 = vsub.s32 2, %v931
        %v933 = vrot.slane %v466, %v932
        %v934 = vlaneseq
        %v935 = vshrl.u32 %v934, 7
        %v936 = vsub.s32 6, %v935
        %v937 = vrot.slane %v466, %v936
        %v940 = vlaneseq
        %v941 = vshrl.u32 %v940, 7
        %v942 = vsub.s32 2, %v941
        %v943 = vrot.slane %v933, %v942
        %v944 = vlaneseq
        %v945 = vshrl.u32 %v944, 7
        %v946 = vsub.s32 2, %v945
        %v947 = vrot.slane %v937, %v946
        %v948 = vmul.f32 %v928, %v943
        %v949 = vmul.f32 %v928, %v947
        %v950 = vadd.f32 %v924, %v948
        %v951 = vadd.f32 %v925, %v949
        %952 = vset.pattern.permute.xlu0 3
        %953 = vperm.xlu0 %952, %v872
        %v954 = vpop.permute.xlu0 %953
        %v956 = vlaneseq
        %v957 = vshrl.u32 %v956, 7
        %v958 = vsub.s32 3, %v957
        %v959 = vrot.slane %v466, %v958
        %v960 = vlaneseq
        %v961 = vshrl.u32 %v960, 7
        %v962 = vsub.s32 7, %v961
        %v963 = vrot.slane %v466, %v962
        %v966 = vlaneseq
        %v967 = vshrl.u32 %v966, 7
        %v968 = vsub.s32 3, %v967
        %v969 = vrot.slane %v959, %v968
        %v970 = vlaneseq
        %v971 = vshrl.u32 %v970, 7
        %v972 = vsub.s32 3, %v971
        %v973 = vrot.slane %v963, %v972
        %v974 = vmul.f32 %v954, %v969
        %v975 = vmul.f32 %v954, %v973
        %v976 = vadd.f32 %v950, %v974
        %v977 = vadd.f32 %v951, %v975
        %978 = vrot.lane.b32.xlu0 %v466, 127
        %v979 = vpop.permute.xlu0 %978
        %980 = vrot.lane.b32.xlu0 %v483, 127
        %v981 = vpop.permute.xlu0 %980
        %vm982 = vcmp.lt.s32.totalorder %v527, 127
        %v983 = vsel %vm982, %v979, %v981
        %v984 = vsel %vm982, %v981, %v979
        %v986 = vlaneseq
        %v987 = vshrl.u32 %v986, 7
        %v988 = vsub.s32 0, %v987
        %v989 = vrot.slane %v475, %v988
        %v990 = vlaneseq
        %v991 = vshrl.u32 %v990, 7
        %v992 = vsub.s32 1, %v991
        %v993 = vrot.slane %v475, %v992
        %v996 = vmul.f32 %v983, %v989
        %v997 = vmul.f32 %v984, %v993
        %s998 = scalar_lea.vmem %s2, 20
        %v999 = vld [vmem:[%s998] sm:$0xf]
        %1001 = vset.pattern.permute.xlu0 0
        %1002 = vperm.xlu0 %1001, %v999
        %v1003 = vpop.permute.xlu0 %1002
        %v1005 = vlaneseq
        %v1006 = vshrl.u32 %v1005, 7
        %v1007 = vsub.s32 0, %v1006
        %v1008 = vrot.slane %v996, %v1007
        %v1009 = vlaneseq
        %v1010 = vshrl.u32 %v1009, 7
        %v1011 = vsub.s32 0, %v1010
        %v1012 = vrot.slane %v997, %v1011
        %v1013 = vmul.f32 %v1003, %v1008
        %v1014 = vmul.f32 %v1003, %v1012
        %v1015 = vadd.f32 %v976, %v1013
        %v1016 = vadd.f32 %v977, %v1014
        %1017 = vset.pattern.permute.xlu0 1
        %1018 = vperm.xlu0 %1017, %v999
        %v1019 = vpop.permute.xlu0 %1018
        %v1021 = vlaneseq
        %v1022 = vshrl.u32 %v1021, 7
        %v1023 = vsub.s32 1, %v1022
        %v1024 = vrot.slane %v996, %v1023
        %v1025 = vlaneseq
        %v1026 = vshrl.u32 %v1025, 7
        %v1027 = vsub.s32 1, %v1026
        %v1028 = vrot.slane %v997, %v1027
        %v1029 = vmul.f32 %v1019, %v1024
        %v1030 = vmul.f32 %v1019, %v1028
        %v1031 = vadd.f32 %v1015, %v1029
        %v1032 = vadd.f32 %v1016, %v1030
        %1033 = vset.pattern.permute.xlu0 2
        %1034 = vperm.xlu0 %1033, %v999
        %v1035 = vpop.permute.xlu0 %1034
        %v1037 = vlaneseq
        %v1038 = vshrl.u32 %v1037, 7
        %v1039 = vsub.s32 2, %v1038
        %v1040 = vrot.slane %v996, %v1039
        %v1041 = vlaneseq
        %v1042 = vshrl.u32 %v1041, 7
        %v1043 = vsub.s32 2, %v1042
        %v1044 = vrot.slane %v997, %v1043
        %v1045 = vmul.f32 %v1035, %v1040
        %v1046 = vmul.f32 %v1035, %v1044
        %v1047 = vadd.f32 %v1031, %v1045
        %v1048 = vadd.f32 %v1032, %v1046
        %1049 = vset.pattern.permute.xlu0 3
        %1050 = vperm.xlu0 %1049, %v999
        %v1051 = vpop.permute.xlu0 %1050
        %v1053 = vlaneseq
        %v1054 = vshrl.u32 %v1053, 7
        %v1055 = vsub.s32 3, %v1054
        %v1056 = vrot.slane %v996, %v1055
        %v1057 = vlaneseq
        %v1058 = vshrl.u32 %v1057, 7
        %v1059 = vsub.s32 3, %v1058
        %v1060 = vrot.slane %v997, %v1059
        %v1061 = vmul.f32 %v1051, %v1056
        %v1062 = vmul.f32 %v1051, %v1060
        %v1063 = vadd.f32 %v1047, %v1061
        %v1064 = vadd.f32 %v1048, %v1062
        %1065 = vrot.lane.b32.xlu0 %v466, 113
        %v1066 = vpop.permute.xlu0 %1065
        %1067 = vrot.lane.b32.xlu0 %v483, 113
        %v1068 = vpop.permute.xlu0 %1067
        %vm1069 = vcmp.lt.s32.totalorder %v527, 113
        %v1070 = vsel %vm1069, %v1066, %v1068
        %v1071 = vsel %vm1069, %v1068, %v1066
        %v1073 = vlaneseq
        %v1074 = vshrl.u32 %v1073, 7
        %v1075 = vsub.s32 0, %v1074
        %v1076 = vrot.slane %v477, %v1075
        %v1077 = vlaneseq
        %v1078 = vshrl.u32 %v1077, 7
        %v1079 = vsub.s32 1, %v1078
        %v1080 = vrot.slane %v477, %v1079
        %v1083 = vmul.f32 %v1070, %v1076
        %v1084 = vmul.f32 %v1071, %v1080
        %s1085 = scalar_lea.vmem %s2, 24
        %v1086 = vld [vmem:[%s1085] sm:$0xf]
        %1088 = vset.pattern.permute.xlu0 0
        %1089 = vperm.xlu0 %1088, %v1086
        %v1090 = vpop.permute.xlu0 %1089
        %v1092 = vlaneseq
        %v1093 = vshrl.u32 %v1092, 7
        %v1094 = vsub.s32 0, %v1093
        %v1095 = vrot.slane %v1083, %v1094
        %v1096 = vlaneseq
        %v1097 = vshrl.u32 %v1096, 7
        %v1098 = vsub.s32 0, %v1097
        %v1099 = vrot.slane %v1084, %v1098
        %v1100 = vmul.f32 %v1090, %v1095
        %v1101 = vmul.f32 %v1090, %v1099
        %v1102 = vadd.f32 %v1063, %v1100
        %v1103 = vadd.f32 %v1064, %v1101
        %1104 = vset.pattern.permute.xlu0 1
        %1105 = vperm.xlu0 %1104, %v1086
        %v1106 = vpop.permute.xlu0 %1105
        %v1108 = vlaneseq
        %v1109 = vshrl.u32 %v1108, 7
        %v1110 = vsub.s32 1, %v1109
        %v1111 = vrot.slane %v1083, %v1110
        %v1112 = vlaneseq
        %v1113 = vshrl.u32 %v1112, 7
        %v1114 = vsub.s32 1, %v1113
        %v1115 = vrot.slane %v1084, %v1114
        %v1116 = vmul.f32 %v1106, %v1111
        %v1117 = vmul.f32 %v1106, %v1115
        %v1118 = vadd.f32 %v1102, %v1116
        %v1119 = vadd.f32 %v1103, %v1117
        %1120 = vset.pattern.permute.xlu0 2
        %1121 = vperm.xlu0 %1120, %v1086
        %v1122 = vpop.permute.xlu0 %1121
        %v1124 = vlaneseq
        %v1125 = vshrl.u32 %v1124, 7
        %v1126 = vsub.s32 2, %v1125
        %v1127 = vrot.slane %v1083, %v1126
        %v1128 = vlaneseq
        %v1129 = vshrl.u32 %v1128, 7
        %v1130 = vsub.s32 2, %v1129
        %v1131 = vrot.slane %v1084, %v1130
        %v1132 = vmul.f32 %v1122, %v1127
        %v1133 = vmul.f32 %v1122, %v1131
        %v1134 = vadd.f32 %v1118, %v1132
        %v1135 = vadd.f32 %v1119, %v1133
        %1136 = vset.pattern.permute.xlu0 3
        %1137 = vperm.xlu0 %1136, %v1086
        %v1138 = vpop.permute.xlu0 %1137
        %v1140 = vlaneseq
        %v1141 = vshrl.u32 %v1140, 7
        %v1142 = vsub.s32 3, %v1141
        %v1143 = vrot.slane %v1083, %v1142
        %v1144 = vlaneseq
        %v1145 = vshrl.u32 %v1144, 7
        %v1146 = vsub.s32 3, %v1145
        %v1147 = vrot.slane %v1084, %v1146
        %v1148 = vmul.f32 %v1138, %v1143
        %v1149 = vmul.f32 %v1138, %v1147
        %v1150 = vadd.f32 %v1134, %v1148
        %v1151 = vadd.f32 %v1135, %v1149
        %1152 = vrot.lane.b32.xlu0 %v466, 112
        %v1153 = vpop.permute.xlu0 %1152
        %1154 = vrot.lane.b32.xlu0 %v483, 112
        %v1155 = vpop.permute.xlu0 %1154
        %vm1156 = vcmp.lt.s32.totalorder %v527, 112
        %v1157 = vsel %vm1156, %v1153, %v1155
        %v1158 = vsel %vm1156, %v1155, %v1153
        %v1160 = vlaneseq
        %v1161 = vshrl.u32 %v1160, 7
        %v1162 = vsub.s32 0, %v1161
        %v1163 = vrot.slane %v479, %v1162
        %v1164 = vlaneseq
        %v1165 = vshrl.u32 %v1164, 7
        %v1166 = vsub.s32 1, %v1165
        %v1167 = vrot.slane %v479, %v1166
        %v1170 = vmul.f32 %v1157, %v1163
        %v1171 = vmul.f32 %v1158, %v1167
        %s1172 = scalar_lea.vmem %s2, 28
        %v1173 = vld [vmem:[%s1172] sm:$0xf]
        %1175 = vset.pattern.permute.xlu0 0
        %1176 = vperm.xlu0 %1175, %v1173
        %v1177 = vpop.permute.xlu0 %1176
        %v1179 = vlaneseq
        %v1180 = vshrl.u32 %v1179, 7
        %v1181 = vsub.s32 0, %v1180
        %v1182 = vrot.slane %v1170, %v1181
        %v1183 = vlaneseq
        %v1184 = vshrl.u32 %v1183, 7
        %v1185 = vsub.s32 0, %v1184
        %v1186 = vrot.slane %v1171, %v1185
        %v1187 = vmul.f32 %v1177, %v1182
        %v1188 = vmul.f32 %v1177, %v1186
        %v1189 = vadd.f32 %v1150, %v1187
        %v1190 = vadd.f32 %v1151, %v1188
        %1191 = vset.pattern.permute.xlu0 1
        %1192 = vperm.xlu0 %1191, %v1173
        %v1193 = vpop.permute.xlu0 %1192
        %v1195 = vlaneseq
        %v1196 = vshrl.u32 %v1195, 7
        %v1197 = vsub.s32 1, %v1196
        %v1198 = vrot.slane %v1170, %v1197
        %v1199 = vlaneseq
        %v1200 = vshrl.u32 %v1199, 7
        %v1201 = vsub.s32 1, %v1200
        %v1202 = vrot.slane %v1171, %v1201
        %v1203 = vmul.f32 %v1193, %v1198
        %v1204 = vmul.f32 %v1193, %v1202
        %v1205 = vadd.f32 %v1189, %v1203
        %v1206 = vadd.f32 %v1190, %v1204
        %1207 = vset.pattern.permute.xlu0 2
        %1208 = vperm.xlu0 %1207, %v1173
        %v1209 = vpop.permute.xlu0 %1208
        %v1211 = vlaneseq
        %v1212 = vshrl.u32 %v1211, 7
        %v1213 = vsub.s32 2, %v1212
        %v1214 = vrot.slane %v1170, %v1213
        %v1215 = vlaneseq
        %v1216 = vshrl.u32 %v1215, 7
        %v1217 = vsub.s32 2, %v1216
        %v1218 = vrot.slane %v1171, %v1217
        %v1219 = vmul.f32 %v1209, %v1214
        %v1220 = vmul.f32 %v1209, %v1218
        %v1221 = vadd.f32 %v1205, %v1219
        %v1222 = vadd.f32 %v1206, %v1220
        %1223 = vset.pattern.permute.xlu0 3
        %1224 = vperm.xlu0 %1223, %v1173
        %v1225 = vpop.permute.xlu0 %1224
        %v1227 = vlaneseq
        %v1228 = vshrl.u32 %v1227, 7
        %v1229 = vsub.s32 3, %v1228
        %v1230 = vrot.slane %v1170, %v1229
        %v1231 = vlaneseq
        %v1232 = vshrl.u32 %v1231, 7
        %v1233 = vsub.s32 3, %v1232
        %v1234 = vrot.slane %v1171, %v1233
        %v1235 = vmul.f32 %v1225, %v1230
        %v1236 = vmul.f32 %v1225, %v1234
        %v1237 = vadd.f32 %v1221, %v1235
        %v1238 = vadd.f32 %v1222, %v1236
        %1239 = vrot.lane.b32.xlu0 %v466, 111
        %v1240 = vpop.permute.xlu0 %1239
        %1241 = vrot.lane.b32.xlu0 %v483, 111
        %v1242 = vpop.permute.xlu0 %1241
        %vm1243 = vcmp.lt.s32.totalorder %v527, 111
        %v1244 = vsel %vm1243, %v1240, %v1242
        %v1245 = vsel %vm1243, %v1242, %v1240
        %v1247 = vlaneseq
        %v1248 = vshrl.u32 %v1247, 7
        %v1249 = vsub.s32 0, %v1248
        %v1250 = vrot.slane %v481, %v1249
        %v1251 = vlaneseq
        %v1252 = vshrl.u32 %v1251, 7
        %v1253 = vsub.s32 1, %v1252
        %v1254 = vrot.slane %v481, %v1253
        %v1257 = vmul.f32 %v1244, %v1250
        %v1258 = vmul.f32 %v1245, %v1254
        %s1259 = scalar_lea.vmem %s2, 32
        %v1260 = vld [vmem:[%s1259] sm:$0xf]
        %1262 = vset.pattern.permute.xlu0 0
        %1263 = vperm.xlu0 %1262, %v1260
        %v1264 = vpop.permute.xlu0 %1263
        %v1266 = vlaneseq
        %v1267 = vshrl.u32 %v1266, 7
        %v1268 = vsub.s32 0, %v1267
        %v1269 = vrot.slane %v1257, %v1268
        %v1270 = vlaneseq
        %v1271 = vshrl.u32 %v1270, 7
        %v1272 = vsub.s32 0, %v1271
        %v1273 = vrot.slane %v1258, %v1272
        %v1274 = vmul.f32 %v1264, %v1269
        %v1275 = vmul.f32 %v1264, %v1273
        %v1276 = vadd.f32 %v1237, %v1274
        %v1277 = vadd.f32 %v1238, %v1275
        %1278 = vset.pattern.permute.xlu0 1
        %1279 = vperm.xlu0 %1278, %v1260
        %v1280 = vpop.permute.xlu0 %1279
        %v1282 = vlaneseq
        %v1283 = vshrl.u32 %v1282, 7
        %v1284 = vsub.s32 1, %v1283
        %v1285 = vrot.slane %v1257, %v1284
        %v1286 = vlaneseq
        %v1287 = vshrl.u32 %v1286, 7
        %v1288 = vsub.s32 1, %v1287
        %v1289 = vrot.slane %v1258, %v1288
        %v1290 = vmul.f32 %v1280, %v1285
        %v1291 = vmul.f32 %v1280, %v1289
        %v1292 = vadd.f32 %v1276, %v1290
        %v1293 = vadd.f32 %v1277, %v1291
        %1294 = vset.pattern.permute.xlu0 2
        %1295 = vperm.xlu0 %1294, %v1260
        %v1296 = vpop.permute.xlu0 %1295
        %v1298 = vlaneseq
        %v1299 = vshrl.u32 %v1298, 7
        %v1300 = vsub.s32 2, %v1299
        %v1301 = vrot.slane %v1257, %v1300
        %v1302 = vlaneseq
        %v1303 = vshrl.u32 %v1302, 7
        %v1304 = vsub.s32 2, %v1303
        %v1305 = vrot.slane %v1258, %v1304
        %v1306 = vmul.f32 %v1296, %v1301
        %v1307 = vmul.f32 %v1296, %v1305
        %v1308 = vadd.f32 %v1292, %v1306
        %v1309 = vadd.f32 %v1293, %v1307
        %1310 = vset.pattern.permute.xlu0 3
        %1311 = vperm.xlu0 %1310, %v1260
        %v1312 = vpop.permute.xlu0 %1311
        %v1314 = vlaneseq
        %v1315 = vshrl.u32 %v1314, 7
        %v1316 = vsub.s32 3, %v1315
        %v1317 = vrot.slane %v1257, %v1316
        %v1318 = vlaneseq
        %v1319 = vshrl.u32 %v1318, 7
        %v1320 = vsub.s32 3, %v1319
        %v1321 = vrot.slane %v1258, %v1320
        %v1322 = vmul.f32 %v1312, %v1317
        %v1323 = vmul.f32 %v1312, %v1321
        %v1324 = vadd.f32 %v1308, %v1322
        %v1325 = vadd.f32 %v1309, %v1323
        %v1326 = vld [vmem:[%s6] sm:$0xf]
        %v1327 = vld [vmem:[%s7] sm:$0xf]
        %v1328 = vsel %vm485, %v1324, 0.0
        %v1329 = vsel %vm485, %v1325, 0.0
        %v1330 = vadd.f32 %v1328, %v1329
        %1331 = vadd.xlane.f32.xlu0 %v1330
        %v1332 = vpop.xlane.xlu0 %1331
        %v1333 = vmul.f32 %v1332, 0.00390625
        %v1334 = vmul.f32 %v1324, %v1324
        %v1335 = vmul.f32 %v1325, %v1325
        %v1336 = vsel %vm485, %v1334, 0.0
        %v1337 = vsel %vm485, %v1335, 0.0
        %v1338 = vadd.f32 %v1336, %v1337
        %1339 = vadd.xlane.f32.xlu0 %v1338
        %v1340 = vpop.xlane.xlu0 %1339
        %v1341 = vmul.f32 %v1340, 0.00390625
        %v1342 = vmul.f32 %v1333, %v1333
        %v1343 = vsub.f32 %v1341, %v1342
        %v1344 = vadd.f32 %v1343, 1e-05
        %v1345 = vrsqrt.pop %v1344
        %v1346 = vsub.f32 %v1324, %v1333
        %v1347 = vsub.f32 %v1325, %v1333
        %v1348 = vmul.f32 %v1326, %v1345
        %1350 = vset.pattern.permute.xlu0 0
        %1351 = vperm.xlu0 %1350, %v1348
        %v1352 = vpop.permute.xlu0 %1351
        %v1354 = vmul.f32 %v1346, %v1352
        %v1355 = vmul.f32 %v1347, %v1352
        %1357 = vset.pattern.permute.xlu0 0
        %1358 = vperm.xlu0 %1357, %v1327
        %v1359 = vpop.permute.xlu0 %1358
        %v1361 = vadd.f32 %v1354, %v1359
        %v1362 = vadd.f32 %v1355, %v1359
        %v1363 = vtanh.pop %v1361
        %v1364 = vtanh.pop %v1362
        %1365 = vrot.lane.b32.xlu0 %v1363, 17
        %v1366 = vpop.permute.xlu0 %1365
        %1367 = vrot.lane.b32.xlu0 %v1364, 17
        %v1368 = vpop.permute.xlu0 %1367
        %v1369 = vsel %vm528, %v1366, %v1368
        %v1370 = vsel %vm528, %v1368, %v1366
        %v1371 = vmul.f32 %v1370, %v535
        %v1372 = vmul.f32 %v1369, %v539
        %v1373 = vld [vmem:[%s3] sm:$0xf]
        %1375 = vset.pattern.permute.xlu0 0
        %1376 = vperm.xlu0 %1375, %v1373
        %v1377 = vpop.permute.xlu0 %1376
        %v1379 = vlaneseq
        %v1380 = vshrl.u32 %v1379, 7
        %v1381 = vsub.s32 0, %v1380
        %v1382 = vrot.slane %v1371, %v1381
        %v1383 = vlaneseq
        %v1384 = vshrl.u32 %v1383, 7
        %v1385 = vsub.s32 0, %v1384
        %v1386 = vrot.slane %v1372, %v1385
        %v1387 = vmul.f32 %v1377, %v1382
        %v1388 = vmul.f32 %v1377, %v1386
        %v1389 = vadd.f32 %v1387, 0.0
        %v1390 = vadd.f32 %v1388, 0.0
        %1391 = vset.pattern.permute.xlu0 1
        %1392 = vperm.xlu0 %1391, %v1373
        %v1393 = vpop.permute.xlu0 %1392
        %v1395 = vlaneseq
        %v1396 = vshrl.u32 %v1395, 7
        %v1397 = vsub.s32 1, %v1396
        %v1398 = vrot.slane %v1371, %v1397
        %v1399 = vlaneseq
        %v1400 = vshrl.u32 %v1399, 7
        %v1401 = vsub.s32 1, %v1400
        %v1402 = vrot.slane %v1372, %v1401
        %v1403 = vmul.f32 %v1393, %v1398
        %v1404 = vmul.f32 %v1393, %v1402
        %v1405 = vadd.f32 %v1389, %v1403
        %v1406 = vadd.f32 %v1390, %v1404
        %1407 = vset.pattern.permute.xlu0 2
        %1408 = vperm.xlu0 %1407, %v1373
        %v1409 = vpop.permute.xlu0 %1408
        %v1411 = vlaneseq
        %v1412 = vshrl.u32 %v1411, 7
        %v1413 = vsub.s32 2, %v1412
        %v1414 = vrot.slane %v1371, %v1413
        %v1415 = vlaneseq
        %v1416 = vshrl.u32 %v1415, 7
        %v1417 = vsub.s32 2, %v1416
        %v1418 = vrot.slane %v1372, %v1417
        %v1419 = vmul.f32 %v1409, %v1414
        %v1420 = vmul.f32 %v1409, %v1418
        %v1421 = vadd.f32 %v1405, %v1419
        %v1422 = vadd.f32 %v1406, %v1420
        %1423 = vset.pattern.permute.xlu0 3
        %1424 = vperm.xlu0 %1423, %v1373
        %v1425 = vpop.permute.xlu0 %1424
        %v1427 = vlaneseq
        %v1428 = vshrl.u32 %v1427, 7
        %v1429 = vsub.s32 3, %v1428
        %v1430 = vrot.slane %v1371, %v1429
        %v1431 = vlaneseq
        %v1432 = vshrl.u32 %v1431, 7
        %v1433 = vsub.s32 3, %v1432
        %v1434 = vrot.slane %v1372, %v1433
        %v1435 = vmul.f32 %v1425, %v1430
        %v1436 = vmul.f32 %v1425, %v1434
        %v1437 = vadd.f32 %v1421, %v1435
        %v1438 = vadd.f32 %v1422, %v1436
        %1439 = vrot.lane.b32.xlu0 %v1363, 16
        %v1440 = vpop.permute.xlu0 %1439
        %1441 = vrot.lane.b32.xlu0 %v1364, 16
        %v1442 = vpop.permute.xlu0 %1441
        %v1443 = vsel %vm614, %v1440, %v1442
        %v1444 = vsel %vm614, %v1442, %v1440
        %v1445 = vmul.f32 %v1444, %v621
        %v1446 = vmul.f32 %v1443, %v625
        %s1447 = scalar_lea.vmem %s3, 4
        %v1448 = vld [vmem:[%s1447] sm:$0xf]
        %1450 = vset.pattern.permute.xlu0 0
        %1451 = vperm.xlu0 %1450, %v1448
        %v1452 = vpop.permute.xlu0 %1451
        %v1454 = vlaneseq
        %v1455 = vshrl.u32 %v1454, 7
        %v1456 = vsub.s32 0, %v1455
        %v1457 = vrot.slane %v1445, %v1456
        %v1458 = vlaneseq
        %v1459 = vshrl.u32 %v1458, 7
        %v1460 = vsub.s32 0, %v1459
        %v1461 = vrot.slane %v1446, %v1460
        %v1462 = vmul.f32 %v1452, %v1457
        %v1463 = vmul.f32 %v1452, %v1461
        %v1464 = vadd.f32 %v1437, %v1462
        %v1465 = vadd.f32 %v1438, %v1463
        %1466 = vset.pattern.permute.xlu0 1
        %1467 = vperm.xlu0 %1466, %v1448
        %v1468 = vpop.permute.xlu0 %1467
        %v1470 = vlaneseq
        %v1471 = vshrl.u32 %v1470, 7
        %v1472 = vsub.s32 1, %v1471
        %v1473 = vrot.slane %v1445, %v1472
        %v1474 = vlaneseq
        %v1475 = vshrl.u32 %v1474, 7
        %v1476 = vsub.s32 1, %v1475
        %v1477 = vrot.slane %v1446, %v1476
        %v1478 = vmul.f32 %v1468, %v1473
        %v1479 = vmul.f32 %v1468, %v1477
        %v1480 = vadd.f32 %v1464, %v1478
        %v1481 = vadd.f32 %v1465, %v1479
        %1482 = vset.pattern.permute.xlu0 2
        %1483 = vperm.xlu0 %1482, %v1448
        %v1484 = vpop.permute.xlu0 %1483
        %v1486 = vlaneseq
        %v1487 = vshrl.u32 %v1486, 7
        %v1488 = vsub.s32 2, %v1487
        %v1489 = vrot.slane %v1445, %v1488
        %v1490 = vlaneseq
        %v1491 = vshrl.u32 %v1490, 7
        %v1492 = vsub.s32 2, %v1491
        %v1493 = vrot.slane %v1446, %v1492
        %v1494 = vmul.f32 %v1484, %v1489
        %v1495 = vmul.f32 %v1484, %v1493
        %v1496 = vadd.f32 %v1480, %v1494
        %v1497 = vadd.f32 %v1481, %v1495
        %1498 = vset.pattern.permute.xlu0 3
        %1499 = vperm.xlu0 %1498, %v1448
        %v1500 = vpop.permute.xlu0 %1499
        %v1502 = vlaneseq
        %v1503 = vshrl.u32 %v1502, 7
        %v1504 = vsub.s32 3, %v1503
        %v1505 = vrot.slane %v1445, %v1504
        %v1506 = vlaneseq
        %v1507 = vshrl.u32 %v1506, 7
        %v1508 = vsub.s32 3, %v1507
        %v1509 = vrot.slane %v1446, %v1508
        %v1510 = vmul.f32 %v1500, %v1505
        %v1511 = vmul.f32 %v1500, %v1509
        %v1512 = vadd.f32 %v1496, %v1510
        %v1513 = vadd.f32 %v1497, %v1511
        %1514 = vrot.lane.b32.xlu0 %v1363, 15
        %v1515 = vpop.permute.xlu0 %1514
        %1516 = vrot.lane.b32.xlu0 %v1364, 15
        %v1517 = vpop.permute.xlu0 %1516
        %v1518 = vsel %vm701, %v1515, %v1517
        %v1519 = vsel %vm701, %v1517, %v1515
        %v1520 = vmul.f32 %v1519, %v708
        %v1521 = vmul.f32 %v1518, %v712
        %s1522 = scalar_lea.vmem %s3, 8
        %v1523 = vld [vmem:[%s1522] sm:$0xf]
        %1525 = vset.pattern.permute.xlu0 0
        %1526 = vperm.xlu0 %1525, %v1523
        %v1527 = vpop.permute.xlu0 %1526
        %v1529 = vlaneseq
        %v1530 = vshrl.u32 %v1529, 7
        %v1531 = vsub.s32 0, %v1530
        %v1532 = vrot.slane %v1520, %v1531
        %v1533 = vlaneseq
        %v1534 = vshrl.u32 %v1533, 7
        %v1535 = vsub.s32 0, %v1534
        %v1536 = vrot.slane %v1521, %v1535
        %v1537 = vmul.f32 %v1527, %v1532
        %v1538 = vmul.f32 %v1527, %v1536
        %v1539 = vadd.f32 %v1512, %v1537
        %v1540 = vadd.f32 %v1513, %v1538
        %1541 = vset.pattern.permute.xlu0 1
        %1542 = vperm.xlu0 %1541, %v1523
        %v1543 = vpop.permute.xlu0 %1542
        %v1545 = vlaneseq
        %v1546 = vshrl.u32 %v1545, 7
        %v1547 = vsub.s32 1, %v1546
        %v1548 = vrot.slane %v1520, %v1547
        %v1549 = vlaneseq
        %v1550 = vshrl.u32 %v1549, 7
        %v1551 = vsub.s32 1, %v1550
        %v1552 = vrot.slane %v1521, %v1551
        %v1553 = vmul.f32 %v1543, %v1548
        %v1554 = vmul.f32 %v1543, %v1552
        %v1555 = vadd.f32 %v1539, %v1553
        %v1556 = vadd.f32 %v1540, %v1554
        %1557 = vset.pattern.permute.xlu0 2
        %1558 = vperm.xlu0 %1557, %v1523
        %v1559 = vpop.permute.xlu0 %1558
        %v1561 = vlaneseq
        %v1562 = vshrl.u32 %v1561, 7
        %v1563 = vsub.s32 2, %v1562
        %v1564 = vrot.slane %v1520, %v1563
        %v1565 = vlaneseq
        %v1566 = vshrl.u32 %v1565, 7
        %v1567 = vsub.s32 2, %v1566
        %v1568 = vrot.slane %v1521, %v1567
        %v1569 = vmul.f32 %v1559, %v1564
        %v1570 = vmul.f32 %v1559, %v1568
        %v1571 = vadd.f32 %v1555, %v1569
        %v1572 = vadd.f32 %v1556, %v1570
        %1573 = vset.pattern.permute.xlu0 3
        %1574 = vperm.xlu0 %1573, %v1523
        %v1575 = vpop.permute.xlu0 %1574
        %v1577 = vlaneseq
        %v1578 = vshrl.u32 %v1577, 7
        %v1579 = vsub.s32 3, %v1578
        %v1580 = vrot.slane %v1520, %v1579
        %v1581 = vlaneseq
        %v1582 = vshrl.u32 %v1581, 7
        %v1583 = vsub.s32 3, %v1582
        %v1584 = vrot.slane %v1521, %v1583
        %v1585 = vmul.f32 %v1575, %v1580
        %v1586 = vmul.f32 %v1575, %v1584
        %v1587 = vadd.f32 %v1571, %v1585
        %v1588 = vadd.f32 %v1572, %v1586
        %1589 = vrot.lane.b32.xlu0 %v1363, 1
        %v1590 = vpop.permute.xlu0 %1589
        %1591 = vrot.lane.b32.xlu0 %v1364, 1
        %v1592 = vpop.permute.xlu0 %1591
        %v1593 = vsel %vm788, %v1590, %v1592
        %v1594 = vsel %vm788, %v1592, %v1590
        %v1595 = vmul.f32 %v1594, %v795
        %v1596 = vmul.f32 %v1593, %v799
        %s1597 = scalar_lea.vmem %s3, 12
        %v1598 = vld [vmem:[%s1597] sm:$0xf]
        %1600 = vset.pattern.permute.xlu0 0
        %1601 = vperm.xlu0 %1600, %v1598
        %v1602 = vpop.permute.xlu0 %1601
        %v1604 = vlaneseq
        %v1605 = vshrl.u32 %v1604, 7
        %v1606 = vsub.s32 0, %v1605
        %v1607 = vrot.slane %v1595, %v1606
        %v1608 = vlaneseq
        %v1609 = vshrl.u32 %v1608, 7
        %v1610 = vsub.s32 0, %v1609
        %v1611 = vrot.slane %v1596, %v1610
        %v1612 = vmul.f32 %v1602, %v1607
        %v1613 = vmul.f32 %v1602, %v1611
        %v1614 = vadd.f32 %v1587, %v1612
        %v1615 = vadd.f32 %v1588, %v1613
        %1616 = vset.pattern.permute.xlu0 1
        %1617 = vperm.xlu0 %1616, %v1598
        %v1618 = vpop.permute.xlu0 %1617
        %v1620 = vlaneseq
        %v1621 = vshrl.u32 %v1620, 7
        %v1622 = vsub.s32 1, %v1621
        %v1623 = vrot.slane %v1595, %v1622
        %v1624 = vlaneseq
        %v1625 = vshrl.u32 %v1624, 7
        %v1626 = vsub.s32 1, %v1625
        %v1627 = vrot.slane %v1596, %v1626
        %v1628 = vmul.f32 %v1618, %v1623
        %v1629 = vmul.f32 %v1618, %v1627
        %v1630 = vadd.f32 %v1614, %v1628
        %v1631 = vadd.f32 %v1615, %v1629
        %1632 = vset.pattern.permute.xlu0 2
        %1633 = vperm.xlu0 %1632, %v1598
        %v1634 = vpop.permute.xlu0 %1633
        %v1636 = vlaneseq
        %v1637 = vshrl.u32 %v1636, 7
        %v1638 = vsub.s32 2, %v1637
        %v1639 = vrot.slane %v1595, %v1638
        %v1640 = vlaneseq
        %v1641 = vshrl.u32 %v1640, 7
        %v1642 = vsub.s32 2, %v1641
        %v1643 = vrot.slane %v1596, %v1642
        %v1644 = vmul.f32 %v1634, %v1639
        %v1645 = vmul.f32 %v1634, %v1643
        %v1646 = vadd.f32 %v1630, %v1644
        %v1647 = vadd.f32 %v1631, %v1645
        %1648 = vset.pattern.permute.xlu0 3
        %1649 = vperm.xlu0 %1648, %v1598
        %v1650 = vpop.permute.xlu0 %1649
        %v1652 = vlaneseq
        %v1653 = vshrl.u32 %v1652, 7
        %v1654 = vsub.s32 3, %v1653
        %v1655 = vrot.slane %v1595, %v1654
        %v1656 = vlaneseq
        %v1657 = vshrl.u32 %v1656, 7
        %v1658 = vsub.s32 3, %v1657
        %v1659 = vrot.slane %v1596, %v1658
        %v1660 = vmul.f32 %v1650, %v1655
        %v1661 = vmul.f32 %v1650, %v1659
        %v1662 = vadd.f32 %v1646, %v1660
        %v1663 = vadd.f32 %v1647, %v1661
        %s1664 = scalar_lea.vmem %s3, 16
        %v1665 = vld [vmem:[%s1664] sm:$0xf]
        %1667 = vset.pattern.permute.xlu0 0
        %1668 = vperm.xlu0 %1667, %v1665
        %v1669 = vpop.permute.xlu0 %1668
        %v1671 = vlaneseq
        %v1672 = vshrl.u32 %v1671, 7
        %v1673 = vsub.s32 0, %v1672
        %v1674 = vrot.slane %v1363, %v1673
        %v1675 = vlaneseq
        %v1676 = vshrl.u32 %v1675, 7
        %v1677 = vsub.s32 0, %v1676
        %v1678 = vrot.slane %v1364, %v1677
        %v1679 = vmul.f32 %v1669, %v1674
        %v1680 = vmul.f32 %v1669, %v1678
        %v1681 = vadd.f32 %v1662, %v1679
        %v1682 = vadd.f32 %v1663, %v1680
        %1683 = vset.pattern.permute.xlu0 1
        %1684 = vperm.xlu0 %1683, %v1665
        %v1685 = vpop.permute.xlu0 %1684
        %v1687 = vlaneseq
        %v1688 = vshrl.u32 %v1687, 7
        %v1689 = vsub.s32 1, %v1688
        %v1690 = vrot.slane %v1363, %v1689
        %v1691 = vlaneseq
        %v1692 = vshrl.u32 %v1691, 7
        %v1693 = vsub.s32 1, %v1692
        %v1694 = vrot.slane %v1364, %v1693
        %v1695 = vmul.f32 %v1685, %v1690
        %v1696 = vmul.f32 %v1685, %v1694
        %v1697 = vadd.f32 %v1681, %v1695
        %v1698 = vadd.f32 %v1682, %v1696
        %1699 = vset.pattern.permute.xlu0 2
        %1700 = vperm.xlu0 %1699, %v1665
        %v1701 = vpop.permute.xlu0 %1700
        %v1703 = vlaneseq
        %v1704 = vshrl.u32 %v1703, 7
        %v1705 = vsub.s32 2, %v1704
        %v1706 = vrot.slane %v1363, %v1705
        %v1707 = vlaneseq
        %v1708 = vshrl.u32 %v1707, 7
        %v1709 = vsub.s32 2, %v1708
        %v1710 = vrot.slane %v1364, %v1709
        %v1711 = vmul.f32 %v1701, %v1706
        %v1712 = vmul.f32 %v1701, %v1710
        %v1713 = vadd.f32 %v1697, %v1711
        %v1714 = vadd.f32 %v1698, %v1712
        %1715 = vset.pattern.permute.xlu0 3
        %1716 = vperm.xlu0 %1715, %v1665
        %v1717 = vpop.permute.xlu0 %1716
        %v1719 = vlaneseq
        %v1720 = vshrl.u32 %v1719, 7
        %v1721 = vsub.s32 3, %v1720
        %v1722 = vrot.slane %v1363, %v1721
        %v1723 = vlaneseq
        %v1724 = vshrl.u32 %v1723, 7
        %v1725 = vsub.s32 3, %v1724
        %v1726 = vrot.slane %v1364, %v1725
        %v1727 = vmul.f32 %v1717, %v1722
        %v1728 = vmul.f32 %v1717, %v1726
        %v1729 = vadd.f32 %v1713, %v1727
        %v1730 = vadd.f32 %v1714, %v1728
        %1731 = vrot.lane.b32.xlu0 %v1363, 127
        %v1732 = vpop.permute.xlu0 %1731
        %1733 = vrot.lane.b32.xlu0 %v1364, 127
        %v1734 = vpop.permute.xlu0 %1733
        %v1735 = vsel %vm982, %v1732, %v1734
        %v1736 = vsel %vm982, %v1734, %v1732
        %v1737 = vmul.f32 %v1735, %v989
        %v1738 = vmul.f32 %v1736, %v993
        %s1739 = scalar_lea.vmem %s3, 20
        %v1740 = vld [vmem:[%s1739] sm:$0xf]
        %1742 = vset.pattern.permute.xlu0 0
        %1743 = vperm.xlu0 %1742, %v1740
        %v1744 = vpop.permute.xlu0 %1743
        %v1746 = vlaneseq
        %v1747 = vshrl.u32 %v1746, 7
        %v1748 = vsub.s32 0, %v1747
        %v1749 = vrot.slane %v1737, %v1748
        %v1750 = vlaneseq
        %v1751 = vshrl.u32 %v1750, 7
        %v1752 = vsub.s32 0, %v1751
        %v1753 = vrot.slane %v1738, %v1752
        %v1754 = vmul.f32 %v1744, %v1749
        %v1755 = vmul.f32 %v1744, %v1753
        %v1756 = vadd.f32 %v1729, %v1754
        %v1757 = vadd.f32 %v1730, %v1755
        %1758 = vset.pattern.permute.xlu0 1
        %1759 = vperm.xlu0 %1758, %v1740
        %v1760 = vpop.permute.xlu0 %1759
        %v1762 = vlaneseq
        %v1763 = vshrl.u32 %v1762, 7
        %v1764 = vsub.s32 1, %v1763
        %v1765 = vrot.slane %v1737, %v1764
        %v1766 = vlaneseq
        %v1767 = vshrl.u32 %v1766, 7
        %v1768 = vsub.s32 1, %v1767
        %v1769 = vrot.slane %v1738, %v1768
        %v1770 = vmul.f32 %v1760, %v1765
        %v1771 = vmul.f32 %v1760, %v1769
        %v1772 = vadd.f32 %v1756, %v1770
        %v1773 = vadd.f32 %v1757, %v1771
        %1774 = vset.pattern.permute.xlu0 2
        %1775 = vperm.xlu0 %1774, %v1740
        %v1776 = vpop.permute.xlu0 %1775
        %v1778 = vlaneseq
        %v1779 = vshrl.u32 %v1778, 7
        %v1780 = vsub.s32 2, %v1779
        %v1781 = vrot.slane %v1737, %v1780
        %v1782 = vlaneseq
        %v1783 = vshrl.u32 %v1782, 7
        %v1784 = vsub.s32 2, %v1783
        %v1785 = vrot.slane %v1738, %v1784
        %v1786 = vmul.f32 %v1776, %v1781
        %v1787 = vmul.f32 %v1776, %v1785
        %v1788 = vadd.f32 %v1772, %v1786
        %v1789 = vadd.f32 %v1773, %v1787
        %1790 = vset.pattern.permute.xlu0 3
        %1791 = vperm.xlu0 %1790, %v1740
        %v1792 = vpop.permute.xlu0 %1791
        %v1794 = vlaneseq
        %v1795 = vshrl.u32 %v1794, 7
        %v1796 = vsub.s32 3, %v1795
        %v1797 = vrot.slane %v1737, %v1796
        %v1798 = vlaneseq
        %v1799 = vshrl.u32 %v1798, 7
        %v1800 = vsub.s32 3, %v1799
        %v1801 = vrot.slane %v1738, %v1800
        %v1802 = vmul.f32 %v1792, %v1797
        %v1803 = vmul.f32 %v1792, %v1801
        %v1804 = vadd.f32 %v1788, %v1802
        %v1805 = vadd.f32 %v1789, %v1803
        %1806 = vrot.lane.b32.xlu0 %v1363, 113
        %v1807 = vpop.permute.xlu0 %1806
        %1808 = vrot.lane.b32.xlu0 %v1364, 113
        %v1809 = vpop.permute.xlu0 %1808
        %v1810 = vsel %vm1069, %v1807, %v1809
        %v1811 = vsel %vm1069, %v1809, %v1807
        %v1812 = vmul.f32 %v1810, %v1076
        %v1813 = vmul.f32 %v1811, %v1080
        %s1814 = scalar_lea.vmem %s3, 24
        %v1815 = vld [vmem:[%s1814] sm:$0xf]
        %1817 = vset.pattern.permute.xlu0 0
        %1818 = vperm.xlu0 %1817, %v1815
        %v1819 = vpop.permute.xlu0 %1818
        %v1821 = vlaneseq
        %v1822 = vshrl.u32 %v1821, 7
        %v1823 = vsub.s32 0, %v1822
        %v1824 = vrot.slane %v1812, %v1823
        %v1825 = vlaneseq
        %v1826 = vshrl.u32 %v1825, 7
        %v1827 = vsub.s32 0, %v1826
        %v1828 = vrot.slane %v1813, %v1827
        %v1829 = vmul.f32 %v1819, %v1824
        %v1830 = vmul.f32 %v1819, %v1828
        %v1831 = vadd.f32 %v1804, %v1829
        %v1832 = vadd.f32 %v1805, %v1830
        %1833 = vset.pattern.permute.xlu0 1
        %1834 = vperm.xlu0 %1833, %v1815
        %v1835 = vpop.permute.xlu0 %1834
        %v1837 = vlaneseq
        %v1838 = vshrl.u32 %v1837, 7
        %v1839 = vsub.s32 1, %v1838
        %v1840 = vrot.slane %v1812, %v1839
        %v1841 = vlaneseq
        %v1842 = vshrl.u32 %v1841, 7
        %v1843 = vsub.s32 1, %v1842
        %v1844 = vrot.slane %v1813, %v1843
        %v1845 = vmul.f32 %v1835, %v1840
        %v1846 = vmul.f32 %v1835, %v1844
        %v1847 = vadd.f32 %v1831, %v1845
        %v1848 = vadd.f32 %v1832, %v1846
        %1849 = vset.pattern.permute.xlu0 2
        %1850 = vperm.xlu0 %1849, %v1815
        %v1851 = vpop.permute.xlu0 %1850
        %v1853 = vlaneseq
        %v1854 = vshrl.u32 %v1853, 7
        %v1855 = vsub.s32 2, %v1854
        %v1856 = vrot.slane %v1812, %v1855
        %v1857 = vlaneseq
        %v1858 = vshrl.u32 %v1857, 7
        %v1859 = vsub.s32 2, %v1858
        %v1860 = vrot.slane %v1813, %v1859
        %v1861 = vmul.f32 %v1851, %v1856
        %v1862 = vmul.f32 %v1851, %v1860
        %v1863 = vadd.f32 %v1847, %v1861
        %v1864 = vadd.f32 %v1848, %v1862
        %1865 = vset.pattern.permute.xlu0 3
        %1866 = vperm.xlu0 %1865, %v1815
        %v1867 = vpop.permute.xlu0 %1866
        %v1869 = vlaneseq
        %v1870 = vshrl.u32 %v1869, 7
        %v1871 = vsub.s32 3, %v1870
        %v1872 = vrot.slane %v1812, %v1871
        %v1873 = vlaneseq
        %v1874 = vshrl.u32 %v1873, 7
        %v1875 = vsub.s32 3, %v1874
        %v1876 = vrot.slane %v1813, %v1875
        %v1877 = vmul.f32 %v1867, %v1872
        %v1878 = vmul.f32 %v1867, %v1876
        %v1879 = vadd.f32 %v1863, %v1877
        %v1880 = vadd.f32 %v1864, %v1878
        %1881 = vrot.lane.b32.xlu0 %v1363, 112
        %v1882 = vpop.permute.xlu0 %1881
        %1883 = vrot.lane.b32.xlu0 %v1364, 112
        %v1884 = vpop.permute.xlu0 %1883
        %v1885 = vsel %vm1156, %v1882, %v1884
        %v1886 = vsel %vm1156, %v1884, %v1882
        %v1887 = vmul.f32 %v1885, %v1163
        %v1888 = vmul.f32 %v1886, %v1167
        %s1889 = scalar_lea.vmem %s3, 28
        %v1890 = vld [vmem:[%s1889] sm:$0xf]
        %1892 = vset.pattern.permute.xlu0 0
        %1893 = vperm.xlu0 %1892, %v1890
        %v1894 = vpop.permute.xlu0 %1893
        %v1896 = vlaneseq
        %v1897 = vshrl.u32 %v1896, 7
        %v1898 = vsub.s32 0, %v1897
        %v1899 = vrot.slane %v1887, %v1898
        %v1900 = vlaneseq
        %v1901 = vshrl.u32 %v1900, 7
        %v1902 = vsub.s32 0, %v1901
        %v1903 = vrot.slane %v1888, %v1902
        %v1904 = vmul.f32 %v1894, %v1899
        %v1905 = vmul.f32 %v1894, %v1903
        %v1906 = vadd.f32 %v1879, %v1904
        %v1907 = vadd.f32 %v1880, %v1905
        %1908 = vset.pattern.permute.xlu0 1
        %1909 = vperm.xlu0 %1908, %v1890
        %v1910 = vpop.permute.xlu0 %1909
        %v1912 = vlaneseq
        %v1913 = vshrl.u32 %v1912, 7
        %v1914 = vsub.s32 1, %v1913
        %v1915 = vrot.slane %v1887, %v1914
        %v1916 = vlaneseq
        %v1917 = vshrl.u32 %v1916, 7
        %v1918 = vsub.s32 1, %v1917
        %v1919 = vrot.slane %v1888, %v1918
        %v1920 = vmul.f32 %v1910, %v1915
        %v1921 = vmul.f32 %v1910, %v1919
        %v1922 = vadd.f32 %v1906, %v1920
        %v1923 = vadd.f32 %v1907, %v1921
        %1924 = vset.pattern.permute.xlu0 2
        %1925 = vperm.xlu0 %1924, %v1890
        %v1926 = vpop.permute.xlu0 %1925
        %v1928 = vlaneseq
        %v1929 = vshrl.u32 %v1928, 7
        %v1930 = vsub.s32 2, %v1929
        %v1931 = vrot.slane %v1887, %v1930
        %v1932 = vlaneseq
        %v1933 = vshrl.u32 %v1932, 7
        %v1934 = vsub.s32 2, %v1933
        %v1935 = vrot.slane %v1888, %v1934
        %v1936 = vmul.f32 %v1926, %v1931
        %v1937 = vmul.f32 %v1926, %v1935
        %v1938 = vadd.f32 %v1922, %v1936
        %v1939 = vadd.f32 %v1923, %v1937
        %1940 = vset.pattern.permute.xlu0 3
        %1941 = vperm.xlu0 %1940, %v1890
        %v1942 = vpop.permute.xlu0 %1941
        %v1944 = vlaneseq
        %v1945 = vshrl.u32 %v1944, 7
        %v1946 = vsub.s32 3, %v1945
        %v1947 = vrot.slane %v1887, %v1946
        %v1948 = vlaneseq
        %v1949 = vshrl.u32 %v1948, 7
        %v1950 = vsub.s32 3, %v1949
        %v1951 = vrot.slane %v1888, %v1950
        %v1952 = vmul.f32 %v1942, %v1947
        %v1953 = vmul.f32 %v1942, %v1951
        %v1954 = vadd.f32 %v1938, %v1952
        %v1955 = vadd.f32 %v1939, %v1953
        %1956 = vrot.lane.b32.xlu0 %v1363, 111
        %v1957 = vpop.permute.xlu0 %1956
        %1958 = vrot.lane.b32.xlu0 %v1364, 111
        %v1959 = vpop.permute.xlu0 %1958
        %v1960 = vsel %vm1243, %v1957, %v1959
        %v1961 = vsel %vm1243, %v1959, %v1957
        %v1962 = vmul.f32 %v1960, %v1250
        %v1963 = vmul.f32 %v1961, %v1254
        %s1964 = scalar_lea.vmem %s3, 32
        %v1965 = vld [vmem:[%s1964] sm:$0xf]
        %1967 = vset.pattern.permute.xlu0 0
        %1968 = vperm.xlu0 %1967, %v1965
        %v1969 = vpop.permute.xlu0 %1968
        %v1971 = vlaneseq
        %v1972 = vshrl.u32 %v1971, 7
        %v1973 = vsub.s32 0, %v1972
        %v1974 = vrot.slane %v1962, %v1973
        %v1975 = vlaneseq
        %v1976 = vshrl.u32 %v1975, 7
        %v1977 = vsub.s32 0, %v1976
        %v1978 = vrot.slane %v1963, %v1977
        %v1979 = vmul.f32 %v1969, %v1974
        %v1980 = vmul.f32 %v1969, %v1978
        %v1981 = vadd.f32 %v1954, %v1979
        %v1982 = vadd.f32 %v1955, %v1980
        %1983 = vset.pattern.permute.xlu0 1
        %1984 = vperm.xlu0 %1983, %v1965
        %v1985 = vpop.permute.xlu0 %1984
        %v1987 = vlaneseq
        %v1988 = vshrl.u32 %v1987, 7
        %v1989 = vsub.s32 1, %v1988
        %v1990 = vrot.slane %v1962, %v1989
        %v1991 = vlaneseq
        %v1992 = vshrl.u32 %v1991, 7
        %v1993 = vsub.s32 1, %v1992
        %v1994 = vrot.slane %v1963, %v1993
        %v1995 = vmul.f32 %v1985, %v1990
        %v1996 = vmul.f32 %v1985, %v1994
        %v1997 = vadd.f32 %v1981, %v1995
        %v1998 = vadd.f32 %v1982, %v1996
        %1999 = vset.pattern.permute.xlu0 2
        %2000 = vperm.xlu0 %1999, %v1965
        %v2001 = vpop.permute.xlu0 %2000
        %v2003 = vlaneseq
        %v2004 = vshrl.u32 %v2003, 7
        %v2005 = vsub.s32 2, %v2004
        %v2006 = vrot.slane %v1962, %v2005
        %v2007 = vlaneseq
        %v2008 = vshrl.u32 %v2007, 7
        %v2009 = vsub.s32 2, %v2008
        %v2010 = vrot.slane %v1963, %v2009
        %v2011 = vmul.f32 %v2001, %v2006
        %v2012 = vmul.f32 %v2001, %v2010
        %v2013 = vadd.f32 %v1997, %v2011
        %v2014 = vadd.f32 %v1998, %v2012
        %2015 = vset.pattern.permute.xlu0 3
        %2016 = vperm.xlu0 %2015, %v1965
        %v2017 = vpop.permute.xlu0 %2016
        %v2019 = vlaneseq
        %v2020 = vshrl.u32 %v2019, 7
        %v2021 = vsub.s32 3, %v2020
        %v2022 = vrot.slane %v1962, %v2021
        %v2023 = vlaneseq
        %v2024 = vshrl.u32 %v2023, 7
        %v2025 = vsub.s32 3, %v2024
        %v2026 = vrot.slane %v1963, %v2025
        %v2027 = vmul.f32 %v2017, %v2022
        %v2028 = vmul.f32 %v2017, %v2026
        %v2029 = vadd.f32 %v2013, %v2027
        %v2030 = vadd.f32 %v2014, %v2028
        %v2031 = vld [vmem:[%s8] sm:$0xf]
        %v2032 = vld [vmem:[%s9] sm:$0xf]
        %v2033 = vsel %vm485, %v2029, 0.0
        %v2034 = vsel %vm485, %v2030, 0.0
        %v2035 = vadd.f32 %v2033, %v2034
        %2036 = vadd.xlane.f32.xlu0 %v2035
        %v2037 = vpop.xlane.xlu0 %2036
        %v2038 = vmul.f32 %v2037, 0.00390625
        %v2039 = vmul.f32 %v2029, %v2029
        %v2040 = vmul.f32 %v2030, %v2030
        %v2041 = vsel %vm485, %v2039, 0.0
        %v2042 = vsel %vm485, %v2040, 0.0
        %v2043 = vadd.f32 %v2041, %v2042
        %2044 = vadd.xlane.f32.xlu0 %v2043
        %v2045 = vpop.xlane.xlu0 %2044
        %v2046 = vmul.f32 %v2045, 0.00390625
        %v2047 = vmul.f32 %v2038, %v2038
        %v2048 = vsub.f32 %v2046, %v2047
        %v2049 = vadd.f32 %v2048, 1e-05
        %v2050 = vrsqrt.pop %v2049
        %v2051 = vsub.f32 %v2029, %v2038
        %v2052 = vsub.f32 %v2030, %v2038
        %v2053 = vmul.f32 %v2031, %v2050
        %2055 = vset.pattern.permute.xlu0 0
        %2056 = vperm.xlu0 %2055, %v2053
        %v2057 = vpop.permute.xlu0 %2056
        %v2059 = vmul.f32 %v2051, %v2057
        %v2060 = vmul.f32 %v2052, %v2057
        %2062 = vset.pattern.permute.xlu0 0
        %2063 = vperm.xlu0 %2062, %v2032
        %v2064 = vpop.permute.xlu0 %2063
        %v2066 = vadd.f32 %v2059, %v2064
        %v2067 = vadd.f32 %v2060, %v2064
        %v2068 = vtanh.pop %v2066
        %v2069 = vtanh.pop %v2067
        %2070 = vrot.lane.b32.xlu0 %v2068, 17
        %v2071 = vpop.permute.xlu0 %2070
        %2072 = vrot.lane.b32.xlu0 %v2069, 17
        %v2073 = vpop.permute.xlu0 %2072
        %v2074 = vsel %vm528, %v2071, %v2073
        %v2075 = vsel %vm528, %v2073, %v2071
        %v2076 = vmul.f32 %v2075, %v535
        %v2077 = vmul.f32 %v2074, %v539
        %v2078 = vld [vmem:[%s4] sm:$0xf]
        %2080 = vset.pattern.permute.xlu0 0
        %2081 = vperm.xlu0 %2080, %v2078
        %v2082 = vpop.permute.xlu0 %2081
        %v2084 = vlaneseq
        %v2085 = vshrl.u32 %v2084, 7
        %v2086 = vsub.s32 0, %v2085
        %v2087 = vrot.slane %v2076, %v2086
        %v2088 = vlaneseq
        %v2089 = vshrl.u32 %v2088, 7
        %v2090 = vsub.s32 0, %v2089
        %v2091 = vrot.slane %v2077, %v2090
        %v2092 = vmul.f32 %v2082, %v2087
        %v2093 = vmul.f32 %v2082, %v2091
        %v2094 = vadd.f32 %v2092, 0.0
        %v2095 = vadd.f32 %v2093, 0.0
        %2096 = vset.pattern.permute.xlu0 1
        %2097 = vperm.xlu0 %2096, %v2078
        %v2098 = vpop.permute.xlu0 %2097
        %v2100 = vlaneseq
        %v2101 = vshrl.u32 %v2100, 7
        %v2102 = vsub.s32 1, %v2101
        %v2103 = vrot.slane %v2076, %v2102
        %v2104 = vlaneseq
        %v2105 = vshrl.u32 %v2104, 7
        %v2106 = vsub.s32 1, %v2105
        %v2107 = vrot.slane %v2077, %v2106
        %v2108 = vmul.f32 %v2098, %v2103
        %v2109 = vmul.f32 %v2098, %v2107
        %v2110 = vadd.f32 %v2094, %v2108
        %v2111 = vadd.f32 %v2095, %v2109
        %2112 = vset.pattern.permute.xlu0 2
        %2113 = vperm.xlu0 %2112, %v2078
        %v2114 = vpop.permute.xlu0 %2113
        %v2116 = vlaneseq
        %v2117 = vshrl.u32 %v2116, 7
        %v2118 = vsub.s32 2, %v2117
        %v2119 = vrot.slane %v2076, %v2118
        %v2120 = vlaneseq
        %v2121 = vshrl.u32 %v2120, 7
        %v2122 = vsub.s32 2, %v2121
        %v2123 = vrot.slane %v2077, %v2122
        %v2124 = vmul.f32 %v2114, %v2119
        %v2125 = vmul.f32 %v2114, %v2123
        %v2126 = vadd.f32 %v2110, %v2124
        %v2127 = vadd.f32 %v2111, %v2125
        %2128 = vset.pattern.permute.xlu0 3
        %2129 = vperm.xlu0 %2128, %v2078
        %v2130 = vpop.permute.xlu0 %2129
        %v2132 = vlaneseq
        %v2133 = vshrl.u32 %v2132, 7
        %v2134 = vsub.s32 3, %v2133
        %v2135 = vrot.slane %v2076, %v2134
        %v2136 = vlaneseq
        %v2137 = vshrl.u32 %v2136, 7
        %v2138 = vsub.s32 3, %v2137
        %v2139 = vrot.slane %v2077, %v2138
        %v2140 = vmul.f32 %v2130, %v2135
        %v2141 = vmul.f32 %v2130, %v2139
        %v2142 = vadd.f32 %v2126, %v2140
        %v2143 = vadd.f32 %v2127, %v2141
        %2144 = vrot.lane.b32.xlu0 %v2068, 16
        %v2145 = vpop.permute.xlu0 %2144
        %2146 = vrot.lane.b32.xlu0 %v2069, 16
        %v2147 = vpop.permute.xlu0 %2146
        %v2148 = vsel %vm614, %v2145, %v2147
        %v2149 = vsel %vm614, %v2147, %v2145
        %v2150 = vmul.f32 %v2149, %v621
        %v2151 = vmul.f32 %v2148, %v625
        %s2152 = scalar_lea.vmem %s4, 4
        %v2153 = vld [vmem:[%s2152] sm:$0xf]
        %2155 = vset.pattern.permute.xlu0 0
        %2156 = vperm.xlu0 %2155, %v2153
        %v2157 = vpop.permute.xlu0 %2156
        %v2159 = vlaneseq
        %v2160 = vshrl.u32 %v2159, 7
        %v2161 = vsub.s32 0, %v2160
        %v2162 = vrot.slane %v2150, %v2161
        %v2163 = vlaneseq
        %v2164 = vshrl.u32 %v2163, 7
        %v2165 = vsub.s32 0, %v2164
        %v2166 = vrot.slane %v2151, %v2165
        %v2167 = vmul.f32 %v2157, %v2162
        %v2168 = vmul.f32 %v2157, %v2166
        %v2169 = vadd.f32 %v2142, %v2167
        %v2170 = vadd.f32 %v2143, %v2168
        %2171 = vset.pattern.permute.xlu0 1
        %2172 = vperm.xlu0 %2171, %v2153
        %v2173 = vpop.permute.xlu0 %2172
        %v2175 = vlaneseq
        %v2176 = vshrl.u32 %v2175, 7
        %v2177 = vsub.s32 1, %v2176
        %v2178 = vrot.slane %v2150, %v2177
        %v2179 = vlaneseq
        %v2180 = vshrl.u32 %v2179, 7
        %v2181 = vsub.s32 1, %v2180
        %v2182 = vrot.slane %v2151, %v2181
        %v2183 = vmul.f32 %v2173, %v2178
        %v2184 = vmul.f32 %v2173, %v2182
        %v2185 = vadd.f32 %v2169, %v2183
        %v2186 = vadd.f32 %v2170, %v2184
        %2187 = vset.pattern.permute.xlu0 2
        %2188 = vperm.xlu0 %2187, %v2153
        %v2189 = vpop.permute.xlu0 %2188
        %v2191 = vlaneseq
        %v2192 = vshrl.u32 %v2191, 7
        %v2193 = vsub.s32 2, %v2192
        %v2194 = vrot.slane %v2150, %v2193
        %v2195 = vlaneseq
        %v2196 = vshrl.u32 %v2195, 7
        %v2197 = vsub.s32 2, %v2196
        %v2198 = vrot.slane %v2151, %v2197
        %v2199 = vmul.f32 %v2189, %v2194
        %v2200 = vmul.f32 %v2189, %v2198
        %v2201 = vadd.f32 %v2185, %v2199
        %v2202 = vadd.f32 %v2186, %v2200
        %2203 = vset.pattern.permute.xlu0 3
        %2204 = vperm.xlu0 %2203, %v2153
        %v2205 = vpop.permute.xlu0 %2204
        %v2207 = vlaneseq
        %v2208 = vshrl.u32 %v2207, 7
        %v2209 = vsub.s32 3, %v2208
        %v2210 = vrot.slane %v2150, %v2209
        %v2211 = vlaneseq
        %v2212 = vshrl.u32 %v2211, 7
        %v2213 = vsub.s32 3, %v2212
        %v2214 = vrot.slane %v2151, %v2213
        %v2215 = vmul.f32 %v2205, %v2210
        %v2216 = vmul.f32 %v2205, %v2214
        %v2217 = vadd.f32 %v2201, %v2215
        %v2218 = vadd.f32 %v2202, %v2216
        %2219 = vrot.lane.b32.xlu0 %v2068, 15
        %v2220 = vpop.permute.xlu0 %2219
        %2221 = vrot.lane.b32.xlu0 %v2069, 15
        %v2222 = vpop.permute.xlu0 %2221
        %v2223 = vsel %vm701, %v2220, %v2222
        %v2224 = vsel %vm701, %v2222, %v2220
        %v2225 = vmul.f32 %v2224, %v708
        %v2226 = vmul.f32 %v2223, %v712
        %s2227 = scalar_lea.vmem %s4, 8
        %v2228 = vld [vmem:[%s2227] sm:$0xf]
        %2230 = vset.pattern.permute.xlu0 0
        %2231 = vperm.xlu0 %2230, %v2228
        %v2232 = vpop.permute.xlu0 %2231
        %v2234 = vlaneseq
        %v2235 = vshrl.u32 %v2234, 7
        %v2236 = vsub.s32 0, %v2235
        %v2237 = vrot.slane %v2225, %v2236
        %v2238 = vlaneseq
        %v2239 = vshrl.u32 %v2238, 7
        %v2240 = vsub.s32 0, %v2239
        %v2241 = vrot.slane %v2226, %v2240
        %v2242 = vmul.f32 %v2232, %v2237
        %v2243 = vmul.f32 %v2232, %v2241
        %v2244 = vadd.f32 %v2217, %v2242
        %v2245 = vadd.f32 %v2218, %v2243
        %2246 = vset.pattern.permute.xlu0 1
        %2247 = vperm.xlu0 %2246, %v2228
        %v2248 = vpop.permute.xlu0 %2247
        %v2250 = vlaneseq
        %v2251 = vshrl.u32 %v2250, 7
        %v2252 = vsub.s32 1, %v2251
        %v2253 = vrot.slane %v2225, %v2252
        %v2254 = vlaneseq
        %v2255 = vshrl.u32 %v2254, 7
        %v2256 = vsub.s32 1, %v2255
        %v2257 = vrot.slane %v2226, %v2256
        %v2258 = vmul.f32 %v2248, %v2253
        %v2259 = vmul.f32 %v2248, %v2257
        %v2260 = vadd.f32 %v2244, %v2258
        %v2261 = vadd.f32 %v2245, %v2259
        %2262 = vset.pattern.permute.xlu0 2
        %2263 = vperm.xlu0 %2262, %v2228
        %v2264 = vpop.permute.xlu0 %2263
        %v2266 = vlaneseq
        %v2267 = vshrl.u32 %v2266, 7
        %v2268 = vsub.s32 2, %v2267
        %v2269 = vrot.slane %v2225, %v2268
        %v2270 = vlaneseq
        %v2271 = vshrl.u32 %v2270, 7
        %v2272 = vsub.s32 2, %v2271
        %v2273 = vrot.slane %v2226, %v2272
        %v2274 = vmul.f32 %v2264, %v2269
        %v2275 = vmul.f32 %v2264, %v2273
        %v2276 = vadd.f32 %v2260, %v2274
        %v2277 = vadd.f32 %v2261, %v2275
        %2278 = vset.pattern.permute.xlu0 3
        %2279 = vperm.xlu0 %2278, %v2228
        %v2280 = vpop.permute.xlu0 %2279
        %v2282 = vlaneseq
        %v2283 = vshrl.u32 %v2282, 7
        %v2284 = vsub.s32 3, %v2283
        %v2285 = vrot.slane %v2225, %v2284
        %v2286 = vlaneseq
        %v2287 = vshrl.u32 %v2286, 7
        %v2288 = vsub.s32 3, %v2287
        %v2289 = vrot.slane %v2226, %v2288
        %v2290 = vmul.f32 %v2280, %v2285
        %v2291 = vmul.f32 %v2280, %v2289
        %v2292 = vadd.f32 %v2276, %v2290
        %v2293 = vadd.f32 %v2277, %v2291
        %2294 = vrot.lane.b32.xlu0 %v2068, 1
        %v2295 = vpop.permute.xlu0 %2294
        %2296 = vrot.lane.b32.xlu0 %v2069, 1
        %v2297 = vpop.permute.xlu0 %2296
        %v2298 = vsel %vm788, %v2295, %v2297
        %v2299 = vsel %vm788, %v2297, %v2295
        %v2300 = vmul.f32 %v2299, %v795
        %v2301 = vmul.f32 %v2298, %v799
        %s2302 = scalar_lea.vmem %s4, 12
        %v2303 = vld [vmem:[%s2302] sm:$0xf]
        %2305 = vset.pattern.permute.xlu0 0
        %2306 = vperm.xlu0 %2305, %v2303
        %v2307 = vpop.permute.xlu0 %2306
        %v2309 = vlaneseq
        %v2310 = vshrl.u32 %v2309, 7
        %v2311 = vsub.s32 0, %v2310
        %v2312 = vrot.slane %v2300, %v2311
        %v2313 = vlaneseq
        %v2314 = vshrl.u32 %v2313, 7
        %v2315 = vsub.s32 0, %v2314
        %v2316 = vrot.slane %v2301, %v2315
        %v2317 = vmul.f32 %v2307, %v2312
        %v2318 = vmul.f32 %v2307, %v2316
        %v2319 = vadd.f32 %v2292, %v2317
        %v2320 = vadd.f32 %v2293, %v2318
        %2321 = vset.pattern.permute.xlu0 1
        %2322 = vperm.xlu0 %2321, %v2303
        %v2323 = vpop.permute.xlu0 %2322
        %v2325 = vlaneseq
        %v2326 = vshrl.u32 %v2325, 7
        %v2327 = vsub.s32 1, %v2326
        %v2328 = vrot.slane %v2300, %v2327
        %v2329 = vlaneseq
        %v2330 = vshrl.u32 %v2329, 7
        %v2331 = vsub.s32 1, %v2330
        %v2332 = vrot.slane %v2301, %v2331
        %v2333 = vmul.f32 %v2323, %v2328
        %v2334 = vmul.f32 %v2323, %v2332
        %v2335 = vadd.f32 %v2319, %v2333
        %v2336 = vadd.f32 %v2320, %v2334
        %2337 = vset.pattern.permute.xlu0 2
        %2338 = vperm.xlu0 %2337, %v2303
        %v2339 = vpop.permute.xlu0 %2338
        %v2341 = vlaneseq
        %v2342 = vshrl.u32 %v2341, 7
        %v2343 = vsub.s32 2, %v2342
        %v2344 = vrot.slane %v2300, %v2343
        %v2345 = vlaneseq
        %v2346 = vshrl.u32 %v2345, 7
        %v2347 = vsub.s32 2, %v2346
        %v2348 = vrot.slane %v2301, %v2347
        %v2349 = vmul.f32 %v2339, %v2344
        %v2350 = vmul.f32 %v2339, %v2348
        %v2351 = vadd.f32 %v2335, %v2349
        %v2352 = vadd.f32 %v2336, %v2350
        %2353 = vset.pattern.permute.xlu0 3
        %2354 = vperm.xlu0 %2353, %v2303
        %v2355 = vpop.permute.xlu0 %2354
        %v2357 = vlaneseq
        %v2358 = vshrl.u32 %v2357, 7
        %v2359 = vsub.s32 3, %v2358
        %v2360 = vrot.slane %v2300, %v2359
        %v2361 = vlaneseq
        %v2362 = vshrl.u32 %v2361, 7
        %v2363 = vsub.s32 3, %v2362
        %v2364 = vrot.slane %v2301, %v2363
        %v2365 = vmul.f32 %v2355, %v2360
        %v2366 = vmul.f32 %v2355, %v2364
        %v2367 = vadd.f32 %v2351, %v2365
        %v2368 = vadd.f32 %v2352, %v2366
        %s2369 = scalar_lea.vmem %s4, 16
        %v2370 = vld [vmem:[%s2369] sm:$0xf]
        %2372 = vset.pattern.permute.xlu0 0
        %2373 = vperm.xlu0 %2372, %v2370
        %v2374 = vpop.permute.xlu0 %2373
        %v2376 = vlaneseq
        %v2377 = vshrl.u32 %v2376, 7
        %v2378 = vsub.s32 0, %v2377
        %v2379 = vrot.slane %v2068, %v2378
        %v2380 = vlaneseq
        %v2381 = vshrl.u32 %v2380, 7
        %v2382 = vsub.s32 0, %v2381
        %v2383 = vrot.slane %v2069, %v2382
        %v2384 = vmul.f32 %v2374, %v2379
        %v2385 = vmul.f32 %v2374, %v2383
        %v2386 = vadd.f32 %v2367, %v2384
        %v2387 = vadd.f32 %v2368, %v2385
        %2388 = vset.pattern.permute.xlu0 1
        %2389 = vperm.xlu0 %2388, %v2370
        %v2390 = vpop.permute.xlu0 %2389
        %v2392 = vlaneseq
        %v2393 = vshrl.u32 %v2392, 7
        %v2394 = vsub.s32 1, %v2393
        %v2395 = vrot.slane %v2068, %v2394
        %v2396 = vlaneseq
        %v2397 = vshrl.u32 %v2396, 7
        %v2398 = vsub.s32 1, %v2397
        %v2399 = vrot.slane %v2069, %v2398
        %v2400 = vmul.f32 %v2390, %v2395
        %v2401 = vmul.f32 %v2390, %v2399
        %v2402 = vadd.f32 %v2386, %v2400
        %v2403 = vadd.f32 %v2387, %v2401
        %2404 = vset.pattern.permute.xlu0 2
        %2405 = vperm.xlu0 %2404, %v2370
        %v2406 = vpop.permute.xlu0 %2405
        %v2408 = vlaneseq
        %v2409 = vshrl.u32 %v2408, 7
        %v2410 = vsub.s32 2, %v2409
        %v2411 = vrot.slane %v2068, %v2410
        %v2412 = vlaneseq
        %v2413 = vshrl.u32 %v2412, 7
        %v2414 = vsub.s32 2, %v2413
        %v2415 = vrot.slane %v2069, %v2414
        %v2416 = vmul.f32 %v2406, %v2411
        %v2417 = vmul.f32 %v2406, %v2415
        %v2418 = vadd.f32 %v2402, %v2416
        %v2419 = vadd.f32 %v2403, %v2417
        %2420 = vset.pattern.permute.xlu0 3
        %2421 = vperm.xlu0 %2420, %v2370
        %v2422 = vpop.permute.xlu0 %2421
        %v2424 = vlaneseq
        %v2425 = vshrl.u32 %v2424, 7
        %v2426 = vsub.s32 3, %v2425
        %v2427 = vrot.slane %v2068, %v2426
        %v2428 = vlaneseq
        %v2429 = vshrl.u32 %v2428, 7
        %v2430 = vsub.s32 3, %v2429
        %v2431 = vrot.slane %v2069, %v2430
        %v2432 = vmul.f32 %v2422, %v2427
        %v2433 = vmul.f32 %v2422, %v2431
        %v2434 = vadd.f32 %v2418, %v2432
        %v2435 = vadd.f32 %v2419, %v2433
        %2436 = vrot.lane.b32.xlu0 %v2068, 127
        %v2437 = vpop.permute.xlu0 %2436
        %2438 = vrot.lane.b32.xlu0 %v2069, 127
        %v2439 = vpop.permute.xlu0 %2438
        %v2440 = vsel %vm982, %v2437, %v2439
        %v2441 = vsel %vm982, %v2439, %v2437
        %v2442 = vmul.f32 %v2440, %v989
        %v2443 = vmul.f32 %v2441, %v993
        %s2444 = scalar_lea.vmem %s4, 20
        %v2445 = vld [vmem:[%s2444] sm:$0xf]
        %2447 = vset.pattern.permute.xlu0 0
        %2448 = vperm.xlu0 %2447, %v2445
        %v2449 = vpop.permute.xlu0 %2448
        %v2451 = vlaneseq
        %v2452 = vshrl.u32 %v2451, 7
        %v2453 = vsub.s32 0, %v2452
        %v2454 = vrot.slane %v2442, %v2453
        %v2455 = vlaneseq
        %v2456 = vshrl.u32 %v2455, 7
        %v2457 = vsub.s32 0, %v2456
        %v2458 = vrot.slane %v2443, %v2457
        %v2459 = vmul.f32 %v2449, %v2454
        %v2460 = vmul.f32 %v2449, %v2458
        %v2461 = vadd.f32 %v2434, %v2459
        %v2462 = vadd.f32 %v2435, %v2460
        %2463 = vset.pattern.permute.xlu0 1
        %2464 = vperm.xlu0 %2463, %v2445
        %v2465 = vpop.permute.xlu0 %2464
        %v2467 = vlaneseq
        %v2468 = vshrl.u32 %v2467, 7
        %v2469 = vsub.s32 1, %v2468
        %v2470 = vrot.slane %v2442, %v2469
        %v2471 = vlaneseq
        %v2472 = vshrl.u32 %v2471, 7
        %v2473 = vsub.s32 1, %v2472
        %v2474 = vrot.slane %v2443, %v2473
        %v2475 = vmul.f32 %v2465, %v2470
        %v2476 = vmul.f32 %v2465, %v2474
        %v2477 = vadd.f32 %v2461, %v2475
        %v2478 = vadd.f32 %v2462, %v2476
        %2479 = vset.pattern.permute.xlu0 2
        %2480 = vperm.xlu0 %2479, %v2445
        %v2481 = vpop.permute.xlu0 %2480
        %v2483 = vlaneseq
        %v2484 = vshrl.u32 %v2483, 7
        %v2485 = vsub.s32 2, %v2484
        %v2486 = vrot.slane %v2442, %v2485
        %v2487 = vlaneseq
        %v2488 = vshrl.u32 %v2487, 7
        %v2489 = vsub.s32 2, %v2488
        %v2490 = vrot.slane %v2443, %v2489
        %v2491 = vmul.f32 %v2481, %v2486
        %v2492 = vmul.f32 %v2481, %v2490
        %v2493 = vadd.f32 %v2477, %v2491
        %v2494 = vadd.f32 %v2478, %v2492
        %2495 = vset.pattern.permute.xlu0 3
        %2496 = vperm.xlu0 %2495, %v2445
        %v2497 = vpop.permute.xlu0 %2496
        %v2499 = vlaneseq
        %v2500 = vshrl.u32 %v2499, 7
        %v2501 = vsub.s32 3, %v2500
        %v2502 = vrot.slane %v2442, %v2501
        %v2503 = vlaneseq
        %v2504 = vshrl.u32 %v2503, 7
        %v2505 = vsub.s32 3, %v2504
        %v2506 = vrot.slane %v2443, %v2505
        %v2507 = vmul.f32 %v2497, %v2502
        %v2508 = vmul.f32 %v2497, %v2506
        %v2509 = vadd.f32 %v2493, %v2507
        %v2510 = vadd.f32 %v2494, %v2508
        %2511 = vrot.lane.b32.xlu0 %v2068, 113
        %v2512 = vpop.permute.xlu0 %2511
        %2513 = vrot.lane.b32.xlu0 %v2069, 113
        %v2514 = vpop.permute.xlu0 %2513
        %v2515 = vsel %vm1069, %v2512, %v2514
        %v2516 = vsel %vm1069, %v2514, %v2512
        %v2517 = vmul.f32 %v2515, %v1076
        %v2518 = vmul.f32 %v2516, %v1080
        %s2519 = scalar_lea.vmem %s4, 24
        %v2520 = vld [vmem:[%s2519] sm:$0xf]
        %2522 = vset.pattern.permute.xlu0 0
        %2523 = vperm.xlu0 %2522, %v2520
        %v2524 = vpop.permute.xlu0 %2523
        %v2526 = vlaneseq
        %v2527 = vshrl.u32 %v2526, 7
        %v2528 = vsub.s32 0, %v2527
        %v2529 = vrot.slane %v2517, %v2528
        %v2530 = vlaneseq
        %v2531 = vshrl.u32 %v2530, 7
        %v2532 = vsub.s32 0, %v2531
        %v2533 = vrot.slane %v2518, %v2532
        %v2534 = vmul.f32 %v2524, %v2529
        %v2535 = vmul.f32 %v2524, %v2533
        %v2536 = vadd.f32 %v2509, %v2534
        %v2537 = vadd.f32 %v2510, %v2535
        %2538 = vset.pattern.permute.xlu0 1
        %2539 = vperm.xlu0 %2538, %v2520
        %v2540 = vpop.permute.xlu0 %2539
        %v2542 = vlaneseq
        %v2543 = vshrl.u32 %v2542, 7
        %v2544 = vsub.s32 1, %v2543
        %v2545 = vrot.slane %v2517, %v2544
        %v2546 = vlaneseq
        %v2547 = vshrl.u32 %v2546, 7
        %v2548 = vsub.s32 1, %v2547
        %v2549 = vrot.slane %v2518, %v2548
        %v2550 = vmul.f32 %v2540, %v2545
        %v2551 = vmul.f32 %v2540, %v2549
        %v2552 = vadd.f32 %v2536, %v2550
        %v2553 = vadd.f32 %v2537, %v2551
        %2554 = vset.pattern.permute.xlu0 2
        %2555 = vperm.xlu0 %2554, %v2520
        %v2556 = vpop.permute.xlu0 %2555
        %v2558 = vlaneseq
        %v2559 = vshrl.u32 %v2558, 7
        %v2560 = vsub.s32 2, %v2559
        %v2561 = vrot.slane %v2517, %v2560
        %v2562 = vlaneseq
        %v2563 = vshrl.u32 %v2562, 7
        %v2564 = vsub.s32 2, %v2563
        %v2565 = vrot.slane %v2518, %v2564
        %v2566 = vmul.f32 %v2556, %v2561
        %v2567 = vmul.f32 %v2556, %v2565
        %v2568 = vadd.f32 %v2552, %v2566
        %v2569 = vadd.f32 %v2553, %v2567
        %2570 = vset.pattern.permute.xlu0 3
        %2571 = vperm.xlu0 %2570, %v2520
        %v2572 = vpop.permute.xlu0 %2571
        %v2574 = vlaneseq
        %v2575 = vshrl.u32 %v2574, 7
        %v2576 = vsub.s32 3, %v2575
        %v2577 = vrot.slane %v2517, %v2576
        %v2578 = vlaneseq
        %v2579 = vshrl.u32 %v2578, 7
        %v2580 = vsub.s32 3, %v2579
        %v2581 = vrot.slane %v2518, %v2580
        %v2582 = vmul.f32 %v2572, %v2577
        %v2583 = vmul.f32 %v2572, %v2581
        %v2584 = vadd.f32 %v2568, %v2582
        %v2585 = vadd.f32 %v2569, %v2583
        %2586 = vrot.lane.b32.xlu0 %v2068, 112
        %v2587 = vpop.permute.xlu0 %2586
        %2588 = vrot.lane.b32.xlu0 %v2069, 112
        %v2589 = vpop.permute.xlu0 %2588
        %v2590 = vsel %vm1156, %v2587, %v2589
        %v2591 = vsel %vm1156, %v2589, %v2587
        %v2592 = vmul.f32 %v2590, %v1163
        %v2593 = vmul.f32 %v2591, %v1167
        %s2594 = scalar_lea.vmem %s4, 28
        %v2595 = vld [vmem:[%s2594] sm:$0xf]
        %2597 = vset.pattern.permute.xlu0 0
        %2598 = vperm.xlu0 %2597, %v2595
        %v2599 = vpop.permute.xlu0 %2598
        %v2601 = vlaneseq
        %v2602 = vshrl.u32 %v2601, 7
        %v2603 = vsub.s32 0, %v2602
        %v2604 = vrot.slane %v2592, %v2603
        %v2605 = vlaneseq
        %v2606 = vshrl.u32 %v2605, 7
        %v2607 = vsub.s32 0, %v2606
        %v2608 = vrot.slane %v2593, %v2607
        %v2609 = vmul.f32 %v2599, %v2604
        %v2610 = vmul.f32 %v2599, %v2608
        %v2611 = vadd.f32 %v2584, %v2609
        %v2612 = vadd.f32 %v2585, %v2610
        %2613 = vset.pattern.permute.xlu0 1
        %2614 = vperm.xlu0 %2613, %v2595
        %v2615 = vpop.permute.xlu0 %2614
        %v2617 = vlaneseq
        %v2618 = vshrl.u32 %v2617, 7
        %v2619 = vsub.s32 1, %v2618
        %v2620 = vrot.slane %v2592, %v2619
        %v2621 = vlaneseq
        %v2622 = vshrl.u32 %v2621, 7
        %v2623 = vsub.s32 1, %v2622
        %v2624 = vrot.slane %v2593, %v2623
        %v2625 = vmul.f32 %v2615, %v2620
        %v2626 = vmul.f32 %v2615, %v2624
        %v2627 = vadd.f32 %v2611, %v2625
        %v2628 = vadd.f32 %v2612, %v2626
        %2629 = vset.pattern.permute.xlu0 2
        %2630 = vperm.xlu0 %2629, %v2595
        %v2631 = vpop.permute.xlu0 %2630
        %v2633 = vlaneseq
        %v2634 = vshrl.u32 %v2633, 7
        %v2635 = vsub.s32 2, %v2634
        %v2636 = vrot.slane %v2592, %v2635
        %v2637 = vlaneseq
        %v2638 = vshrl.u32 %v2637, 7
        %v2639 = vsub.s32 2, %v2638
        %v2640 = vrot.slane %v2593, %v2639
        %v2641 = vmul.f32 %v2631, %v2636
        %v2642 = vmul.f32 %v2631, %v2640
        %v2643 = vadd.f32 %v2627, %v2641
        %v2644 = vadd.f32 %v2628, %v2642
        %2645 = vset.pattern.permute.xlu0 3
        %2646 = vperm.xlu0 %2645, %v2595
        %v2647 = vpop.permute.xlu0 %2646
        %v2649 = vlaneseq
        %v2650 = vshrl.u32 %v2649, 7
        %v2651 = vsub.s32 3, %v2650
        %v2652 = vrot.slane %v2592, %v2651
        %v2653 = vlaneseq
        %v2654 = vshrl.u32 %v2653, 7
        %v2655 = vsub.s32 3, %v2654
        %v2656 = vrot.slane %v2593, %v2655
        %v2657 = vmul.f32 %v2647, %v2652
        %v2658 = vmul.f32 %v2647, %v2656
        %v2659 = vadd.f32 %v2643, %v2657
        %v2660 = vadd.f32 %v2644, %v2658
        %2661 = vrot.lane.b32.xlu0 %v2068, 111
        %v2662 = vpop.permute.xlu0 %2661
        %2663 = vrot.lane.b32.xlu0 %v2069, 111
        %v2664 = vpop.permute.xlu0 %2663
        %v2665 = vsel %vm1243, %v2662, %v2664
        %v2666 = vsel %vm1243, %v2664, %v2662
        %v2667 = vmul.f32 %v2665, %v1250
        %v2668 = vmul.f32 %v2666, %v1254
        %s2669 = scalar_lea.vmem %s4, 32
        %v2670 = vld [vmem:[%s2669] sm:$0xf]
        %2672 = vset.pattern.permute.xlu0 0
        %2673 = vperm.xlu0 %2672, %v2670
        %v2674 = vpop.permute.xlu0 %2673
        %v2676 = vlaneseq
        %v2677 = vshrl.u32 %v2676, 7
        %v2678 = vsub.s32 0, %v2677
        %v2679 = vrot.slane %v2667, %v2678
        %v2680 = vlaneseq
        %v2681 = vshrl.u32 %v2680, 7
        %v2682 = vsub.s32 0, %v2681
        %v2683 = vrot.slane %v2668, %v2682
        %v2684 = vmul.f32 %v2674, %v2679
        %v2685 = vmul.f32 %v2674, %v2683
        %v2686 = vadd.f32 %v2659, %v2684
        %v2687 = vadd.f32 %v2660, %v2685
        %2688 = vset.pattern.permute.xlu0 1
        %2689 = vperm.xlu0 %2688, %v2670
        %v2690 = vpop.permute.xlu0 %2689
        %v2692 = vlaneseq
        %v2693 = vshrl.u32 %v2692, 7
        %v2694 = vsub.s32 1, %v2693
        %v2695 = vrot.slane %v2667, %v2694
        %v2696 = vlaneseq
        %v2697 = vshrl.u32 %v2696, 7
        %v2698 = vsub.s32 1, %v2697
        %v2699 = vrot.slane %v2668, %v2698
        %v2700 = vmul.f32 %v2690, %v2695
        %v2701 = vmul.f32 %v2690, %v2699
        %v2702 = vadd.f32 %v2686, %v2700
        %v2703 = vadd.f32 %v2687, %v2701
        %2704 = vset.pattern.permute.xlu0 2
        %2705 = vperm.xlu0 %2704, %v2670
        %v2706 = vpop.permute.xlu0 %2705
        %v2708 = vlaneseq
        %v2709 = vshrl.u32 %v2708, 7
        %v2710 = vsub.s32 2, %v2709
        %v2711 = vrot.slane %v2667, %v2710
        %v2712 = vlaneseq
        %v2713 = vshrl.u32 %v2712, 7
        %v2714 = vsub.s32 2, %v2713
        %v2715 = vrot.slane %v2668, %v2714
        %v2716 = vmul.f32 %v2706, %v2711
        %v2717 = vmul.f32 %v2706, %v2715
        %v2718 = vadd.f32 %v2702, %v2716
        %v2719 = vadd.f32 %v2703, %v2717
        %2720 = vset.pattern.permute.xlu0 3
        %2721 = vperm.xlu0 %2720, %v2670
        %v2722 = vpop.permute.xlu0 %2721
        %v2724 = vlaneseq
        %v2725 = vshrl.u32 %v2724, 7
        %v2726 = vsub.s32 3, %v2725
        %v2727 = vrot.slane %v2667, %v2726
        %v2728 = vlaneseq
        %v2729 = vshrl.u32 %v2728, 7
        %v2730 = vsub.s32 3, %v2729
        %v2731 = vrot.slane %v2668, %v2730
        %v2732 = vmul.f32 %v2722, %v2727
        %v2733 = vmul.f32 %v2722, %v2731
        %v2734 = vadd.f32 %v2718, %v2732
        %v2735 = vadd.f32 %v2719, %v2733
        %v2736 = vld [vmem:[%s5] sm:$0xf]
        %2738 = vset.pattern.permute.xlu0 0
        %2739 = vperm.xlu0 %2738, %v2736
        %v2740 = vpop.permute.xlu0 %2739
        %v2742 = vadd.f32 %v2734, %v2740
        %v2743 = vadd.f32 %v2735, %v2740
        %v2744 = vsub.f32 0.0, %v2742
        %v2745 = vsub.f32 0.0, %v2743
        %v2746 = vmul.f32 %v2744, 1.442695
        %v2747 = vpow.pop %v2746
        %v2748 = vmul.f32 %v2745, 1.442695
        %v2749 = vpow.pop %v2748
        %v2750 = vadd.f32 %v2747, 1.0
        %v2751 = vadd.f32 %v2749, 1.0
        %v2752 = vrcp.pop %v2750
        %v2753 = vmul.f32 1.0, %v2752
        %v2754 = vrcp.pop %v2751
        %v2755 = vmul.f32 1.0, %v2754
        %v2756 = vsub.f32 1.0, %v2753
        %v2757 = vsub.f32 1.0, %v2755
        %2759 = vset.pattern.permute.xlu0 0
        %2760 = vperm.xlu0 %2759, %v521
        %v2761 = vpop.permute.xlu0 %2760
        %v2763 = vmul.f32 %v2761, %v2756
        %v2764 = vmul.f32 %v2761, %v2757
        %v2767 = vcombine.low %v2753, %v2755
        %v2769 = vmul.f32 %v466, %v2767
        %v2771 = vcombine.high %v2769, %v2769
        %v2773 = vadd.f32 %v2763, %v2769
        %v2774 = vadd.f32 %v2764, %v2771
        %v2777 = vcombine.low %v2773, %v2774
        %2779 = vst [vmem:[%s460] sm:$0xff] %v2777
        %s2780 = sand.u32 %s335, 1
        %s2781 = scalar_lea.sflag [#allocation3], %s2780
        %s2782 = sand.u32 %s335, 1
        %s2783 = smul.addr %s2782, 8
        %s2784 = scalar_lea.vmem [#allocation2], %s2783
        // Predicated region
        $region77: #{tpu_custom_call.1} parent=75 // pred_check
          %p2785 = pneg %p345
        $region78: #{tpu_custom_call.1} parent=75 // pred_check_branch
          %2787 = sbr.rel (%p2785) target = $region80
        $region79: #{tpu_custom_call.1} parent=75 // pred_region
          %s2789 = ssub.s32 128, 128
          %2790 = vsyncadd %s2781, %s2789
          %s2791 = smul.addr %s28, 2
          %s2792 = smul.addr %s2791, 64
          %s2793 = scalar_lea.hbm %s14, %s2792
          %s2795 = sshll.u32 %s2784, 4
          %s2796 = int_to_ptr.vmem [resolvable:$true] %s2795
          %2798 = dma.vmem_to_hbm [thread:$0]  %s2796, 128, %s2793, %s2781
        $region80: #{tpu_custom_call.1} parent=75 // pred_fallthru
          _
      $region76: #{tpu_custom_call.1} parent=5 // pred_fallthru
        _
      %p2799 = scmp.le.s32.totalorder 2, %s23
      // Predicated region
      $region81: #{tpu_custom_call.1} parent=5 // pred_check
        %p2800 = pneg %p2799
      $region82: #{tpu_custom_call.1} parent=5 // pred_check_branch
        %2802 = sbr.rel (%p2800) target = $region84
      $region83: #{tpu_custom_call.1} parent=5 // pred_region
        %s2803 = ssub.s32 %s23, 2
        // Predicated region
        $region85: #{tpu_custom_call.1} parent=83 // pred_check
          %p2804 = pneg %p351
        $region86: #{tpu_custom_call.1} parent=83 // pred_check_branch
          %2806 = sbr.rel (%p2804) target = $region88
        $region87: #{tpu_custom_call.1} parent=83 // pred_region
          %s2807 = sand.u32 %s336, 1
          %s2808 = scalar_lea.sflag [#allocation3], %s2807
          %s2809 = sand.u32 %s336, 1
          %s2810 = smul.addr %s2809, 8
          %s2811 = scalar_lea.vmem [#allocation2], %s2810
          %2812 = dma.done %s2808, 128
        $region88: #{tpu_custom_call.1} parent=83 // pred_fallthru
          _
      $region84: #{tpu_custom_call.1} parent=5 // pred_fallthru
        _
    $region6: #{tpu_custom_call.1} parent=1 // loop_footer
      %s27 = sadd.s32 1, %s23
    $region7: #{tpu_custom_call.1} parent=1 // loop_footer_branch
      %22 = sbr.rel target = $region3
    $region8: #{tpu_custom_call.1} parent=1 // loop_exit
      _
    %2813 = vsyncpa [#allocation3], 1
    %s2814 = scalar_lea.sflag [#allocation3], 1
    %2815 = vsyncpa %s2814, 1

</llo_original>
